<compile_context>
chip_gen: v6e
topology: v6e:2x2x1
jax: 0.10.0
libtpu: 0.0.40
codegen_flags: <defaults>
</compile_context>

<pallas_src>
import functools

import jax
import jax.numpy as jnp
from jax.experimental import pallas as pl
from jax.experimental.pallas import tpu as pltpu

BN_EPS = 1e-5

# Scaled-down backbone feature widths (ResNet152: 2048, ResNet18: 512 each).
FEAT_I, FEAT_M, FEAT_R = 256, 64, 64
MYSIZE = FEAT_I + FEAT_M + FEAT_R          # == 384 (stands in for 3072)
GATES = 4 * MYSIZE                         # == 1536
NUM_CLASS = 10
HEAD_PAD = 128                             # lane-dense padded logits slab
NUM_CH = 8                                 # 3 rgb + 2 motion-vector + 3 residual


# ----------------------------------------------------------------------------
# Fused kernel #1: data BN + backbone stand-ins + concat + LSTM input half.
#   pooled    = mean_spatial(x)                               (tile_n, 8)
#   feat      = relu(pooled @ W_fused + b_fused)              (tile_n, M)
#   pre_gates = feat @ W_ih + (b_ih + b_hh)                   (tile_n, 4M)
# W_fused is block-diagonal over the three streams with the eval-mode BN affine
# folded in.  All matmuls here are recurrence-independent, so they live in the
# gridded (parallel) call.
# ----------------------------------------------------------------------------
def _pregate_kernel(x_ref, wf_ref, bf_ref, wih_ref, bih_ref, o_ref):
    pooled = jnp.mean(x_ref[...], axis=-1)                   # lane-axis reduce
    feat = jnp.maximum(
        jnp.dot(pooled, wf_ref[...], preferred_element_type=jnp.float32)
        + bf_ref[...], 0.0)                                  # (tile_n, M) f32
    # Pre-gates kept in f32 (they feed gate nonlinearities directly, not MXU).
    o_ref[...] = (jnp.dot(feat.astype(jnp.bfloat16), wih_ref[...],
                          preferred_element_type=jnp.float32) + bih_ref[...])


def _pick_tile_n(N, C, S, vmem_budget_bytes=24 << 20):
    """Largest N-divisor tile (multiple of 8) fitting a v7x-safe VMEM budget."""
    # Double-buffered input tile + output tile, f32.
    bytes_per_row = 2 * (C * S * 4 + GATES * 4)
    cands = [t for t in range(8, N + 1, 8) if N % t == 0] or [N]
    fitting = [t for t in cands if t * bytes_per_row <= vmem_budget_bytes]
    fitting = fitting or [min(cands)]
    tile = max(fitting)
    if tile == N and N >= 16:
        # Prefer >= 2 grid steps so v7x's two TensorCores can split the work.
        smaller = [t for t in fitting if t <= N // 2]
        if smaller:
            tile = max(smaller)
    return tile


def fused_pregates(x_ncs, w_feat, b_feat, w_ih_bf16, lstm_b):
    N, C, S = x_ncs.shape
    tile_n = _pick_tile_n(N, C, S)
    return pl.pallas_call(
        _pregate_kernel,
        out_shape=jax.ShapeDtypeStruct((N, GATES), jnp.float32),
        grid_spec=pltpu.PrefetchScalarGridSpec(
            num_scalar_prefetch=0,
            grid=(N // tile_n,),
            in_specs=[
                pl.BlockSpec((tile_n, C, S), lambda i: (i, 0, 0)),
                pl.BlockSpec((C, MYSIZE), lambda i: (0, 0)),
                pl.BlockSpec((1, MYSIZE), lambda i: (0, 0)),
                pl.BlockSpec((MYSIZE, GATES), lambda i: (0, 0)),
                pl.BlockSpec((1, GATES), lambda i: (0, 0)),
            ],
            out_specs=pl.BlockSpec((tile_n, GATES), lambda i: (i, 0)),
        ),
        compiler_params=pltpu.CompilerParams(
            dimension_semantics=("parallel",),
            vmem_limit_bytes=32 << 20),
    )(x_ncs, w_feat, b_feat, w_ih_bf16, lstm_b)


def _fold_feature_params(params):
    """Fold eval-mode BN affine into the stand-in backbone projections (exact
    only because the stand-in trunk is global-avg-pool -> linear)."""
    g_m, bt_m, mu_m, var_m = params["bn_m"]
    g_r, bt_r, mu_r, var_r = params["bn_r"]
    scale_m = g_m / jnp.sqrt(var_m + BN_EPS)
    shift_m = bt_m - mu_m * scale_m
    scale_r = g_r / jnp.sqrt(var_r + BN_EPS)
    shift_r = bt_r - mu_r * scale_r

    w_i, w_m, w_r = params["w_i"], params["w_m"], params["w_r"]
    b_i = params["b_i"]                                   # rgb stream: no data BN
    b_m = params["b_m"] + shift_m @ w_m
    b_r = params["b_r"] + shift_r @ w_r

    w = jnp.zeros((NUM_CH, MYSIZE), jnp.float32)
    w = w.at[0:3, 0:FEAT_I].set(w_i)
    w = w.at[3:5, FEAT_I:FEAT_I + FEAT_M].set(scale_m[:, None] * w_m)
    w = w.at[5:8, FEAT_I + FEAT_M:].set(scale_r[:, None] * w_r)
    bias = jnp.concatenate([b_i, b_m, b_r]).reshape(1, MYSIZE)
    return w, bias


# ----------------------------------------------------------------------------
# Fused kernel #2: LSTM recurrence (batch_first, returns h_n[-1]) + Linear.
#   pg_seq: (B, T*4M) — row b = [pre_gates(b,0), pre_gates(b,1), ...]
#           (free reshape of kernel #1's output; rows already in (b,t) order).
#   Per step only gates = pre_gates_t + h @ W_hh remains (bias already folded).
#   Gate math, h, c in f32; only the matmul operand is quantized to bf16.
# ----------------------------------------------------------------------------
def _lstm_head_kernel(pg_ref, whh_ref, lw_ref, lb_ref, o_ref):
    B = pg_ref.shape[0]
    M = whh_ref.shape[0]
    G = 4 * M
    T = pg_ref.shape[1] // G

    w_hh = whh_ref[...]                       # (M, 4M) bf16, loop-constant RHS
    # TODO(synk): at production width (M=3072 -> 72 MiB bf16 W_hh) this weight
    # must be tiled over the gate axis with a Buffered pipeline, and could be
    # held in MXU staging regs (pltpu.matmul_push_rhs) since it is loop-const.
    h = jnp.zeros((B, M), jnp.float32)
    c = jnp.zeros((B, M), jnp.float32)

    for t in range(T):                        # static, fully unrolled
        gates = pg_ref[:, t * G:(t + 1) * G] + jnp.dot(
            h.astype(jnp.bfloat16), w_hh, preferred_element_type=jnp.float32)
        # PyTorch gate order: input, forget, cell(g), output
        i_g = jax.nn.sigmoid(gates[:, 0 * M:1 * M])
        f_g = jax.nn.sigmoid(gates[:, 1 * M:2 * M])
        g_g = jnp.tanh(gates[:, 2 * M:3 * M])
        o_g = jax.nn.sigmoid(gates[:, 3 * M:4 * M])
        c = f_g * c + i_g * g_g
        h = o_g * jnp.tanh(c)

    # Final linear head (padded to 128 lanes; sliced in the wrapper).
    o_ref[...] = (jnp.dot(h.astype(jnp.bfloat16), lw_ref[...],
                          preferred_element_type=jnp.float32) + lb_ref[...])


def lstm_head(pg_seq, w_hh_bf16, lin_w_pad, lin_b_pad):
    B = pg_seq.shape[0]
    vmem_spec = pl.BlockSpec(memory_space=pltpu.MemorySpace.VMEM)
    return pl.pallas_call(
        _lstm_head_kernel,
        out_shape=jax.ShapeDtypeStruct((B, HEAD_PAD), jnp.float32),
        in_specs=[vmem_spec, vmem_spec, vmem_spec, vmem_spec],
        out_specs=vmem_spec,
        compiler_params=pltpu.CompilerParams(vmem_limit_bytes=32 << 20),
    )(pg_seq, w_hh_bf16, lin_w_pad, lin_b_pad)


# ----------------------------------------------------------------------------
# Full forward pass (mirrors Model.forward)
# ----------------------------------------------------------------------------
@functools.partial(jax.jit, static_argnames=("batch_size",))
def model_forward(params, x, *, batch_size):
    # x: (B, T, 8, H, W) — channels: 3 rgb + 2 motion-vector + 3 residual
    B, T, C, H, W = x.shape
    N = B * T
    x_ncs = x.reshape(N, C, H * W)

    # --- fused BN + backbones + concat + LSTM input half -> (N, 4M) pre-gates ---
    w_feat, b_feat = _fold_feature_params(params)
    w_ih = params["lstm_w_ih"].astype(jnp.bfloat16)
    pregates = fused_pregates(x_ncs, w_feat, b_feat, w_ih, params["lstm_b"])

    # Rows are in (b, t) order; (B, T*4M) view = per-batch time concat (free).
    pg_seq = pregates.reshape(batch_size, -1)

    # --- fused LSTM recurrence + linear head ---
    w_hh = params["lstm_w_hh"].astype(jnp.bfloat16)
    lin_w_pad = (jnp.zeros((MYSIZE, HEAD_PAD), jnp.float32)
                 .at[:, :NUM_CLASS].set(params["lin_w"]).astype(jnp.bfloat16))
    lin_b_pad = (jnp.zeros((1, HEAD_PAD), jnp.float32)
                 .at[:, :NUM_CLASS].set(params["lin_b"]))

    logits_pad = lstm_head(pg_seq, w_hh, lin_w_pad, lin_b_pad)
    return logits_pad[:, :NUM_CLASS]                        # (B, num_class)


def init_params(key):
    ks = jax.random.split(key, 12)
    s = 0.05
    params = {
        # BatchNorm2d(2) and BatchNorm2d(3): (gamma, beta, running_mean, running_var)
        "bn_m": (1.0 + s * jax.random.normal(ks[0], (2,)),
                 s * jax.random.normal(ks[1], (2,)),
                 s * jax.random.normal(ks[2], (2,)),
                 jnp.abs(1.0 + s * jax.random.normal(ks[3], (2,)))),
        "bn_r": (1.0 + s * jax.random.normal(ks[4], (3,)),
                 s * jax.random.normal(ks[5], (3,)),
                 s * jax.random.normal(ks[6], (3,)),
                 jnp.abs(1.0 + s * jax.random.normal(ks[7], (3,)))),
        # backbone stand-in projections
        "w_i": jax.random.normal(ks[8], (3, FEAT_I)) * 0.2,
        "b_i": jnp.zeros((FEAT_I,)),
        "w_m": jax.random.normal(ks[9], (2, FEAT_M)) * 0.2,
        "b_m": jnp.zeros((FEAT_M,)),
        "w_r": jax.random.normal(ks[10], (3, FEAT_R)) * 0.2,
        "b_r": jnp.zeros((FEAT_R,)),
    }
    kl = jax.random.split(ks[11], 5)
    # nn.LSTM(input_size=MYSIZE, hidden_size=MYSIZE, num_layers=1, batch_first=True)
    # stored transposed: (in, 4H) / (hidden, 4H); bias = b_ih + b_hh, shape (1, 4H)
    params["lstm_w_ih"] = jax.random.normal(kl[0], (MYSIZE, 4 * MYSIZE)) * (1.0 / MYSIZE ** 0.5)
    params["lstm_w_hh"] = jax.random.normal(kl[1], (MYSIZE, 4 * MYSIZE)) * (1.0 / MYSIZE ** 0.5)
    params["lstm_b"] = jax.random.normal(kl[2], (1, 4 * MYSIZE)) * 0.02
    # nn.Linear(MYSIZE, num_class), stored transposed
    params["lin_w"] = jax.random.normal(kl[3], (MYSIZE, NUM_CLASS)) * (1.0 / MYSIZE ** 0.5)
    params["lin_b"] = jax.random.normal(kl[4], (NUM_CLASS,)) * 0.02
    return jax.tree_util.tree_map(lambda a: a.astype(jnp.float32), params)


if __name__ == "__main__":
    key = jax.random.PRNGKey(0)
    kp, kx = jax.random.split(key)
    params = init_params(kp)

    B, T, C, H, W = 2, 4, 8, 16, 16          # small shapes; C = 3 + 2 + 3
    x = jax.random.normal(kx, (B, T, C, H, W), dtype=jnp.float32)

    out = model_forward(params, x, batch_size=B)
    out = jax.block_until_ready(out)
    assert out.shape == (B, NUM_CLASS), out.shape
    assert bool(jnp.all(jnp.isfinite(out)))
    print("KERNEL_OK")
</pallas_src>

<mosaic_0001>
module attributes {stable_mosaic.version = 11 : i64} {
  func.func @_pregate_kernel(%arg0: i32, %arg1: memref<8x8x256xf32, #tpu.memory_space<vmem>>, %arg2: memref<8x384xf32, #tpu.memory_space<vmem>>, %arg3: memref<1x384xf32, #tpu.memory_space<vmem>>, %arg4: memref<384x1536xbf16, #tpu.memory_space<vmem>>, %arg5: memref<1x1536xf32, #tpu.memory_space<vmem>>, %arg6: memref<8x1536xf32, #tpu.memory_space<vmem>>) attributes {dimension_semantics = [#tpu.dimension_semantics<parallel>], iteration_bounds = array<i64: 1>, scalar_prefetch = 0 : i64, scratch_operands = 0 : i64, tpu.core_type = #tpu.core_type<tc>, window_params = [{transform_indices = @transform_0, window_bounds = array<i64: 8, 8, 256>}, {pipeline_mode = #tpu.pipeline_mode<synchronous>, transform_indices = @transform_1, window_bounds = array<i64: 8, 384>}, {pipeline_mode = #tpu.pipeline_mode<synchronous>, transform_indices = @transform_2, window_bounds = array<i64: 1, 384>}, {pipeline_mode = #tpu.pipeline_mode<synchronous>, transform_indices = @transform_3, window_bounds = array<i64: 384, 1536>}, {pipeline_mode = #tpu.pipeline_mode<synchronous>, transform_indices = @transform_4, window_bounds = array<i64: 1, 1536>}, {transform_indices = @transform_5, window_bounds = array<i64: 8, 1536>}]} {
    %c0 = arith.constant 0 : index
    %c0_0 = arith.constant 0 : index
    %c0_1 = arith.constant 0 : index
    %0 = vector.load %arg1[%c0, %c0_0, %c0_1] : memref<8x8x256xf32, #tpu.memory_space<vmem>>, vector<8x8x256xf32>
    %cst = arith.constant dense<0.000000e+00> : vector<8x8xf32>
    %1 = vector.multi_reduction <add>, %0, %cst [2] : vector<8x8x256xf32> to vector<8x8xf32>
    %cst_2 = arith.constant 2.560000e+02 : f32
    %2 = vector.broadcast %cst_2 : f32 to vector<8x8xf32>
    %3 = arith.divf %1, %2 : vector<8x8xf32>
    %c0_3 = arith.constant 0 : index
    %c0_4 = arith.constant 0 : index
    %4 = vector.load %arg2[%c0_3, %c0_4] : memref<8x384xf32, #tpu.memory_space<vmem>>, vector<8x384xf32>
    %cst_5 = arith.constant dense<0.000000e+00> : vector<8x384xf32>
    %5 = tpu.matmul %3, %4, %cst_5 {dimension_numbers = #tpu.dot_dimension_numbers<[1], [0], [0], [1], [0, 0, 1, 1], [], []>} : vector<8x8xf32>, vector<8x384xf32>, vector<8x384xf32> -> vector<8x384xf32>
    %c0_6 = arith.constant 0 : index
    %c0_7 = arith.constant 0 : index
    %6 = vector.load %arg3[%c0_6, %c0_7] : memref<1x384xf32, #tpu.memory_space<vmem>>, vector<1x384xf32>
    %7 = vector.broadcast %6 : vector<1x384xf32> to vector<8x384xf32>
    %8 = arith.addf %5, %7 : vector<8x384xf32>
    %cst_8 = arith.constant 0.000000e+00 : f32
    %9 = vector.broadcast %cst_8 : f32 to vector<8x384xf32>
    %10 = arith.maximumf %8, %9 : vector<8x384xf32>
    %11 = arith.truncf %10 : vector<8x384xf32> to vector<8x384xbf16>
    %c0_9 = arith.constant 0 : index
    %c0_10 = arith.constant 0 : index
    %12 = vector.load %arg4[%c0_9, %c0_10] : memref<384x1536xbf16, #tpu.memory_space<vmem>>, vector<384x1536xbf16>
    %cst_11 = arith.constant dense<0.000000e+00> : vector<8x1536xf32>
    %13 = tpu.matmul %11, %12, %cst_11 {dimension_numbers = #tpu.dot_dimension_numbers<[1], [0], [0], [1], [0, 0, 1, 1], [], []>} : vector<8x384xbf16>, vector<384x1536xbf16>, vector<8x1536xf32> -> vector<8x1536xf32>
    %c0_12 = arith.constant 0 : index
    %c0_13 = arith.constant 0 : index
    %14 = vector.load %arg5[%c0_12, %c0_13] : memref<1x1536xf32, #tpu.memory_space<vmem>>, vector<1x1536xf32>
    %15 = vector.broadcast %14 : vector<1x1536xf32> to vector<8x1536xf32>
    %16 = arith.addf %13, %15 : vector<8x1536xf32>
    %c0_14 = arith.constant 0 : index
    %c0_15 = arith.constant 0 : index
    %17 = vector.load %arg6[%c0_14, %c0_15] : memref<8x1536xf32, #tpu.memory_space<vmem>>, vector<8x1536xf32>
    tpu.vector_store %arg6[%c0_14, %c0_15], %16 {strides = array<i32>} : memref<8x1536xf32, #tpu.memory_space<vmem>>, vector<8x1536xf32>,
    return
  }
  func.func @transform_0(%arg0: i32) -> (i32, i32, i32) {
    %c0_i32 = arith.constant 0 : i32
    %c0_i32_0 = arith.constant 0 : i32
    %c0_i32_1 = arith.constant 0 : i32
    return %arg0, %c0_i32, %c0_i32_0 : i32, i32, i32
  }
  func.func @transform_1(%arg0: i32) -> (i32, i32) {
    %c0_i32 = arith.constant 0 : i32
    %c0_i32_0 = arith.constant 0 : i32
    %c0_i32_1 = arith.constant 0 : i32
    return %c0_i32, %c0_i32_0 : i32, i32
  }
  func.func @transform_2(%arg0: i32) -> (i32, i32) {
    %c0_i32 = arith.constant 0 : i32
    %c0_i32_0 = arith.constant 0 : i32
    %c0_i32_1 = arith.constant 0 : i32
    return %c0_i32, %c0_i32_0 : i32, i32
  }
  func.func @transform_3(%arg0: i32) -> (i32, i32) {
    %c0_i32 = arith.constant 0 : i32
    %c0_i32_0 = arith.constant 0 : i32
    %c0_i32_1 = arith.constant 0 : i32
    return %c0_i32, %c0_i32_0 : i32, i32
  }
  func.func @transform_4(%arg0: i32) -> (i32, i32) {
    %c0_i32 = arith.constant 0 : i32
    %c0_i32_0 = arith.constant 0 : i32
    %c0_i32_1 = arith.constant 0 : i32
    return %c0_i32, %c0_i32_0 : i32, i32
  }
  func.func @transform_5(%arg0: i32) -> (i32, i32) {
    %c0_i32 = arith.constant 0 : i32
    %c0_i32_0 = arith.constant 0 : i32
    return %arg0, %c0_i32 : i32, i32
  }
}

module attributes {stable_mosaic.version = 11 : i64} {
  func.func @_lstm_head_kernel(%arg0: memref<2x6144xf32, #tpu.memory_space<vmem>>, %arg1: memref<384x1536xbf16, #tpu.memory_space<vmem>>, %arg2: memref<384x128xbf16, #tpu.memory_space<vmem>>, %arg3: memref<1x128xf32, #tpu.memory_space<vmem>>, %arg4: memref<2x128xf32, #tpu.memory_space<vmem>>) attributes {dimension_semantics = [], scalar_prefetch = 0 : i64, scratch_operands = 0 : i64, tpu.core_type = #tpu.core_type<tc>} {
    %c0 = arith.constant 0 : index
    %c0_0 = arith.constant 0 : index
    %0 = vector.load %arg1[%c0, %c0_0] : memref<384x1536xbf16, #tpu.memory_space<vmem>>, vector<384x1536xbf16>
    %cst = arith.constant 0.000000e+00 : f32
    %1 = vector.broadcast %cst : f32 to vector<2x384xf32>
    %cst_1 = arith.constant 0.000000e+00 : f32
    %2 = vector.broadcast %cst_1 : f32 to vector<2x384xf32>
    %c0_2 = arith.constant 0 : index
    %c0_3 = arith.constant 0 : index
    %3 = vector.load %arg0[%c0_2, %c0_3] : memref<2x6144xf32, #tpu.memory_space<vmem>>, vector<2x1536xf32>
    %4 = arith.truncf %1 : vector<2x384xf32> to vector<2x384xbf16>
    %cst_4 = arith.constant dense<0.000000e+00> : vector<2x1536xf32>
    %5 = tpu.matmul %4, %0, %cst_4 {dimension_numbers = #tpu.dot_dimension_numbers<[1], [0], [0], [1], [0, 0, 1, 1], [], []>} : vector<2x384xbf16>, vector<384x1536xbf16>, vector<2x1536xf32> -> vector<2x1536xf32>
    %6 = arith.addf %3, %5 : vector<2x1536xf32>
    %7 = vector.extract_strided_slice %6 {offsets = [0, 0], sizes = [2, 384], strides = [1, 1]} : vector<2x1536xf32> to vector<2x384xf32>
    %8 = arith.negf %7 : vector<2x384xf32>
    %9 = math.exp %8 : vector<2x384xf32>
    %cst_5 = arith.constant 1.000000e+00 : f32
    %10 = vector.broadcast %cst_5 : f32 to vector<2x384xf32>
    %11 = arith.addf %10, %9 : vector<2x384xf32>
    %12 = arith.divf %10, %11 : vector<2x384xf32>
    %13 = vector.extract_strided_slice %6 {offsets = [0, 384], sizes = [2, 384], strides = [1, 1]} : vector<2x1536xf32> to vector<2x384xf32>
    %14 = arith.negf %13 : vector<2x384xf32>
    %15 = math.exp %14 : vector<2x384xf32>
    %cst_6 = arith.constant 1.000000e+00 : f32
    %16 = vector.broadcast %cst_6 : f32 to vector<2x384xf32>
    %17 = arith.addf %16, %15 : vector<2x384xf32>
    %18 = arith.divf %16, %17 : vector<2x384xf32>
    %19 = vector.extract_strided_slice %6 {offsets = [0, 768], sizes = [2, 384], strides = [1, 1]} : vector<2x1536xf32> to vector<2x384xf32>
    %20 = math.tanh %19 : vector<2x384xf32>
    %21 = vector.extract_strided_slice %6 {offsets = [0, 1152], sizes = [2, 384], strides = [1, 1]} : vector<2x1536xf32> to vector<2x384xf32>
    %22 = arith.negf %21 : vector<2x384xf32>
    %23 = math.exp %22 : vector<2x384xf32>
    %cst_7 = arith.constant 1.000000e+00 : f32
    %24 = vector.broadcast %cst_7 : f32 to vector<2x384xf32>
    %25 = arith.addf %24, %23 : vector<2x384xf32>
    %26 = arith.divf %24, %25 : vector<2x384xf32>
    %27 = arith.mulf %18, %2 : vector<2x384xf32>
    %28 = arith.mulf %12, %20 : vector<2x384xf32>
    %29 = arith.addf %27, %28 : vector<2x384xf32>
    %30 = math.tanh %29 : vector<2x384xf32>
    %31 = arith.mulf %26, %30 : vector<2x384xf32>
    %c0_8 = arith.constant 0 : index
    %c1536 = arith.constant 1536 : index
    %32 = vector.load %arg0[%c0_8, %c1536] : memref<2x6144xf32, #tpu.memory_space<vmem>>, vector<2x1536xf32>
    %33 = arith.truncf %31 : vector<2x384xf32> to vector<2x384xbf16>
    %cst_9 = arith.constant dense<0.000000e+00> : vector<2x1536xf32>
    %34 = tpu.matmul %33, %0, %cst_9 {dimension_numbers = #tpu.dot_dimension_numbers<[1], [0], [0], [1], [0, 0, 1, 1], [], []>} : vector<2x384xbf16>, vector<384x1536xbf16>, vector<2x1536xf32> -> vector<2x1536xf32>
    %35 = arith.addf %32, %34 : vector<2x1536xf32>
    %36 = vector.extract_strided_slice %35 {offsets = [0, 0], sizes = [2, 384], strides = [1, 1]} : vector<2x1536xf32> to vector<2x384xf32>
    %37 = arith.negf %36 : vector<2x384xf32>
    %38 = math.exp %37 : vector<2x384xf32>
    %cst_10 = arith.constant 1.000000e+00 : f32
    %39 = vector.broadcast %cst_10 : f32 to vector<2x384xf32>
    %40 = arith.addf %39, %38 : vector<2x384xf32>
    %41 = arith.divf %39, %40 : vector<2x384xf32>
    %42 = vector.extract_strided_slice %35 {offsets = [0, 384], sizes = [2, 384], strides = [1, 1]} : vector<2x1536xf32> to vector<2x384xf32>
    %43 = arith.negf %42 : vector<2x384xf32>
    %44 = math.exp %43 : vector<2x384xf32>
    %cst_11 = arith.constant 1.000000e+00 : f32
    %45 = vector.broadcast %cst_11 : f32 to vector<2x384xf32>
    %46 = arith.addf %45, %44 : vector<2x384xf32>
    %47 = arith.divf %45, %46 : vector<2x384xf32>
    %48 = vector.extract_strided_slice %35 {offsets = [0, 768], sizes = [2, 384], strides = [1, 1]} : vector<2x1536xf32> to vector<2x384xf32>
    %49 = math.tanh %48 : vector<2x384xf32>
    %50 = vector.extract_strided_slice %35 {offsets = [0, 1152], sizes = [2, 384], strides = [1, 1]} : vector<2x1536xf32> to vector<2x384xf32>
    %51 = arith.negf %50 : vector<2x384xf32>
    %52 = math.exp %51 : vector<2x384xf32>
    %cst_12 = arith.constant 1.000000e+00 : f32
    %53 = vector.broadcast %cst_12 : f32 to vector<2x384xf32>
    %54 = arith.addf %53, %52 : vector<2x384xf32>
    %55 = arith.divf %53, %54 : vector<2x384xf32>
    %56 = arith.mulf %47, %29 : vector<2x384xf32>
    %57 = arith.mulf %41, %49 : vector<2x384xf32>
    %58 = arith.addf %56, %57 : vector<2x384xf32>
    %59 = math.tanh %58 : vector<2x384xf32>
    %60 = arith.mulf %55, %59 : vector<2x384xf32>
    %c0_13 = arith.constant 0 : index
    %c3072 = arith.constant 3072 : index
    %61 = vector.load %arg0[%c0_13, %c3072] : memref<2x6144xf32, #tpu.memory_space<vmem>>, vector<2x1536xf32>
    %62 = arith.truncf %60 : vector<2x384xf32> to vector<2x384xbf16>
    %cst_14 = arith.constant dense<0.000000e+00> : vector<2x1536xf32>
    %63 = tpu.matmul %62, %0, %cst_14 {dimension_numbers = #tpu.dot_dimension_numbers<[1], [0], [0], [1], [0, 0, 1, 1], [], []>} : vector<2x384xbf16>, vector<384x1536xbf16>, vector<2x1536xf32> -> vector<2x1536xf32>
    %64 = arith.addf %61, %63 : vector<2x1536xf32>
    %65 = vector.extract_strided_slice %64 {offsets = [0, 0], sizes = [2, 384], strides = [1, 1]} : vector<2x1536xf32> to vector<2x384xf32>
    %66 = arith.negf %65 : vector<2x384xf32>
    %67 = math.exp %66 : vector<2x384xf32>
    %cst_15 = arith.constant 1.000000e+00 : f32
    %68 = vector.broadcast %cst_15 : f32 to vector<2x384xf32>
    %69 = arith.addf %68, %67 : vector<2x384xf32>
    %70 = arith.divf %68, %69 : vector<2x384xf32>
    %71 = vector.extract_strided_slice %64 {offsets = [0, 384], sizes = [2, 384], strides = [1, 1]} : vector<2x1536xf32> to vector<2x384xf32>
    %72 = arith.negf %71 : vector<2x384xf32>
    %73 = math.exp %72 : vector<2x384xf32>
    %cst_16 = arith.constant 1.000000e+00 : f32
    %74 = vector.broadcast %cst_16 : f32 to vector<2x384xf32>
    %75 = arith.addf %74, %73 : vector<2x384xf32>
    %76 = arith.divf %74, %75 : vector<2x384xf32>
    %77 = vector.extract_strided_slice %64 {offsets = [0, 768], sizes = [2, 384], strides = [1, 1]} : vector<2x1536xf32> to vector<2x384xf32>
    %78 = math.tanh %77 : vector<2x384xf32>
    %79 = vector.extract_strided_slice %64 {offsets = [0, 1152], sizes = [2, 384], strides = [1, 1]} : vector<2x1536xf32> to vector<2x384xf32>
    %80 = arith.negf %79 : vector<2x384xf32>
    %81 = math.exp %80 : vector<2x384xf32>
    %cst_17 = arith.constant 1.000000e+00 : f32
    %82 = vector.broadcast %cst_17 : f32 to vector<2x384xf32>
    %83 = arith.addf %82, %81 : vector<2x384xf32>
    %84 = arith.divf %82, %83 : vector<2x384xf32>
    %85 = arith.mulf %76, %58 : vector<2x384xf32>
    %86 = arith.mulf %70, %78 : vector<2x384xf32>
    %87 = arith.addf %85, %86 : vector<2x384xf32>
    %88 = math.tanh %87 : vector<2x384xf32>
    %89 = arith.mulf %84, %88 : vector<2x384xf32>
    %c0_18 = arith.constant 0 : index
    %c4608 = arith.constant 4608 : index
    %90 = vector.load %arg0[%c0_18, %c4608] : memref<2x6144xf32, #tpu.memory_space<vmem>>, vector<2x1536xf32>
    %91 = arith.truncf %89 : vector<2x384xf32> to vector<2x384xbf16>
    %cst_19 = arith.constant dense<0.000000e+00> : vector<2x1536xf32>
    %92 = tpu.matmul %91, %0, %cst_19 {dimension_numbers = #tpu.dot_dimension_numbers<[1], [0], [0], [1], [0, 0, 1, 1], [], []>} : vector<2x384xbf16>, vector<384x1536xbf16>, vector<2x1536xf32> -> vector<2x1536xf32>
    %93 = arith.addf %90, %92 : vector<2x1536xf32>
    %94 = vector.extract_strided_slice %93 {offsets = [0, 0], sizes = [2, 384], strides = [1, 1]} : vector<2x1536xf32> to vector<2x384xf32>
    %95 = arith.negf %94 : vector<2x384xf32>
    %96 = math.exp %95 : vector<2x384xf32>
    %cst_20 = arith.constant 1.000000e+00 : f32
    %97 = vector.broadcast %cst_20 : f32 to vector<2x384xf32>
    %98 = arith.addf %97, %96 : vector<2x384xf32>
    %99 = arith.divf %97, %98 : vector<2x384xf32>
    %100 = vector.extract_strided_slice %93 {offsets = [0, 384], sizes = [2, 384], strides = [1, 1]} : vector<2x1536xf32> to vector<2x384xf32>
    %101 = arith.negf %100 : vector<2x384xf32>
    %102 = math.exp %101 : vector<2x384xf32>
    %cst_21 = arith.constant 1.000000e+00 : f32
    %103 = vector.broadcast %cst_21 : f32 to vector<2x384xf32>
    %104 = arith.addf %103, %102 : vector<2x384xf32>
    %105 = arith.divf %103, %104 : vector<2x384xf32>
    %106 = vector.extract_strided_slice %93 {offsets = [0, 768], sizes = [2, 384], strides = [1, 1]} : vector<2x1536xf32> to vector<2x384xf32>
    %107 = math.tanh %106 : vector<2x384xf32>
    %108 = vector.extract_strided_slice %93 {offsets = [0, 1152], sizes = [2, 384], strides = [1, 1]} : vector<2x1536xf32> to vector<2x384xf32>
    %109 = arith.negf %108 : vector<2x384xf32>
    %110 = math.exp %109 : vector<2x384xf32>
    %cst_22 = arith.constant 1.000000e+00 : f32
    %111 = vector.broadcast %cst_22 : f32 to vector<2x384xf32>
    %112 = arith.addf %111, %110 : vector<2x384xf32>
    %113 = arith.divf %111, %112 : vector<2x384xf32>
    %114 = arith.mulf %105, %87 : vector<2x384xf32>
    %115 = arith.mulf %99, %107 : vector<2x384xf32>
    %116 = arith.addf %114, %115 : vector<2x384xf32>
    %117 = math.tanh %116 : vector<2x384xf32>
    %118 = arith.mulf %113, %117 : vector<2x384xf32>
    %119 = arith.truncf %118 : vector<2x384xf32> to vector<2x384xbf16>
    %c0_23 = arith.constant 0 : index
    %c0_24 = arith.constant 0 : index
    %120 = vector.load %arg2[%c0_23, %c0_24] : memref<384x128xbf16, #tpu.memory_space<vmem>>, vector<384x128xbf16>
    %cst_25 = arith.constant dense<0.000000e+00> : vector<2x128xf32>
    %121 = tpu.matmul %119, %120, %cst_25 {dimension_numbers = #tpu.dot_dimension_numbers<[1], [0], [0], [1], [0, 0, 1, 1], [], []>} : vector<2x384xbf16>, vector<384x128xbf16>, vector<2x128xf32> -> vector<2x128xf32>
    %c0_26 = arith.constant 0 : index
    %c0_27 = arith.constant 0 : index
    %122 = vector.load %arg3[%c0_26, %c0_27] : memref<1x128xf32, #tpu.memory_space<vmem>>, vector<1x128xf32>
    %123 = vector.broadcast %122 : vector<1x128xf32> to vector<2x128xf32>
    %124 = arith.addf %121, %123 : vector<2x128xf32>
    %c0_28 = arith.constant 0 : index
    %c0_29 = arith.constant 0 : index
    %125 = vector.load %arg4[%c0_28, %c0_29] : memref<2x128xf32, #tpu.memory_space<vmem>>, vector<2x128xf32>
    tpu.vector_store %arg4[%c0_28, %c0_29], %124 {strides = array<i32>} : memref<2x128xf32, #tpu.memory_space<vmem>>, vector<2x128xf32>,
    return
  }
}

</mosaic_0001>

<llo_original>
// kernel: model_forward.2
$region0: #{model_forward.2}
  #allocation0 [shape = 'u32[]', space=smem, size = 0x4, offset = 0x4, fixed_abs, tag = 'smem constant byte address 0x4 - core index']
  #allocation1 [shape = 'u32[144,128]{1,0:T(1,128)}', space=vmem, size = 0x12000, scoped, tag = 'internal scratch']
  %s0 = inlined_call_operand.vmem [shape: f32[8,8,256], index: 0, kind: input, shape index: {}]
  %s1 = inlined_call_operand.vmem [shape: f32[8,384], index: 1, kind: input, shape index: {}]
  %s2 = inlined_call_operand.vmem [shape: f32[1,384], index: 2, kind: input, shape index: {}]
  %s3 = inlined_call_operand.vmem [shape: bf16[384,1536], index: 3, kind: input, shape index: {}]
  %s4 = inlined_call_operand.vmem [shape: f32[1,1536], index: 4, kind: input, shape index: {}]
  %s5 = inlined_call_operand.vmem [shape: f32[8,1536], index: 5, kind: output, shape index: {}]
  %s6 = sld [smem:[#allocation0]]
  $region30: #{model_forward.2} parent=0
    _
  %s8 = ssub.s32 1, %s6
  %s9 = scalar_select 0, %s8, %s6
  // Predicated region
  $region2: #{model_forward.2} parent=0 // pred_check
    _
  $region3: #{model_forward.2} parent=0 // pred_check_branch
    %11 = sbr.rel (0) target = $region5
  $region4: #{model_forward.2} parent=0 // pred_region
    _
  $region5: #{model_forward.2} parent=0 // pred_fallthru
    _
  // Predicated region
  $region6: #{model_forward.2} parent=0 // pred_check
    _
  $region7: #{model_forward.2} parent=0 // pred_check_branch
    %13 = sbr.rel (0) target = $region9
  $region8: #{model_forward.2} parent=0 // pred_region
    _
  $region9: #{model_forward.2} parent=0 // pred_fallthru
    _
  // Predicated region
  $region10: #{model_forward.2} parent=0 // pred_check
    _
  $region11: #{model_forward.2} parent=0 // pred_check_branch
    %15 = sbr.rel (0) target = $region13
  $region12: #{model_forward.2} parent=0 // pred_region
    _
  $region13: #{model_forward.2} parent=0 // pred_fallthru
    _
  // Predicated region
  $region14: #{model_forward.2} parent=0 // pred_check
    _
  $region15: #{model_forward.2} parent=0 // pred_check_branch
    %17 = sbr.rel (0) target = $region17
  $region16: #{model_forward.2} parent=0 // pred_region
    _
  $region17: #{model_forward.2} parent=0 // pred_fallthru
    _
  // Predicated region
  $region18: #{model_forward.2} parent=0 // pred_check
    _
  $region19: #{model_forward.2} parent=0 // pred_check_branch
    %19 = sbr.rel (0) target = $region21
  $region20: #{model_forward.2} parent=0 // pred_region
    _
  $region21: #{model_forward.2} parent=0 // pred_fallthru
    _
  %v21 = vld [vmem:[%s0] sm:$0xff]
  %v22 = vld [vmem:[%s0 + $0x8] sm:$0xff]
  %v23 = vld [vmem:[%s0 + $0x10] sm:$0xff]
  %v24 = vld [vmem:[%s0 + $0x18] sm:$0xff]
  %v25 = vld [vmem:[%s0 + $0x20] sm:$0xff]
  %v26 = vld [vmem:[%s0 + $0x28] sm:$0xff]
  %v27 = vld [vmem:[%s0 + $0x30] sm:$0xff]
  %v28 = vld [vmem:[%s0 + $0x38] sm:$0xff]
  %v29 = vld [vmem:[%s0 + $0x40] sm:$0xff]
  %v30 = vld [vmem:[%s0 + $0x48] sm:$0xff]
  %v31 = vld [vmem:[%s0 + $0x50] sm:$0xff]
  %v32 = vld [vmem:[%s0 + $0x58] sm:$0xff]
  %v33 = vld [vmem:[%s0 + $0x60] sm:$0xff]
  %v34 = vld [vmem:[%s0 + $0x68] sm:$0xff]
  %v35 = vld [vmem:[%s0 + $0x70] sm:$0xff]
  %v36 = vld [vmem:[%s0 + $0x78] sm:$0xff]
  %v37 = vadd.f32 %v21, %v22
  %38 = vadd.xlane.f32.xlu0 %v37
  %v39 = vpop.xlane.xlu0 %38
  %v40 = vadd.f32 %v23, %v24
  %41 = vadd.xlane.f32.xlu0 %v40
  %v42 = vpop.xlane.xlu0 %41
  %v43 = vadd.f32 %v25, %v26
  %44 = vadd.xlane.f32.xlu0 %v43
  %v45 = vpop.xlane.xlu0 %44
  %v46 = vadd.f32 %v27, %v28
  %47 = vadd.xlane.f32.xlu0 %v46
  %v48 = vpop.xlane.xlu0 %47
  %v49 = vadd.f32 %v29, %v30
  %50 = vadd.xlane.f32.xlu0 %v49
  %v51 = vpop.xlane.xlu0 %50
  %v52 = vadd.f32 %v31, %v32
  %53 = vadd.xlane.f32.xlu0 %v52
  %v54 = vpop.xlane.xlu0 %53
  %v55 = vadd.f32 %v33, %v34
  %56 = vadd.xlane.f32.xlu0 %v55
  %v57 = vpop.xlane.xlu0 %56
  %v58 = vadd.f32 %v35, %v36
  %59 = vadd.xlane.f32.xlu0 %v58
  %v60 = vpop.xlane.xlu0 %59
  %v61 = vrcp.pop 256.0
  %v62 = vmul.f32 %v39, %v61
  %v63 = vmul.f32 %v42, %v61
  %v64 = vmul.f32 %v45, %v61
  %v65 = vmul.f32 %v48, %v61
  %v66 = vmul.f32 %v51, %v61
  %v67 = vmul.f32 %v54, %v61
  %v68 = vmul.f32 %v57, %v61
  %v69 = vmul.f32 %v60, %v61
  %v70 = vld [vmem:[%s1] sm:$0xff]
  %v71 = vld [vmem:[%s1 + $0x8] sm:$0xff]
  %v72 = vld [vmem:[%s1 + $0x10] sm:$0xff]
  %v73 = vld [vmem:[%s2] sm:$0x7]
  %v75 = vlaneseq
  %v76 = vshrl.u32 %v75, 7
  %v77 = vsub.s32 0, %v76
  %v78 = vrot.slane %v73, %v77
  %v79 = vlaneseq
  %v80 = vshrl.u32 %v79, 7
  %v81 = vsub.s32 1, %v80
  %v82 = vrot.slane %v73, %v81
  %v83 = vlaneseq
  %v84 = vshrl.u32 %v83, 7
  %v85 = vsub.s32 2, %v84
  %v86 = vrot.slane %v73, %v85
  %v98 = vlaneseq
  %v99 = vand.u32 %v98, 127
  %v100 = vlaneseq
  %v101 = vshrl.u32 %v100, 7
  %v102 = vsub.s32 %v99, %v101
  %v103 = vrot.slane %v62, %v102
  %v104 = vlaneseq
  %v105 = vshrl.u32 %v104, 7
  %v106 = vsub.s32 %v99, %v105
  %v107 = vrot.slane %v63, %v106
  %v108 = vlaneseq
  %v109 = vshrl.u32 %v108, 7
  %v110 = vsub.s32 %v99, %v109
  %v111 = vrot.slane %v64, %v110
  %v112 = vlaneseq
  %v113 = vshrl.u32 %v112, 7
  %v114 = vsub.s32 %v99, %v113
  %v115 = vrot.slane %v65, %v114
  %v116 = vlaneseq
  %v117 = vshrl.u32 %v116, 7
  %v118 = vsub.s32 %v99, %v117
  %v119 = vrot.slane %v66, %v118
  %v120 = vlaneseq
  %v121 = vshrl.u32 %v120, 7
  %v122 = vsub.s32 %v99, %v121
  %v123 = vrot.slane %v67, %v122
  %v124 = vlaneseq
  %v125 = vshrl.u32 %v124, 7
  %v126 = vsub.s32 %v99, %v125
  %v127 = vrot.slane %v68, %v126
  %v128 = vlaneseq
  %v129 = vshrl.u32 %v128, 7
  %v130 = vsub.s32 %v99, %v129
  %v131 = vrot.slane %v69, %v130
  %vm132 = vcmask 1041409
  %v133 = vsel %vm132, %v107, %v103
  %vm134 = vcmask 1042434
  %v135 = vsel %vm134, %v111, %v133
  %vm136 = vcmask 1043459
  %v137 = vsel %vm136, %v115, %v135
  %vm138 = vcmask 1044484
  %v139 = vsel %vm138, %v119, %v137
  %vm140 = vcmask 1045509
  %v141 = vsel %vm140, %v123, %v139
  %vm142 = vcmask 1046534
  %v143 = vsel %vm142, %v127, %v141
  %vm144 = vcmask 1047559
  %v145 = vsel %vm144, %v131, %v143
  %vm146 = vcmask 64512
  %v147 = vsel %vm146, %v145, 0
  %149 = vmatprep.subr.mxu0 0.0
  %150 = vmatpush1.msra.mxu0 0.0
  %151 = vmatprep.subr.mxu0 0.0
  %152 = vmatpush1.msra.mxu0 0.0
  %153 = vmatprep.subr.mxu0 0.0
  %154 = vmatpush1.msra.mxu0 0.0
  %155 = vmatprep.subr.mxu0 0.0
  %156 = vmatpush1.msra.mxu0 0.0
  %157 = vmatprep.subr.mxu0 0.0
  %158 = vmatpush1.msra.mxu0 0.0
  %159 = vmatprep.subr.mxu0 0.0
  %160 = vmatpush1.msra.mxu0 0.0
  %161 = vmatprep.subr.mxu0 0.0
  %162 = vmatpush1.msra.mxu0 0.0
  %163 = vmatprep.subr.mxu0 0.0
  %164 = vmatpush1.msra.mxu0 0.0
  %165 = vmatprep.subr.mxu0 0.0
  %166 = vmatpush1.msra.mxu0 0.0
  %167 = vmatprep.subr.mxu0 0.0
  %168 = vmatpush1.msra.mxu0 0.0
  %169 = vmatprep.subr.mxu0 0.0
  %170 = vmatpush1.msra.mxu0 0.0
  %171 = vmatprep.subr.mxu0 0.0
  %172 = vmatpush1.msra.mxu0 0.0
  %173 = vmatprep.subr.mxu0 0.0
  %174 = vmatpush1.msra.mxu0 0.0
  %175 = vmatprep.subr.mxu0 0.0
  %176 = vmatpush1.msra.mxu0 0.0
  %177 = vmatprep.subr.mxu0 0.0
  %178 = vmatpush1.msra.mxu0 0.0
  %179 = vmatprep.subr.mxu0 %v71
  %180 = vmatpush1.msra.mxu0 %v70
  %181 = vmatprep.subr.mxu0 0.0
  %182 = vmatpush2.msra.mxu0 0.0
  %183 = vmatprep.subr.mxu0 0.0
  %184 = vmatpush2.msra.mxu0 0.0
  %185 = vmatprep.subr.mxu0 0.0
  %186 = vmatpush2.msra.mxu0 0.0
  %187 = vmatprep.subr.mxu0 0.0
  %188 = vmatpush2.msra.mxu0 0.0
  %189 = vmatprep.subr.mxu0 0.0
  %190 = vmatpush2.msra.mxu0 0.0
  %191 = vmatprep.subr.mxu0 0.0
  %192 = vmatpush2.msra.mxu0 0.0
  %193 = vmatprep.subr.mxu0 0.0
  %194 = vmatpush2.msra.mxu0 0.0
  %195 = vmatprep.subr.mxu0 0.0
  %196 = vmatpush2.msra.mxu0 0.0
  %197 = vmatprep.subr.mxu0 0.0
  %198 = vmatpush2.msra.mxu0 0.0
  %199 = vmatprep.subr.mxu0 0.0
  %200 = vmatpush2.msra.mxu0 0.0
  %201 = vmatprep.subr.mxu0 0.0
  %202 = vmatpush2.msra.mxu0 0.0
  %203 = vmatprep.subr.mxu0 0.0
  %204 = vmatpush2.msra.mxu0 0.0
  %205 = vmatprep.subr.mxu0 0.0
  %206 = vmatpush2.msra.mxu0 0.0
  %207 = vmatprep.subr.mxu0 0.0
  %208 = vmatpush2.msra.mxu0 0.0
  %209 = vmatprep.subr.mxu0 0.0
  %210 = vmatpush2.msra.mxu0 0.0
  %211 = vmatprep.subr.mxu0 0.0
  %212 = vmatpush2.msra.mxu0 0.0
  %213 = vmatprep.mubr.f32.mxu0 0.0
  %214 = vmatmul.mubr.f32.gmra.mxu0 %v147
  %v215 = vpop.f32.mrf.mxu0
  %v216 = vadd.f32 %v78, %v215
  %v217 = vpop.f32.mrf.mxu0
  %v218 = vadd.f32 %v82, %v217
  %219 = vdwg.mxu0
  %220 = vmatprep.subr.mxu0 0.0
  %221 = vmatpush1.msra.mxu0 0.0
  %222 = vmatprep.subr.mxu0 0.0
  %223 = vmatpush1.msra.mxu0 0.0
  %224 = vmatprep.subr.mxu0 0.0
  %225 = vmatpush1.msra.mxu0 0.0
  %226 = vmatprep.subr.mxu0 0.0
  %227 = vmatpush1.msra.mxu0 0.0
  %228 = vmatprep.subr.mxu0 0.0
  %229 = vmatpush1.msra.mxu0 0.0
  %230 = vmatprep.subr.mxu0 0.0
  %231 = vmatpush1.msra.mxu0 0.0
  %232 = vmatprep.subr.mxu0 0.0
  %233 = vmatpush1.msra.mxu0 0.0
  %234 = vmatprep.subr.mxu0 0.0
  %235 = vmatpush1.msra.mxu0 0.0
  %236 = vmatprep.subr.mxu0 0.0
  %237 = vmatpush1.msra.mxu0 0.0
  %238 = vmatprep.subr.mxu0 0.0
  %239 = vmatpush1.msra.mxu0 0.0
  %240 = vmatprep.subr.mxu0 0.0
  %241 = vmatpush1.msra.mxu0 0.0
  %242 = vmatprep.subr.mxu0 0.0
  %243 = vmatpush1.msra.mxu0 0.0
  %244 = vmatprep.subr.mxu0 0.0
  %245 = vmatpush1.msra.mxu0 0.0
  %246 = vmatprep.subr.mxu0 0.0
  %247 = vmatpush1.msra.mxu0 0.0
  %248 = vmatprep.subr.mxu0 0.0
  %249 = vmatpush1.msra.mxu0 0.0
  %250 = vmatprep.subr.mxu0 0.0
  %251 = vmatpush1.msra.mxu0 %v72
  %252 = vmatprep.subr.mxu0 0.0
  %253 = vmatpush2.msra.mxu0 0.0
  %254 = vmatprep.subr.mxu0 0.0
  %255 = vmatpush2.msra.mxu0 0.0
  %256 = vmatprep.subr.mxu0 0.0
  %257 = vmatpush2.msra.mxu0 0.0
  %258 = vmatprep.subr.mxu0 0.0
  %259 = vmatpush2.msra.mxu0 0.0
  %260 = vmatprep.subr.mxu0 0.0
  %261 = vmatpush2.msra.mxu0 0.0
  %262 = vmatprep.subr.mxu0 0.0
  %263 = vmatpush2.msra.mxu0 0.0
  %264 = vmatprep.subr.mxu0 0.0
  %265 = vmatpush2.msra.mxu0 0.0
  %266 = vmatprep.subr.mxu0 0.0
  %267 = vmatpush2.msra.mxu0 0.0
  %268 = vmatprep.subr.mxu0 0.0
  %269 = vmatpush2.msra.mxu0 0.0
  %270 = vmatprep.subr.mxu0 0.0
  %271 = vmatpush2.msra.mxu0 0.0
  %272 = vmatprep.subr.mxu0 0.0
  %273 = vmatpush2.msra.mxu0 0.0
  %274 = vmatprep.subr.mxu0 0.0
  %275 = vmatpush2.msra.mxu0 0.0
  %276 = vmatprep.subr.mxu0 0.0
  %277 = vmatpush2.msra.mxu0 0.0
  %278 = vmatprep.subr.mxu0 0.0
  %279 = vmatpush2.msra.mxu0 0.0
  %280 = vmatprep.subr.mxu0 0.0
  %281 = vmatpush2.msra.mxu0 0.0
  %282 = vmatprep.subr.mxu0 0.0
  %283 = vmatpush2.msra.mxu0 0.0
  %284 = vmatprep.mubr.f32.mxu0 0.0
  %285 = vmatmul.mubr.f32.gmra.mxu0 %v147
  %v286 = vpop.f32.mrf.mxu0
  %v287 = vadd.f32 %v86, %v286
  %v288 = vpop.f32.mrf.mxu0
  %289 = vdwg.mxu0
  %v290 = vmax.f32 %v216, 0.0
  %v291 = vmax.f32 %v218, 0.0
  %v292 = vmax.f32 %v287, 0.0
  %v293 = vpack.c.bf16 %v290, %v290
  %v294 = vpack.c.bf16 %v291, %v291
  %v295 = vpack.c.bf16 %v292, %v292
  %v296 = vld [vmem:[%s3] sm:$0xff]
  %v297 = vld [vmem:[%s3 + $0x8] sm:$0xff]
  %v298 = vld [vmem:[%s3 + $0x10] sm:$0xff]
  %v299 = vld [vmem:[%s3 + $0x18] sm:$0xff]
  %v300 = vld [vmem:[%s3 + $0x20] sm:$0xff]
  %v301 = vld [vmem:[%s3 + $0x28] sm:$0xff]
  %v302 = vld [vmem:[%s3 + $0x30] sm:$0xff]
  %v303 = vld [vmem:[%s3 + $0x38] sm:$0xff]
  %v304 = vld [vmem:[%s3 + $0x40] sm:$0xff]
  %v305 = vld [vmem:[%s3 + $0x48] sm:$0xff]
  %v306 = vld [vmem:[%s3 + $0x50] sm:$0xff]
  %v307 = vld [vmem:[%s3 + $0x58] sm:$0xff]
  %v308 = vld [vmem:[%s3 + $0x60] sm:$0xff]
  %v309 = vld [vmem:[%s3 + $0x68] sm:$0xff]
  %v310 = vld [vmem:[%s3 + $0x70] sm:$0xff]
  %v311 = vld [vmem:[%s3 + $0x78] sm:$0xff]
  %v312 = vld [vmem:[%s3 + $0x80] sm:$0xff]
  %v313 = vld [vmem:[%s3 + $0x88] sm:$0xff]
  %v314 = vld [vmem:[%s3 + $0x90] sm:$0xff]
  %v315 = vld [vmem:[%s3 + $0x98] sm:$0xff]
  %v316 = vld [vmem:[%s3 + $0xa0] sm:$0xff]
  %v317 = vld [vmem:[%s3 + $0xa8] sm:$0xff]
  %v318 = vld [vmem:[%s3 + $0xb0] sm:$0xff]
  %v319 = vld [vmem:[%s3 + $0xb8] sm:$0xff]
  %v320 = vld [vmem:[%s3 + $0xc0] sm:$0xff]
  %v321 = vld [vmem:[%s3 + $0xc8] sm:$0xff]
  %v322 = vld [vmem:[%s3 + $0xd0] sm:$0xff]
  %v323 = vld [vmem:[%s3 + $0xd8] sm:$0xff]
  %v324 = vld [vmem:[%s3 + $0xe0] sm:$0xff]
  %v325 = vld [vmem:[%s3 + $0xe8] sm:$0xff]
  %v326 = vld [vmem:[%s3 + $0xf0] sm:$0xff]
  %v327 = vld [vmem:[%s3 + $0xf8] sm:$0xff]
  %v328 = vld [vmem:[%s3 + $0x100] sm:$0xff]
  %v329 = vld [vmem:[%s3 + $0x108] sm:$0xff]
  %v330 = vld [vmem:[%s3 + $0x110] sm:$0xff]
  %v331 = vld [vmem:[%s3 + $0x118] sm:$0xff]
  %v332 = vld [vmem:[%s3 + $0x120] sm:$0xff]
  %v333 = vld [vmem:[%s3 + $0x128] sm:$0xff]
  %v334 = vld [vmem:[%s3 + $0x130] sm:$0xff]
  %v335 = vld [vmem:[%s3 + $0x138] sm:$0xff]
  %v336 = vld [vmem:[%s3 + $0x140] sm:$0xff]
  %v337 = vld [vmem:[%s3 + $0x148] sm:$0xff]
  %v338 = vld [vmem:[%s3 + $0x150] sm:$0xff]
  %v339 = vld [vmem:[%s3 + $0x158] sm:$0xff]
  %v340 = vld [vmem:[%s3 + $0x160] sm:$0xff]
  %v341 = vld [vmem:[%s3 + $0x168] sm:$0xff]
  %v342 = vld [vmem:[%s3 + $0x170] sm:$0xff]
  %v343 = vld [vmem:[%s3 + $0x178] sm:$0xff]
  %v344 = vld [vmem:[%s3 + $0x180] sm:$0xff]
  %v345 = vld [vmem:[%s3 + $0x188] sm:$0xff]
  %v346 = vld [vmem:[%s3 + $0x190] sm:$0xff]
  %v347 = vld [vmem:[%s3 + $0x198] sm:$0xff]
  %v348 = vld [vmem:[%s3 + $0x1a0] sm:$0xff]
  %v349 = vld [vmem:[%s3 + $0x1a8] sm:$0xff]
  %v350 = vld [vmem:[%s3 + $0x1b0] sm:$0xff]
  %v351 = vld [vmem:[%s3 + $0x1b8] sm:$0xff]
  %v352 = vld [vmem:[%s3 + $0x1c0] sm:$0xff]
  %v353 = vld [vmem:[%s3 + $0x1c8] sm:$0xff]
  %v354 = vld [vmem:[%s3 + $0x1d0] sm:$0xff]
  %v355 = vld [vmem:[%s3 + $0x1d8] sm:$0xff]
  %v356 = vld [vmem:[%s3 + $0x1e0] sm:$0xff]
  %v357 = vld [vmem:[%s3 + $0x1e8] sm:$0xff]
  %v358 = vld [vmem:[%s3 + $0x1f0] sm:$0xff]
  %v359 = vld [vmem:[%s3 + $0x1f8] sm:$0xff]
  %v360 = vld [vmem:[%s3 + $0x200] sm:$0xff]
  %v361 = vld [vmem:[%s3 + $0x208] sm:$0xff]
  %v362 = vld [vmem:[%s3 + $0x210] sm:$0xff]
  %v363 = vld [vmem:[%s3 + $0x218] sm:$0xff]
  %v364 = vld [vmem:[%s3 + $0x220] sm:$0xff]
  %v365 = vld [vmem:[%s3 + $0x228] sm:$0xff]
  %v366 = vld [vmem:[%s3 + $0x230] sm:$0xff]
  %v367 = vld [vmem:[%s3 + $0x238] sm:$0xff]
  %v368 = vld [vmem:[%s3 + $0x240] sm:$0xff]
  %v369 = vld [vmem:[%s3 + $0x248] sm:$0xff]
  %v370 = vld [vmem:[%s3 + $0x250] sm:$0xff]
  %v371 = vld [vmem:[%s3 + $0x258] sm:$0xff]
  %v372 = vld [vmem:[%s3 + $0x260] sm:$0xff]
  %v373 = vld [vmem:[%s3 + $0x268] sm:$0xff]
  %v374 = vld [vmem:[%s3 + $0x270] sm:$0xff]
  %v375 = vld [vmem:[%s3 + $0x278] sm:$0xff]
  %v376 = vld [vmem:[%s3 + $0x280] sm:$0xff]
  %v377 = vld [vmem:[%s3 + $0x288] sm:$0xff]
  %v378 = vld [vmem:[%s3 + $0x290] sm:$0xff]
  %v379 = vld [vmem:[%s3 + $0x298] sm:$0xff]
  %v380 = vld [vmem:[%s3 + $0x2a0] sm:$0xff]
  %v381 = vld [vmem:[%s3 + $0x2a8] sm:$0xff]
  %v382 = vld [vmem:[%s3 + $0x2b0] sm:$0xff]
  %v383 = vld [vmem:[%s3 + $0x2b8] sm:$0xff]
  %v384 = vld [vmem:[%s3 + $0x2c0] sm:$0xff]
  %v385 = vld [vmem:[%s3 + $0x2c8] sm:$0xff]
  %v386 = vld [vmem:[%s3 + $0x2d0] sm:$0xff]
  %v387 = vld [vmem:[%s3 + $0x2d8] sm:$0xff]
  %v388 = vld [vmem:[%s3 + $0x2e0] sm:$0xff]
  %v389 = vld [vmem:[%s3 + $0x2e8] sm:$0xff]
  %v390 = vld [vmem:[%s3 + $0x2f0] sm:$0xff]
  %v391 = vld [vmem:[%s3 + $0x2f8] sm:$0xff]
  %v392 = vld [vmem:[%s3 + $0x300] sm:$0xff]
  %v393 = vld [vmem:[%s3 + $0x308] sm:$0xff]
  %v394 = vld [vmem:[%s3 + $0x310] sm:$0xff]
  %v395 = vld [vmem:[%s3 + $0x318] sm:$0xff]
  %v396 = vld [vmem:[%s3 + $0x320] sm:$0xff]
  %v397 = vld [vmem:[%s3 + $0x328] sm:$0xff]
  %v398 = vld [vmem:[%s3 + $0x330] sm:$0xff]
  %v399 = vld [vmem:[%s3 + $0x338] sm:$0xff]
  %v400 = vld [vmem:[%s3 + $0x340] sm:$0xff]
  %v401 = vld [vmem:[%s3 + $0x348] sm:$0xff]
  %v402 = vld [vmem:[%s3 + $0x350] sm:$0xff]
  %v403 = vld [vmem:[%s3 + $0x358] sm:$0xff]
  %v404 = vld [vmem:[%s3 + $0x360] sm:$0xff]
  %v405 = vld [vmem:[%s3 + $0x368] sm:$0xff]
  %v406 = vld [vmem:[%s3 + $0x370] sm:$0xff]
  %v407 = vld [vmem:[%s3 + $0x378] sm:$0xff]
  %v408 = vld [vmem:[%s3 + $0x380] sm:$0xff]
  %v409 = vld [vmem:[%s3 + $0x388] sm:$0xff]
  %v410 = vld [vmem:[%s3 + $0x390] sm:$0xff]
  %v411 = vld [vmem:[%s3 + $0x398] sm:$0xff]
  %v412 = vld [vmem:[%s3 + $0x3a0] sm:$0xff]
  %v413 = vld [vmem:[%s3 + $0x3a8] sm:$0xff]
  %v414 = vld [vmem:[%s3 + $0x3b0] sm:$0xff]
  %v415 = vld [vmem:[%s3 + $0x3b8] sm:$0xff]
  %v416 = vld [vmem:[%s3 + $0x3c0] sm:$0xff]
  %v417 = vld [vmem:[%s3 + $0x3c8] sm:$0xff]
  %v418 = vld [vmem:[%s3 + $0x3d0] sm:$0xff]
  %v419 = vld [vmem:[%s3 + $0x3d8] sm:$0xff]
  %v420 = vld [vmem:[%s3 + $0x3e0] sm:$0xff]
  %v421 = vld [vmem:[%s3 + $0x3e8] sm:$0xff]
  %v422 = vld [vmem:[%s3 + $0x3f0] sm:$0xff]
  %v423 = vld [vmem:[%s3 + $0x3f8] sm:$0xff]
  %v424 = vld [vmem:[%s3 + $0x400] sm:$0xff]
  %v425 = vld [vmem:[%s3 + $0x408] sm:$0xff]
  %v426 = vld [vmem:[%s3 + $0x410] sm:$0xff]
  %v427 = vld [vmem:[%s3 + $0x418] sm:$0xff]
  %v428 = vld [vmem:[%s3 + $0x420] sm:$0xff]
  %v429 = vld [vmem:[%s3 + $0x428] sm:$0xff]
  %v430 = vld [vmem:[%s3 + $0x430] sm:$0xff]
  %v431 = vld [vmem:[%s3 + $0x438] sm:$0xff]
  %v432 = vld [vmem:[%s3 + $0x440] sm:$0xff]
  %v433 = vld [vmem:[%s3 + $0x448] sm:$0xff]
  %v434 = vld [vmem:[%s3 + $0x450] sm:$0xff]
  %v435 = vld [vmem:[%s3 + $0x458] sm:$0xff]
  %v436 = vld [vmem:[%s3 + $0x460] sm:$0xff]
  %v437 = vld [vmem:[%s3 + $0x468] sm:$0xff]
  %v438 = vld [vmem:[%s3 + $0x470] sm:$0xff]
  %v439 = vld [vmem:[%s3 + $0x478] sm:$0xff]
  %v440 = vld [vmem:[%s3 + $0x480] sm:$0xff]
  %v441 = vld [vmem:[%s3 + $0x488] sm:$0xff]
  %v442 = vld [vmem:[%s3 + $0x490] sm:$0xff]
  %v443 = vld [vmem:[%s3 + $0x498] sm:$0xff]
  %v444 = vld [vmem:[%s3 + $0x4a0] sm:$0xff]
  %v445 = vld [vmem:[%s3 + $0x4a8] sm:$0xff]
  %v446 = vld [vmem:[%s3 + $0x4b0] sm:$0xff]
  %v447 = vld [vmem:[%s3 + $0x4b8] sm:$0xff]
  %v448 = vld [vmem:[%s3 + $0x4c0] sm:$0xff]
  %v449 = vld [vmem:[%s3 + $0x4c8] sm:$0xff]
  %v450 = vld [vmem:[%s3 + $0x4d0] sm:$0xff]
  %v451 = vld [vmem:[%s3 + $0x4d8] sm:$0xff]
  %v452 = vld [vmem:[%s3 + $0x4e0] sm:$0xff]
  %v453 = vld [vmem:[%s3 + $0x4e8] sm:$0xff]
  %v454 = vld [vmem:[%s3 + $0x4f0] sm:$0xff]
  %v455 = vld [vmem:[%s3 + $0x4f8] sm:$0xff]
  %v456 = vld [vmem:[%s3 + $0x500] sm:$0xff]
  %v457 = vld [vmem:[%s3 + $0x508] sm:$0xff]
  %v458 = vld [vmem:[%s3 + $0x510] sm:$0xff]
  %v459 = vld [vmem:[%s3 + $0x518] sm:$0xff]
  %v460 = vld [vmem:[%s3 + $0x520] sm:$0xff]
  %v461 = vld [vmem:[%s3 + $0x528] sm:$0xff]
  %v462 = vld [vmem:[%s3 + $0x530] sm:$0xff]
  %v463 = vld [vmem:[%s3 + $0x538] sm:$0xff]
  %v464 = vld [vmem:[%s3 + $0x540] sm:$0xff]
  %v465 = vld [vmem:[%s3 + $0x548] sm:$0xff]
  %v466 = vld [vmem:[%s3 + $0x550] sm:$0xff]
  %v467 = vld [vmem:[%s3 + $0x558] sm:$0xff]
  %v468 = vld [vmem:[%s3 + $0x560] sm:$0xff]
  %v469 = vld [vmem:[%s3 + $0x568] sm:$0xff]
  %v470 = vld [vmem:[%s3 + $0x570] sm:$0xff]
  %v471 = vld [vmem:[%s3 + $0x578] sm:$0xff]
  %v472 = vld [vmem:[%s3 + $0x580] sm:$0xff]
  %v473 = vld [vmem:[%s3 + $0x588] sm:$0xff]
  %v474 = vld [vmem:[%s3 + $0x590] sm:$0xff]
  %v475 = vld [vmem:[%s3 + $0x598] sm:$0xff]
  %v476 = vld [vmem:[%s3 + $0x5a0] sm:$0xff]
  %v477 = vld [vmem:[%s3 + $0x5a8] sm:$0xff]
  %v478 = vld [vmem:[%s3 + $0x5b0] sm:$0xff]
  %v479 = vld [vmem:[%s3 + $0x5b8] sm:$0xff]
  %v480 = vld [vmem:[%s3 + $0x5c0] sm:$0xff]
  %v481 = vld [vmem:[%s3 + $0x5c8] sm:$0xff]
  %v482 = vld [vmem:[%s3 + $0x5d0] sm:$0xff]
  %v483 = vld [vmem:[%s3 + $0x5d8] sm:$0xff]
  %v484 = vld [vmem:[%s3 + $0x5e0] sm:$0xff]
  %v485 = vld [vmem:[%s3 + $0x5e8] sm:$0xff]
  %v486 = vld [vmem:[%s3 + $0x5f0] sm:$0xff]
  %v487 = vld [vmem:[%s3 + $0x5f8] sm:$0xff]
  %v488 = vld [vmem:[%s3 + $0x600] sm:$0xff]
  %v489 = vld [vmem:[%s3 + $0x608] sm:$0xff]
  %v490 = vld [vmem:[%s3 + $0x610] sm:$0xff]
  %v491 = vld [vmem:[%s3 + $0x618] sm:$0xff]
  %v492 = vld [vmem:[%s3 + $0x620] sm:$0xff]
  %v493 = vld [vmem:[%s3 + $0x628] sm:$0xff]
  %v494 = vld [vmem:[%s3 + $0x630] sm:$0xff]
  %v495 = vld [vmem:[%s3 + $0x638] sm:$0xff]
  %v496 = vld [vmem:[%s3 + $0x640] sm:$0xff]
  %v497 = vld [vmem:[%s3 + $0x648] sm:$0xff]
  %v498 = vld [vmem:[%s3 + $0x650] sm:$0xff]
  %v499 = vld [vmem:[%s3 + $0x658] sm:$0xff]
  %v500 = vld [vmem:[%s3 + $0x660] sm:$0xff]
  %v501 = vld [vmem:[%s3 + $0x668] sm:$0xff]
  %v502 = vld [vmem:[%s3 + $0x670] sm:$0xff]
  %v503 = vld [vmem:[%s3 + $0x678] sm:$0xff]
  %v504 = vld [vmem:[%s3 + $0x680] sm:$0xff]
  %v505 = vld [vmem:[%s3 + $0x688] sm:$0xff]
  %v506 = vld [vmem:[%s3 + $0x690] sm:$0xff]
  %v507 = vld [vmem:[%s3 + $0x698] sm:$0xff]
  %v508 = vld [vmem:[%s3 + $0x6a0] sm:$0xff]
  %v509 = vld [vmem:[%s3 + $0x6a8] sm:$0xff]
  %v510 = vld [vmem:[%s3 + $0x6b0] sm:$0xff]
  %v511 = vld [vmem:[%s3 + $0x6b8] sm:$0xff]
  %v512 = vld [vmem:[%s3 + $0x6c0] sm:$0xff]
  %v513 = vld [vmem:[%s3 + $0x6c8] sm:$0xff]
  %v514 = vld [vmem:[%s3 + $0x6d0] sm:$0xff]
  %v515 = vld [vmem:[%s3 + $0x6d8] sm:$0xff]
  %v516 = vld [vmem:[%s3 + $0x6e0] sm:$0xff]
  %v517 = vld [vmem:[%s3 + $0x6e8] sm:$0xff]
  %v518 = vld [vmem:[%s3 + $0x6f0] sm:$0xff]
  %v519 = vld [vmem:[%s3 + $0x6f8] sm:$0xff]
  %v520 = vld [vmem:[%s3 + $0x700] sm:$0xff]
  %v521 = vld [vmem:[%s3 + $0x708] sm:$0xff]
  %v522 = vld [vmem:[%s3 + $0x710] sm:$0xff]
  %v523 = vld [vmem:[%s3 + $0x718] sm:$0xff]
  %v524 = vld [vmem:[%s3 + $0x720] sm:$0xff]
  %v525 = vld [vmem:[%s3 + $0x728] sm:$0xff]
  %v526 = vld [vmem:[%s3 + $0x730] sm:$0xff]
  %v527 = vld [vmem:[%s3 + $0x738] sm:$0xff]
  %v528 = vld [vmem:[%s3 + $0x740] sm:$0xff]
  %v529 = vld [vmem:[%s3 + $0x748] sm:$0xff]
  %v530 = vld [vmem:[%s3 + $0x750] sm:$0xff]
  %v531 = vld [vmem:[%s3 + $0x758] sm:$0xff]
  %v532 = vld [vmem:[%s3 + $0x760] sm:$0xff]
  %v533 = vld [vmem:[%s3 + $0x768] sm:$0xff]
  %v534 = vld [vmem:[%s3 + $0x770] sm:$0xff]
  %v535 = vld [vmem:[%s3 + $0x778] sm:$0xff]
  %v536 = vld [vmem:[%s3 + $0x780] sm:$0xff]
  %v537 = vld [vmem:[%s3 + $0x788] sm:$0xff]
  %v538 = vld [vmem:[%s3 + $0x790] sm:$0xff]
  %v539 = vld [vmem:[%s3 + $0x798] sm:$0xff]
  %v540 = vld [vmem:[%s3 + $0x7a0] sm:$0xff]
  %v541 = vld [vmem:[%s3 + $0x7a8] sm:$0xff]
  %v542 = vld [vmem:[%s3 + $0x7b0] sm:$0xff]
  %v543 = vld [vmem:[%s3 + $0x7b8] sm:$0xff]
  %v544 = vld [vmem:[%s3 + $0x7c0] sm:$0xff]
  %v545 = vld [vmem:[%s3 + $0x7c8] sm:$0xff]
  %v546 = vld [vmem:[%s3 + $0x7d0] sm:$0xff]
  %v547 = vld [vmem:[%s3 + $0x7d8] sm:$0xff]
  %v548 = vld [vmem:[%s3 + $0x7e0] sm:$0xff]
  %v549 = vld [vmem:[%s3 + $0x7e8] sm:$0xff]
  %v550 = vld [vmem:[%s3 + $0x7f0] sm:$0xff]
  %v551 = vld [vmem:[%s3 + $0x7f8] sm:$0xff]
  %v552 = vld [vmem:[%s3 + $0x800] sm:$0xff]
  %v553 = vld [vmem:[%s3 + $0x808] sm:$0xff]
  %v554 = vld [vmem:[%s3 + $0x810] sm:$0xff]
  %v555 = vld [vmem:[%s3 + $0x818] sm:$0xff]
  %v556 = vld [vmem:[%s3 + $0x820] sm:$0xff]
  %v557 = vld [vmem:[%s3 + $0x828] sm:$0xff]
  %v558 = vld [vmem:[%s3 + $0x830] sm:$0xff]
  %v559 = vld [vmem:[%s3 + $0x838] sm:$0xff]
  %v560 = vld [vmem:[%s3 + $0x840] sm:$0xff]
  %v561 = vld [vmem:[%s3 + $0x848] sm:$0xff]
  %v562 = vld [vmem:[%s3 + $0x850] sm:$0xff]
  %v563 = vld [vmem:[%s3 + $0x858] sm:$0xff]
  %v564 = vld [vmem:[%s3 + $0x860] sm:$0xff]
  %v565 = vld [vmem:[%s3 + $0x868] sm:$0xff]
  %v566 = vld [vmem:[%s3 + $0x870] sm:$0xff]
  %v567 = vld [vmem:[%s3 + $0x878] sm:$0xff]
  %v568 = vld [vmem:[%s3 + $0x880] sm:$0xff]
  %v569 = vld [vmem:[%s3 + $0x888] sm:$0xff]
  %v570 = vld [vmem:[%s3 + $0x890] sm:$0xff]
  %v571 = vld [vmem:[%s3 + $0x898] sm:$0xff]
  %v572 = vld [vmem:[%s3 + $0x8a0] sm:$0xff]
  %v573 = vld [vmem:[%s3 + $0x8a8] sm:$0xff]
  %v574 = vld [vmem:[%s3 + $0x8b0] sm:$0xff]
  %v575 = vld [vmem:[%s3 + $0x8b8] sm:$0xff]
  %v576 = vld [vmem:[%s3 + $0x8c0] sm:$0xff]
  %v577 = vld [vmem:[%s3 + $0x8c8] sm:$0xff]
  %v578 = vld [vmem:[%s3 + $0x8d0] sm:$0xff]
  %v579 = vld [vmem:[%s3 + $0x8d8] sm:$0xff]
  %v580 = vld [vmem:[%s3 + $0x8e0] sm:$0xff]
  %v581 = vld [vmem:[%s3 + $0x8e8] sm:$0xff]
  %v582 = vld [vmem:[%s3 + $0x8f0] sm:$0xff]
  %v583 = vld [vmem:[%s3 + $0x8f8] sm:$0xff]
  %v584 = vld [vmem:[%s4] sm:$0xff]
  %v585 = vld [vmem:[%s4 + $0x8] sm:$0xf]
  %v588 = vlaneseq
  %v589 = vshrl.u32 %v588, 7
  %v590 = vsub.s32 0, %v589
  %v591 = vrot.slane %v584, %v590
  %v592 = vlaneseq
  %v593 = vshrl.u32 %v592, 7
  %v594 = vsub.s32 1, %v593
  %v595 = vrot.slane %v584, %v594
  %v596 = vlaneseq
  %v597 = vshrl.u32 %v596, 7
  %v598 = vsub.s32 2, %v597
  %v599 = vrot.slane %v584, %v598
  %v600 = vlaneseq
  %v601 = vshrl.u32 %v600, 7
  %v602 = vsub.s32 3, %v601
  %v603 = vrot.slane %v584, %v602
  %v604 = vlaneseq
  %v605 = vshrl.u32 %v604, 7
  %v606 = vsub.s32 4, %v605
  %v607 = vrot.slane %v584, %v606
  %v608 = vlaneseq
  %v609 = vshrl.u32 %v608, 7
  %v610 = vsub.s32 5, %v609
  %v611 = vrot.slane %v584, %v610
  %v612 = vlaneseq
  %v613 = vshrl.u32 %v612, 7
  %v614 = vsub.s32 6, %v613
  %v615 = vrot.slane %v584, %v614
  %v616 = vlaneseq
  %v617 = vshrl.u32 %v616, 7
  %v618 = vsub.s32 7, %v617
  %v619 = vrot.slane %v584, %v618
  %v620 = vlaneseq
  %v621 = vshrl.u32 %v620, 7
  %v622 = vsub.s32 0, %v621
  %v623 = vrot.slane %v585, %v622
  %v624 = vlaneseq
  %v625 = vshrl.u32 %v624, 7
  %v626 = vsub.s32 1, %v625
  %v627 = vrot.slane %v585, %v626
  %v628 = vlaneseq
  %v629 = vshrl.u32 %v628, 7
  %v630 = vsub.s32 2, %v629
  %v631 = vrot.slane %v585, %v630
  %v632 = vlaneseq
  %v633 = vshrl.u32 %v632, 7
  %v634 = vsub.s32 3, %v633
  %v635 = vrot.slane %v585, %v634
  %v936 = vunpack.c.l.b16 %v296
  %v937 = vunpack.c.h.b16 %v296
  %v938 = vunpack.c.l.b16 %v297
  %v939 = vunpack.c.h.b16 %v297
  %v940 = vunpack.c.l.b16 %v298
  %v941 = vunpack.c.h.b16 %v298
  %v942 = vunpack.c.l.b16 %v299
  %v943 = vunpack.c.h.b16 %v299
  %v944 = vunpack.c.l.b16 %v300
  %v945 = vunpack.c.h.b16 %v300
  %v946 = vunpack.c.l.b16 %v301
  %v947 = vunpack.c.h.b16 %v301
  %v948 = vunpack.c.l.b16 %v302
  %v949 = vunpack.c.h.b16 %v302
  %v950 = vunpack.c.l.b16 %v303
  %v951 = vunpack.c.h.b16 %v303
  %v952 = vunpack.c.l.b16 %v304
  %v953 = vunpack.c.h.b16 %v304
  %v954 = vunpack.c.l.b16 %v305
  %v955 = vunpack.c.h.b16 %v305
  %v956 = vunpack.c.l.b16 %v306
  %v957 = vunpack.c.h.b16 %v306
  %v958 = vunpack.c.l.b16 %v307
  %v959 = vunpack.c.h.b16 %v307
  %v960 = vunpack.c.l.b16 %v308
  %v961 = vunpack.c.h.b16 %v308
  %v962 = vunpack.c.l.b16 %v309
  %v963 = vunpack.c.h.b16 %v309
  %v964 = vunpack.c.l.b16 %v310
  %v965 = vunpack.c.h.b16 %v310
  %v966 = vunpack.c.l.b16 %v311
  %v967 = vunpack.c.h.b16 %v311
  %v968 = vunpack.c.l.b16 %v312
  %v969 = vunpack.c.h.b16 %v312
  %v970 = vunpack.c.l.b16 %v313
  %v971 = vunpack.c.h.b16 %v313
  %v972 = vunpack.c.l.b16 %v314
  %v973 = vunpack.c.h.b16 %v314
  %v974 = vunpack.c.l.b16 %v315
  %v975 = vunpack.c.h.b16 %v315
  %v976 = vunpack.c.l.b16 %v316
  %v977 = vunpack.c.h.b16 %v316
  %v978 = vunpack.c.l.b16 %v317
  %v979 = vunpack.c.h.b16 %v317
  %v980 = vunpack.c.l.b16 %v318
  %v981 = vunpack.c.h.b16 %v318
  %v982 = vunpack.c.l.b16 %v319
  %v983 = vunpack.c.h.b16 %v319
  %v984 = vunpack.c.l.b16 %v320
  %v985 = vunpack.c.h.b16 %v320
  %v986 = vunpack.c.l.b16 %v321
  %v987 = vunpack.c.h.b16 %v321
  %v988 = vunpack.c.l.b16 %v322
  %v989 = vunpack.c.h.b16 %v322
  %v990 = vunpack.c.l.b16 %v323
  %v991 = vunpack.c.h.b16 %v323
  %v992 = vunpack.c.l.b16 %v324
  %v993 = vunpack.c.h.b16 %v324
  %v994 = vunpack.c.l.b16 %v325
  %v995 = vunpack.c.h.b16 %v325
  %v996 = vunpack.c.l.b16 %v326
  %v997 = vunpack.c.h.b16 %v326
  %v998 = vunpack.c.l.b16 %v327
  %v999 = vunpack.c.h.b16 %v327
  %v1000 = vunpack.c.l.b16 %v328
  %v1001 = vunpack.c.h.b16 %v328
  %v1002 = vunpack.c.l.b16 %v329
  %v1003 = vunpack.c.h.b16 %v329
  %v1004 = vunpack.c.l.b16 %v330
  %v1005 = vunpack.c.h.b16 %v330
  %v1006 = vunpack.c.l.b16 %v331
  %v1007 = vunpack.c.h.b16 %v331
  %v1008 = vunpack.c.l.b16 %v332
  %v1009 = vunpack.c.h.b16 %v332
  %v1010 = vunpack.c.l.b16 %v333
  %v1011 = vunpack.c.h.b16 %v333
  %v1012 = vunpack.c.l.b16 %v334
  %v1013 = vunpack.c.h.b16 %v334
  %v1014 = vunpack.c.l.b16 %v335
  %v1015 = vunpack.c.h.b16 %v335
  %v1016 = vunpack.c.l.b16 %v336
  %v1017 = vunpack.c.h.b16 %v336
  %v1018 = vunpack.c.l.b16 %v337
  %v1019 = vunpack.c.h.b16 %v337
  %v1020 = vunpack.c.l.b16 %v338
  %v1021 = vunpack.c.h.b16 %v338
  %v1022 = vunpack.c.l.b16 %v339
  %v1023 = vunpack.c.h.b16 %v339
  %v1024 = vunpack.c.l.b16 %v340
  %v1025 = vunpack.c.h.b16 %v340
  %v1026 = vunpack.c.l.b16 %v341
  %v1027 = vunpack.c.h.b16 %v341
  %v1028 = vunpack.c.l.b16 %v342
  %v1029 = vunpack.c.h.b16 %v342
  %v1030 = vunpack.c.l.b16 %v343
  %v1031 = vunpack.c.h.b16 %v343
  %v1032 = vunpack.c.l.b16 %v344
  %v1033 = vunpack.c.h.b16 %v344
  %v1034 = vunpack.c.l.b16 %v345
  %v1035 = vunpack.c.h.b16 %v345
  %v1036 = vunpack.c.l.b16 %v346
  %v1037 = vunpack.c.h.b16 %v346
  %v1038 = vunpack.c.l.b16 %v347
  %v1039 = vunpack.c.h.b16 %v347
  %v1040 = vunpack.c.l.b16 %v348
  %v1041 = vunpack.c.h.b16 %v348
  %v1042 = vunpack.c.l.b16 %v349
  %v1043 = vunpack.c.h.b16 %v349
  %v1044 = vunpack.c.l.b16 %v350
  %v1045 = vunpack.c.h.b16 %v350
  %v1046 = vunpack.c.l.b16 %v351
  %v1047 = vunpack.c.h.b16 %v351
  %v1048 = vunpack.c.l.b16 %v352
  %v1049 = vunpack.c.h.b16 %v352
  %v1050 = vunpack.c.l.b16 %v353
  %v1051 = vunpack.c.h.b16 %v353
  %v1052 = vunpack.c.l.b16 %v354
  %v1053 = vunpack.c.h.b16 %v354
  %v1054 = vunpack.c.l.b16 %v355
  %v1055 = vunpack.c.h.b16 %v355
  %v1056 = vunpack.c.l.b16 %v356
  %v1057 = vunpack.c.h.b16 %v356
  %v1058 = vunpack.c.l.b16 %v357
  %v1059 = vunpack.c.h.b16 %v357
  %v1060 = vunpack.c.l.b16 %v358
  %v1061 = vunpack.c.h.b16 %v358
  %v1062 = vunpack.c.l.b16 %v359
  %v1063 = vunpack.c.h.b16 %v359
  %v1064 = vunpack.c.l.b16 %v360
  %v1065 = vunpack.c.h.b16 %v360
  %v1066 = vunpack.c.l.b16 %v361
  %v1067 = vunpack.c.h.b16 %v361
  %v1068 = vunpack.c.l.b16 %v362
  %v1069 = vunpack.c.h.b16 %v362
  %v1070 = vunpack.c.l.b16 %v363
  %v1071 = vunpack.c.h.b16 %v363
  %v1072 = vunpack.c.l.b16 %v364
  %v1073 = vunpack.c.h.b16 %v364
  %v1074 = vunpack.c.l.b16 %v365
  %v1075 = vunpack.c.h.b16 %v365
  %v1076 = vunpack.c.l.b16 %v366
  %v1077 = vunpack.c.h.b16 %v366
  %v1078 = vunpack.c.l.b16 %v367
  %v1079 = vunpack.c.h.b16 %v367
  %v1080 = vunpack.c.l.b16 %v368
  %v1081 = vunpack.c.h.b16 %v368
  %v1082 = vunpack.c.l.b16 %v369
  %v1083 = vunpack.c.h.b16 %v369
  %v1084 = vunpack.c.l.b16 %v370
  %v1085 = vunpack.c.h.b16 %v370
  %v1086 = vunpack.c.l.b16 %v371
  %v1087 = vunpack.c.h.b16 %v371
  %v1088 = vunpack.c.l.b16 %v372
  %v1089 = vunpack.c.h.b16 %v372
  %v1090 = vunpack.c.l.b16 %v373
  %v1091 = vunpack.c.h.b16 %v373
  %v1092 = vunpack.c.l.b16 %v374
  %v1093 = vunpack.c.h.b16 %v374
  %v1094 = vunpack.c.l.b16 %v375
  %v1095 = vunpack.c.h.b16 %v375
  %v1096 = vunpack.c.l.b16 %v376
  %v1097 = vunpack.c.h.b16 %v376
  %v1098 = vunpack.c.l.b16 %v377
  %v1099 = vunpack.c.h.b16 %v377
  %v1100 = vunpack.c.l.b16 %v378
  %v1101 = vunpack.c.h.b16 %v378
  %v1102 = vunpack.c.l.b16 %v379
  %v1103 = vunpack.c.h.b16 %v379
  %v1104 = vunpack.c.l.b16 %v380
  %v1105 = vunpack.c.h.b16 %v380
  %v1106 = vunpack.c.l.b16 %v381
  %v1107 = vunpack.c.h.b16 %v381
  %v1108 = vunpack.c.l.b16 %v382
  %v1109 = vunpack.c.h.b16 %v382
  %v1110 = vunpack.c.l.b16 %v383
  %v1111 = vunpack.c.h.b16 %v383
  %v1112 = vunpack.c.l.b16 %v384
  %v1113 = vunpack.c.h.b16 %v384
  %v1114 = vunpack.c.l.b16 %v385
  %v1115 = vunpack.c.h.b16 %v385
  %v1116 = vunpack.c.l.b16 %v386
  %v1117 = vunpack.c.h.b16 %v386
  %v1118 = vunpack.c.l.b16 %v387
  %v1119 = vunpack.c.h.b16 %v387
  %v1120 = vunpack.c.l.b16 %v388
  %v1121 = vunpack.c.h.b16 %v388
  %v1122 = vunpack.c.l.b16 %v389
  %v1123 = vunpack.c.h.b16 %v389
  %v1124 = vunpack.c.l.b16 %v390
  %v1125 = vunpack.c.h.b16 %v390
  %v1126 = vunpack.c.l.b16 %v391
  %v1127 = vunpack.c.h.b16 %v391
  %v1128 = vunpack.c.l.b16 %v392
  %v1129 = vunpack.c.h.b16 %v392
  %v1130 = vunpack.c.l.b16 %v393
  %v1131 = vunpack.c.h.b16 %v393
  %v1132 = vunpack.c.l.b16 %v394
  %v1133 = vunpack.c.h.b16 %v394
  %v1134 = vunpack.c.l.b16 %v395
  %v1135 = vunpack.c.h.b16 %v395
  %v1136 = vunpack.c.l.b16 %v396
  %v1137 = vunpack.c.h.b16 %v396
  %v1138 = vunpack.c.l.b16 %v397
  %v1139 = vunpack.c.h.b16 %v397
  %v1140 = vunpack.c.l.b16 %v398
  %v1141 = vunpack.c.h.b16 %v398
  %v1142 = vunpack.c.l.b16 %v399
  %v1143 = vunpack.c.h.b16 %v399
  %v1144 = vunpack.c.l.b16 %v400
  %v1145 = vunpack.c.h.b16 %v400
  %v1146 = vunpack.c.l.b16 %v401
  %v1147 = vunpack.c.h.b16 %v401
  %v1148 = vunpack.c.l.b16 %v402
  %v1149 = vunpack.c.h.b16 %v402
  %v1150 = vunpack.c.l.b16 %v403
  %v1151 = vunpack.c.h.b16 %v403
  %v1152 = vunpack.c.l.b16 %v404
  %v1153 = vunpack.c.h.b16 %v404
  %v1154 = vunpack.c.l.b16 %v405
  %v1155 = vunpack.c.h.b16 %v405
  %v1156 = vunpack.c.l.b16 %v406
  %v1157 = vunpack.c.h.b16 %v406
  %v1158 = vunpack.c.l.b16 %v407
  %v1159 = vunpack.c.h.b16 %v407
  %v1160 = vunpack.c.l.b16 %v408
  %v1161 = vunpack.c.h.b16 %v408
  %v1162 = vunpack.c.l.b16 %v409
  %v1163 = vunpack.c.h.b16 %v409
  %v1164 = vunpack.c.l.b16 %v410
  %v1165 = vunpack.c.h.b16 %v410
  %v1166 = vunpack.c.l.b16 %v411
  %v1167 = vunpack.c.h.b16 %v411
  %v1168 = vunpack.c.l.b16 %v412
  %v1169 = vunpack.c.h.b16 %v412
  %v1170 = vunpack.c.l.b16 %v413
  %v1171 = vunpack.c.h.b16 %v413
  %v1172 = vunpack.c.l.b16 %v414
  %v1173 = vunpack.c.h.b16 %v414
  %v1174 = vunpack.c.l.b16 %v415
  %v1175 = vunpack.c.h.b16 %v415
  %v1176 = vunpack.c.l.b16 %v416
  %v1177 = vunpack.c.h.b16 %v416
  %v1178 = vunpack.c.l.b16 %v417
  %v1179 = vunpack.c.h.b16 %v417
  %v1180 = vunpack.c.l.b16 %v418
  %v1181 = vunpack.c.h.b16 %v418
  %v1182 = vunpack.c.l.b16 %v419
  %v1183 = vunpack.c.h.b16 %v419
  %v1184 = vunpack.c.l.b16 %v420
  %v1185 = vunpack.c.h.b16 %v420
  %v1186 = vunpack.c.l.b16 %v421
  %v1187 = vunpack.c.h.b16 %v421
  %v1188 = vunpack.c.l.b16 %v422
  %v1189 = vunpack.c.h.b16 %v422
  %v1190 = vunpack.c.l.b16 %v423
  %v1191 = vunpack.c.h.b16 %v423
  %v1192 = vunpack.c.l.b16 %v424
  %v1193 = vunpack.c.h.b16 %v424
  %v1194 = vunpack.c.l.b16 %v425
  %v1195 = vunpack.c.h.b16 %v425
  %v1196 = vunpack.c.l.b16 %v426
  %v1197 = vunpack.c.h.b16 %v426
  %v1198 = vunpack.c.l.b16 %v427
  %v1199 = vunpack.c.h.b16 %v427
  %v1200 = vunpack.c.l.b16 %v428
  %v1201 = vunpack.c.h.b16 %v428
  %v1202 = vunpack.c.l.b16 %v429
  %v1203 = vunpack.c.h.b16 %v429
  %v1204 = vunpack.c.l.b16 %v430
  %v1205 = vunpack.c.h.b16 %v430
  %v1206 = vunpack.c.l.b16 %v431
  %v1207 = vunpack.c.h.b16 %v431
  %v1208 = vunpack.c.l.b16 %v432
  %v1209 = vunpack.c.h.b16 %v432
  %v1210 = vunpack.c.l.b16 %v433
  %v1211 = vunpack.c.h.b16 %v433
  %v1212 = vunpack.c.l.b16 %v434
  %v1213 = vunpack.c.h.b16 %v434
  %v1214 = vunpack.c.l.b16 %v435
  %v1215 = vunpack.c.h.b16 %v435
  %v1216 = vunpack.c.l.b16 %v436
  %v1217 = vunpack.c.h.b16 %v436
  %v1218 = vunpack.c.l.b16 %v437
  %v1219 = vunpack.c.h.b16 %v437
  %v1220 = vunpack.c.l.b16 %v438
  %v1221 = vunpack.c.h.b16 %v438
  %v1222 = vunpack.c.l.b16 %v439
  %v1223 = vunpack.c.h.b16 %v439
  %v1224 = vunpack.c.l.b16 %v440
  %v1225 = vunpack.c.h.b16 %v440
  %v1226 = vunpack.c.l.b16 %v441
  %v1227 = vunpack.c.h.b16 %v441
  %v1228 = vunpack.c.l.b16 %v442
  %v1229 = vunpack.c.h.b16 %v442
  %v1230 = vunpack.c.l.b16 %v443
  %v1231 = vunpack.c.h.b16 %v443
  %v1232 = vunpack.c.l.b16 %v444
  %v1233 = vunpack.c.h.b16 %v444
  %v1234 = vunpack.c.l.b16 %v445
  %v1235 = vunpack.c.h.b16 %v445
  %v1236 = vunpack.c.l.b16 %v446
  %v1237 = vunpack.c.h.b16 %v446
  %v1238 = vunpack.c.l.b16 %v447
  %v1239 = vunpack.c.h.b16 %v447
  %v1240 = vunpack.c.l.b16 %v448
  %v1241 = vunpack.c.h.b16 %v448
  %v1242 = vunpack.c.l.b16 %v449
  %v1243 = vunpack.c.h.b16 %v449
  %v1244 = vunpack.c.l.b16 %v450
  %v1245 = vunpack.c.h.b16 %v450
  %v1246 = vunpack.c.l.b16 %v451
  %v1247 = vunpack.c.h.b16 %v451
  %v1248 = vunpack.c.l.b16 %v452
  %v1249 = vunpack.c.h.b16 %v452
  %v1250 = vunpack.c.l.b16 %v453
  %v1251 = vunpack.c.h.b16 %v453
  %v1252 = vunpack.c.l.b16 %v454
  %v1253 = vunpack.c.h.b16 %v454
  %v1254 = vunpack.c.l.b16 %v455
  %v1255 = vunpack.c.h.b16 %v455
  %v1256 = vunpack.c.l.b16 %v456
  %v1257 = vunpack.c.h.b16 %v456
  %v1258 = vunpack.c.l.b16 %v457
  %v1259 = vunpack.c.h.b16 %v457
  %v1260 = vunpack.c.l.b16 %v458
  %v1261 = vunpack.c.h.b16 %v458
  %v1262 = vunpack.c.l.b16 %v459
  %v1263 = vunpack.c.h.b16 %v459
  %v1264 = vunpack.c.l.b16 %v460
  %v1265 = vunpack.c.h.b16 %v460
  %v1266 = vunpack.c.l.b16 %v461
  %v1267 = vunpack.c.h.b16 %v461
  %v1268 = vunpack.c.l.b16 %v462
  %v1269 = vunpack.c.h.b16 %v462
  %v1270 = vunpack.c.l.b16 %v463
  %v1271 = vunpack.c.h.b16 %v463
  %v1272 = vunpack.c.l.b16 %v464
  %v1273 = vunpack.c.h.b16 %v464
  %v1274 = vunpack.c.l.b16 %v465
  %v1275 = vunpack.c.h.b16 %v465
  %v1276 = vunpack.c.l.b16 %v466
  %v1277 = vunpack.c.h.b16 %v466
  %v1278 = vunpack.c.l.b16 %v467
  %v1279 = vunpack.c.h.b16 %v467
  %v1280 = vunpack.c.l.b16 %v468
  %v1281 = vunpack.c.h.b16 %v468
  %v1282 = vunpack.c.l.b16 %v469
  %v1283 = vunpack.c.h.b16 %v469
  %v1284 = vunpack.c.l.b16 %v470
  %v1285 = vunpack.c.h.b16 %v470
  %v1286 = vunpack.c.l.b16 %v471
  %v1287 = vunpack.c.h.b16 %v471
  %v1288 = vunpack.c.l.b16 %v472
  %v1289 = vunpack.c.h.b16 %v472
  %v1290 = vunpack.c.l.b16 %v473
  %v1291 = vunpack.c.h.b16 %v473
  %v1292 = vunpack.c.l.b16 %v474
  %v1293 = vunpack.c.h.b16 %v474
  %v1294 = vunpack.c.l.b16 %v475
  %v1295 = vunpack.c.h.b16 %v475
  %v1296 = vunpack.c.l.b16 %v476
  %v1297 = vunpack.c.h.b16 %v476
  %v1298 = vunpack.c.l.b16 %v477
  %v1299 = vunpack.c.h.b16 %v477
  %v1300 = vunpack.c.l.b16 %v478
  %v1301 = vunpack.c.h.b16 %v478
  %v1302 = vunpack.c.l.b16 %v479
  %v1303 = vunpack.c.h.b16 %v479
  %v1304 = vunpack.c.l.b16 %v480
  %v1305 = vunpack.c.h.b16 %v480
  %v1306 = vunpack.c.l.b16 %v481
  %v1307 = vunpack.c.h.b16 %v481
  %v1308 = vunpack.c.l.b16 %v482
  %v1309 = vunpack.c.h.b16 %v482
  %v1310 = vunpack.c.l.b16 %v483
  %v1311 = vunpack.c.h.b16 %v483
  %v1312 = vunpack.c.l.b16 %v484
  %v1313 = vunpack.c.h.b16 %v484
  %v1314 = vunpack.c.l.b16 %v485
  %v1315 = vunpack.c.h.b16 %v485
  %v1316 = vunpack.c.l.b16 %v486
  %v1317 = vunpack.c.h.b16 %v486
  %v1318 = vunpack.c.l.b16 %v487
  %v1319 = vunpack.c.h.b16 %v487
  %v1320 = vunpack.c.l.b16 %v488
  %v1321 = vunpack.c.h.b16 %v488
  %v1322 = vunpack.c.l.b16 %v489
  %v1323 = vunpack.c.h.b16 %v489
  %v1324 = vunpack.c.l.b16 %v490
  %v1325 = vunpack.c.h.b16 %v490
  %v1326 = vunpack.c.l.b16 %v491
  %v1327 = vunpack.c.h.b16 %v491
  %v1328 = vunpack.c.l.b16 %v492
  %v1329 = vunpack.c.h.b16 %v492
  %v1330 = vunpack.c.l.b16 %v493
  %v1331 = vunpack.c.h.b16 %v493
  %v1332 = vunpack.c.l.b16 %v494
  %v1333 = vunpack.c.h.b16 %v494
  %v1334 = vunpack.c.l.b16 %v495
  %v1335 = vunpack.c.h.b16 %v495
  %v1336 = vunpack.c.l.b16 %v496
  %v1337 = vunpack.c.h.b16 %v496
  %v1338 = vunpack.c.l.b16 %v497
  %v1339 = vunpack.c.h.b16 %v497
  %v1340 = vunpack.c.l.b16 %v498
  %v1341 = vunpack.c.h.b16 %v498
  %v1342 = vunpack.c.l.b16 %v499
  %v1343 = vunpack.c.h.b16 %v499
  %v1344 = vunpack.c.l.b16 %v500
  %v1345 = vunpack.c.h.b16 %v500
  %v1346 = vunpack.c.l.b16 %v501
  %v1347 = vunpack.c.h.b16 %v501
  %v1348 = vunpack.c.l.b16 %v502
  %v1349 = vunpack.c.h.b16 %v502
  %v1350 = vunpack.c.l.b16 %v503
  %v1351 = vunpack.c.h.b16 %v503
  %v1352 = vunpack.c.l.b16 %v504
  %v1353 = vunpack.c.h.b16 %v504
  %v1354 = vunpack.c.l.b16 %v505
  %v1355 = vunpack.c.h.b16 %v505
  %v1356 = vunpack.c.l.b16 %v506
  %v1357 = vunpack.c.h.b16 %v506
  %v1358 = vunpack.c.l.b16 %v507
  %v1359 = vunpack.c.h.b16 %v507
  %v1360 = vunpack.c.l.b16 %v508
  %v1361 = vunpack.c.h.b16 %v508
  %v1362 = vunpack.c.l.b16 %v509
  %v1363 = vunpack.c.h.b16 %v509
  %v1364 = vunpack.c.l.b16 %v510
  %v1365 = vunpack.c.h.b16 %v510
  %v1366 = vunpack.c.l.b16 %v511
  %v1367 = vunpack.c.h.b16 %v511
  %v1368 = vunpack.c.l.b16 %v512
  %v1369 = vunpack.c.h.b16 %v512
  %v1370 = vunpack.c.l.b16 %v513
  %v1371 = vunpack.c.h.b16 %v513
  %v1372 = vunpack.c.l.b16 %v514
  %v1373 = vunpack.c.h.b16 %v514
  %v1374 = vunpack.c.l.b16 %v515
  %v1375 = vunpack.c.h.b16 %v515
  %v1376 = vunpack.c.l.b16 %v516
  %v1377 = vunpack.c.h.b16 %v516
  %v1378 = vunpack.c.l.b16 %v517
  %v1379 = vunpack.c.h.b16 %v517
  %v1380 = vunpack.c.l.b16 %v518
  %v1381 = vunpack.c.h.b16 %v518
  %v1382 = vunpack.c.l.b16 %v519
  %v1383 = vunpack.c.h.b16 %v519
  %v1384 = vunpack.c.l.b16 %v520
  %v1385 = vunpack.c.h.b16 %v520
  %v1386 = vunpack.c.l.b16 %v521
  %v1387 = vunpack.c.h.b16 %v521
  %v1388 = vunpack.c.l.b16 %v522
  %v1389 = vunpack.c.h.b16 %v522
  %v1390 = vunpack.c.l.b16 %v523
  %v1391 = vunpack.c.h.b16 %v523
  %v1392 = vunpack.c.l.b16 %v524
  %v1393 = vunpack.c.h.b16 %v524
  %v1394 = vunpack.c.l.b16 %v525
  %v1395 = vunpack.c.h.b16 %v525
  %v1396 = vunpack.c.l.b16 %v526
  %v1397 = vunpack.c.h.b16 %v526
  %v1398 = vunpack.c.l.b16 %v527
  %v1399 = vunpack.c.h.b16 %v527
  %v1400 = vunpack.c.l.b16 %v528
  %v1401 = vunpack.c.h.b16 %v528
  %v1402 = vunpack.c.l.b16 %v529
  %v1403 = vunpack.c.h.b16 %v529
  %v1404 = vunpack.c.l.b16 %v530
  %v1405 = vunpack.c.h.b16 %v530
  %v1406 = vunpack.c.l.b16 %v531
  %v1407 = vunpack.c.h.b16 %v531
  %v1408 = vunpack.c.l.b16 %v532
  %v1409 = vunpack.c.h.b16 %v532
  %v1410 = vunpack.c.l.b16 %v533
  %v1411 = vunpack.c.h.b16 %v533
  %v1412 = vunpack.c.l.b16 %v534
  %v1413 = vunpack.c.h.b16 %v534
  %v1414 = vunpack.c.l.b16 %v535
  %v1415 = vunpack.c.h.b16 %v535
  %v1416 = vunpack.c.l.b16 %v536
  %v1417 = vunpack.c.h.b16 %v536
  %v1418 = vunpack.c.l.b16 %v537
  %v1419 = vunpack.c.h.b16 %v537
  %v1420 = vunpack.c.l.b16 %v538
  %v1421 = vunpack.c.h.b16 %v538
  %v1422 = vunpack.c.l.b16 %v539
  %v1423 = vunpack.c.h.b16 %v539
  %v1424 = vunpack.c.l.b16 %v540
  %v1425 = vunpack.c.h.b16 %v540
  %v1426 = vunpack.c.l.b16 %v541
  %v1427 = vunpack.c.h.b16 %v541
  %v1428 = vunpack.c.l.b16 %v542
  %v1429 = vunpack.c.h.b16 %v542
  %v1430 = vunpack.c.l.b16 %v543
  %v1431 = vunpack.c.h.b16 %v543
  %v1432 = vunpack.c.l.b16 %v544
  %v1433 = vunpack.c.h.b16 %v544
  %v1434 = vunpack.c.l.b16 %v545
  %v1435 = vunpack.c.h.b16 %v545
  %v1436 = vunpack.c.l.b16 %v546
  %v1437 = vunpack.c.h.b16 %v546
  %v1438 = vunpack.c.l.b16 %v547
  %v1439 = vunpack.c.h.b16 %v547
  %v1440 = vunpack.c.l.b16 %v548
  %v1441 = vunpack.c.h.b16 %v548
  %v1442 = vunpack.c.l.b16 %v549
  %v1443 = vunpack.c.h.b16 %v549
  %v1444 = vunpack.c.l.b16 %v550
  %v1445 = vunpack.c.h.b16 %v550
  %v1446 = vunpack.c.l.b16 %v551
  %v1447 = vunpack.c.h.b16 %v551
  %v1448 = vunpack.c.l.b16 %v552
  %v1449 = vunpack.c.h.b16 %v552
  %v1450 = vunpack.c.l.b16 %v553
  %v1451 = vunpack.c.h.b16 %v553
  %v1452 = vunpack.c.l.b16 %v554
  %v1453 = vunpack.c.h.b16 %v554
  %v1454 = vunpack.c.l.b16 %v555
  %v1455 = vunpack.c.h.b16 %v555
  %v1456 = vunpack.c.l.b16 %v556
  %v1457 = vunpack.c.h.b16 %v556
  %v1458 = vunpack.c.l.b16 %v557
  %v1459 = vunpack.c.h.b16 %v557
  %v1460 = vunpack.c.l.b16 %v558
  %v1461 = vunpack.c.h.b16 %v558
  %v1462 = vunpack.c.l.b16 %v559
  %v1463 = vunpack.c.h.b16 %v559
  %v1464 = vunpack.c.l.b16 %v560
  %v1465 = vunpack.c.h.b16 %v560
  %v1466 = vunpack.c.l.b16 %v561
  %v1467 = vunpack.c.h.b16 %v561
  %v1468 = vunpack.c.l.b16 %v562
  %v1469 = vunpack.c.h.b16 %v562
  %v1470 = vunpack.c.l.b16 %v563
  %v1471 = vunpack.c.h.b16 %v563
  %v1472 = vunpack.c.l.b16 %v564
  %v1473 = vunpack.c.h.b16 %v564
  %v1474 = vunpack.c.l.b16 %v565
  %v1475 = vunpack.c.h.b16 %v565
  %v1476 = vunpack.c.l.b16 %v566
  %v1477 = vunpack.c.h.b16 %v566
  %v1478 = vunpack.c.l.b16 %v567
  %v1479 = vunpack.c.h.b16 %v567
  %v1480 = vunpack.c.l.b16 %v568
  %v1481 = vunpack.c.h.b16 %v568
  %v1482 = vunpack.c.l.b16 %v569
  %v1483 = vunpack.c.h.b16 %v569
  %v1484 = vunpack.c.l.b16 %v570
  %v1485 = vunpack.c.h.b16 %v570
  %v1486 = vunpack.c.l.b16 %v571
  %v1487 = vunpack.c.h.b16 %v571
  %v1488 = vunpack.c.l.b16 %v572
  %v1489 = vunpack.c.h.b16 %v572
  %v1490 = vunpack.c.l.b16 %v573
  %v1491 = vunpack.c.h.b16 %v573
  %v1492 = vunpack.c.l.b16 %v574
  %v1493 = vunpack.c.h.b16 %v574
  %v1494 = vunpack.c.l.b16 %v575
  %v1495 = vunpack.c.h.b16 %v575
  %v1496 = vunpack.c.l.b16 %v576
  %v1497 = vunpack.c.h.b16 %v576
  %v1498 = vunpack.c.l.b16 %v577
  %v1499 = vunpack.c.h.b16 %v577
  %v1500 = vunpack.c.l.b16 %v578
  %v1501 = vunpack.c.h.b16 %v578
  %v1502 = vunpack.c.l.b16 %v579
  %v1503 = vunpack.c.h.b16 %v579
  %v1504 = vunpack.c.l.b16 %v580
  %v1505 = vunpack.c.h.b16 %v580
  %v1506 = vunpack.c.l.b16 %v581
  %v1507 = vunpack.c.h.b16 %v581
  %v1508 = vunpack.c.l.b16 %v582
  %v1509 = vunpack.c.h.b16 %v582
  %v1510 = vunpack.c.l.b16 %v583
  %v1511 = vunpack.c.h.b16 %v583
  %v1512 = vpack.c.b16 %v948, %v936
  %v1513 = vpack.c.b16 %v949, %v937
  %v1514 = vpack.c.b16 %v950, %v938
  %v1515 = vpack.c.b16 %v951, %v939
  %v1516 = vpack.c.b16 %v952, %v940
  %v1517 = vpack.c.b16 %v953, %v941
  %v1518 = vpack.c.b16 %v954, %v942
  %v1519 = vpack.c.b16 %v955, %v943
  %v1520 = vpack.c.b16 %v956, %v944
  %v1521 = vpack.c.b16 %v957, %v945
  %v1522 = vpack.c.b16 %v958, %v946
  %v1523 = vpack.c.b16 %v959, %v947
  %v1524 = vpack.c.b16 %v972, %v960
  %v1525 = vpack.c.b16 %v973, %v961
  %v1526 = vpack.c.b16 %v974, %v962
  %v1527 = vpack.c.b16 %v975, %v963
  %v1528 = vpack.c.b16 %v976, %v964
  %v1529 = vpack.c.b16 %v977, %v965
  %v1530 = vpack.c.b16 %v978, %v966
  %v1531 = vpack.c.b16 %v979, %v967
  %v1532 = vpack.c.b16 %v980, %v968
  %v1533 = vpack.c.b16 %v981, %v969
  %v1534 = vpack.c.b16 %v982, %v970
  %v1535 = vpack.c.b16 %v983, %v971
  %v1536 = vpack.c.b16 %v996, %v984
  %v1537 = vpack.c.b16 %v997, %v985
  %v1538 = vpack.c.b16 %v998, %v986
  %v1539 = vpack.c.b16 %v999, %v987
  %v1540 = vpack.c.b16 %v1000, %v988
  %v1541 = vpack.c.b16 %v1001, %v989
  %v1542 = vpack.c.b16 %v1002, %v990
  %v1543 = vpack.c.b16 %v1003, %v991
  %v1544 = vpack.c.b16 %v1004, %v992
  %v1545 = vpack.c.b16 %v1005, %v993
  %v1546 = vpack.c.b16 %v1006, %v994
  %v1547 = vpack.c.b16 %v1007, %v995
  %v1548 = vpack.c.b16 %v1020, %v1008
  %v1549 = vpack.c.b16 %v1021, %v1009
  %v1550 = vpack.c.b16 %v1022, %v1010
  %v1551 = vpack.c.b16 %v1023, %v1011
  %v1552 = vpack.c.b16 %v1024, %v1012
  %v1553 = vpack.c.b16 %v1025, %v1013
  %v1554 = vpack.c.b16 %v1026, %v1014
  %v1555 = vpack.c.b16 %v1027, %v1015
  %v1556 = vpack.c.b16 %v1028, %v1016
  %v1557 = vpack.c.b16 %v1029, %v1017
  %v1558 = vpack.c.b16 %v1030, %v1018
  %v1559 = vpack.c.b16 %v1031, %v1019
  %v1560 = vpack.c.b16 %v1044, %v1032
  %v1561 = vpack.c.b16 %v1045, %v1033
  %v1562 = vpack.c.b16 %v1046, %v1034
  %v1563 = vpack.c.b16 %v1047, %v1035
  %v1564 = vpack.c.b16 %v1048, %v1036
  %v1565 = vpack.c.b16 %v1049, %v1037
  %v1566 = vpack.c.b16 %v1050, %v1038
  %v1567 = vpack.c.b16 %v1051, %v1039
  %v1568 = vpack.c.b16 %v1052, %v1040
  %v1569 = vpack.c.b16 %v1053, %v1041
  %v1570 = vpack.c.b16 %v1054, %v1042
  %v1571 = vpack.c.b16 %v1055, %v1043
  %v1572 = vpack.c.b16 %v1068, %v1056
  %v1573 = vpack.c.b16 %v1069, %v1057
  %v1574 = vpack.c.b16 %v1070, %v1058
  %v1575 = vpack.c.b16 %v1071, %v1059
  %v1576 = vpack.c.b16 %v1072, %v1060
  %v1577 = vpack.c.b16 %v1073, %v1061
  %v1578 = vpack.c.b16 %v1074, %v1062
  %v1579 = vpack.c.b16 %v1075, %v1063
  %v1580 = vpack.c.b16 %v1076, %v1064
  %v1581 = vpack.c.b16 %v1077, %v1065
  %v1582 = vpack.c.b16 %v1078, %v1066
  %v1583 = vpack.c.b16 %v1079, %v1067
  %v1584 = vpack.c.b16 %v1092, %v1080
  %v1585 = vpack.c.b16 %v1093, %v1081
  %v1586 = vpack.c.b16 %v1094, %v1082
  %v1587 = vpack.c.b16 %v1095, %v1083
  %v1588 = vpack.c.b16 %v1096, %v1084
  %v1589 = vpack.c.b16 %v1097, %v1085
  %v1590 = vpack.c.b16 %v1098, %v1086
  %v1591 = vpack.c.b16 %v1099, %v1087
  %v1592 = vpack.c.b16 %v1100, %v1088
  %v1593 = vpack.c.b16 %v1101, %v1089
  %v1594 = vpack.c.b16 %v1102, %v1090
  %v1595 = vpack.c.b16 %v1103, %v1091
  %v1596 = vpack.c.b16 %v1116, %v1104
  %v1597 = vpack.c.b16 %v1117, %v1105
  %v1598 = vpack.c.b16 %v1118, %v1106
  %v1599 = vpack.c.b16 %v1119, %v1107
  %v1600 = vpack.c.b16 %v1120, %v1108
  %v1601 = vpack.c.b16 %v1121, %v1109
  %v1602 = vpack.c.b16 %v1122, %v1110
  %v1603 = vpack.c.b16 %v1123, %v1111
  %v1604 = vpack.c.b16 %v1124, %v1112
  %v1605 = vpack.c.b16 %v1125, %v1113
  %v1606 = vpack.c.b16 %v1126, %v1114
  %v1607 = vpack.c.b16 %v1127, %v1115
  %v1608 = vpack.c.b16 %v1140, %v1128
  %v1609 = vpack.c.b16 %v1141, %v1129
  %v1610 = vpack.c.b16 %v1142, %v1130
  %v1611 = vpack.c.b16 %v1143, %v1131
  %v1612 = vpack.c.b16 %v1144, %v1132
  %v1613 = vpack.c.b16 %v1145, %v1133
  %v1614 = vpack.c.b16 %v1146, %v1134
  %v1615 = vpack.c.b16 %v1147, %v1135
  %v1616 = vpack.c.b16 %v1148, %v1136
  %v1617 = vpack.c.b16 %v1149, %v1137
  %v1618 = vpack.c.b16 %v1150, %v1138
  %v1619 = vpack.c.b16 %v1151, %v1139
  %v1620 = vpack.c.b16 %v1164, %v1152
  %v1621 = vpack.c.b16 %v1165, %v1153
  %v1622 = vpack.c.b16 %v1166, %v1154
  %v1623 = vpack.c.b16 %v1167, %v1155
  %v1624 = vpack.c.b16 %v1168, %v1156
  %v1625 = vpack.c.b16 %v1169, %v1157
  %v1626 = vpack.c.b16 %v1170, %v1158
  %v1627 = vpack.c.b16 %v1171, %v1159
  %v1628 = vpack.c.b16 %v1172, %v1160
  %v1629 = vpack.c.b16 %v1173, %v1161
  %v1630 = vpack.c.b16 %v1174, %v1162
  %v1631 = vpack.c.b16 %v1175, %v1163
  %v1632 = vpack.c.b16 %v1188, %v1176
  %v1633 = vpack.c.b16 %v1189, %v1177
  %v1634 = vpack.c.b16 %v1190, %v1178
  %v1635 = vpack.c.b16 %v1191, %v1179
  %v1636 = vpack.c.b16 %v1192, %v1180
  %v1637 = vpack.c.b16 %v1193, %v1181
  %v1638 = vpack.c.b16 %v1194, %v1182
  %v1639 = vpack.c.b16 %v1195, %v1183
  %v1640 = vpack.c.b16 %v1196, %v1184
  %v1641 = vpack.c.b16 %v1197, %v1185
  %v1642 = vpack.c.b16 %v1198, %v1186
  %v1643 = vpack.c.b16 %v1199, %v1187
  %v1644 = vpack.c.b16 %v1212, %v1200
  %v1645 = vpack.c.b16 %v1213, %v1201
  %v1646 = vpack.c.b16 %v1214, %v1202
  %v1647 = vpack.c.b16 %v1215, %v1203
  %v1648 = vpack.c.b16 %v1216, %v1204
  %v1649 = vpack.c.b16 %v1217, %v1205
  %v1650 = vpack.c.b16 %v1218, %v1206
  %v1651 = vpack.c.b16 %v1219, %v1207
  %v1652 = vpack.c.b16 %v1220, %v1208
  %v1653 = vpack.c.b16 %v1221, %v1209
  %v1654 = vpack.c.b16 %v1222, %v1210
  %v1655 = vpack.c.b16 %v1223, %v1211
  %v1656 = vpack.c.b16 %v1236, %v1224
  %v1657 = vpack.c.b16 %v1237, %v1225
  %v1658 = vpack.c.b16 %v1238, %v1226
  %v1659 = vpack.c.b16 %v1239, %v1227
  %v1660 = vpack.c.b16 %v1240, %v1228
  %v1661 = vpack.c.b16 %v1241, %v1229
  %v1662 = vpack.c.b16 %v1242, %v1230
  %v1663 = vpack.c.b16 %v1243, %v1231
  %v1664 = vpack.c.b16 %v1244, %v1232
  %v1665 = vpack.c.b16 %v1245, %v1233
  %v1666 = vpack.c.b16 %v1246, %v1234
  %v1667 = vpack.c.b16 %v1247, %v1235
  %v1668 = vpack.c.b16 %v1260, %v1248
  %v1669 = vpack.c.b16 %v1261, %v1249
  %v1670 = vpack.c.b16 %v1262, %v1250
  %v1671 = vpack.c.b16 %v1263, %v1251
  %v1672 = vpack.c.b16 %v1264, %v1252
  %v1673 = vpack.c.b16 %v1265, %v1253
  %v1674 = vpack.c.b16 %v1266, %v1254
  %v1675 = vpack.c.b16 %v1267, %v1255
  %v1676 = vpack.c.b16 %v1268, %v1256
  %v1677 = vpack.c.b16 %v1269, %v1257
  %v1678 = vpack.c.b16 %v1270, %v1258
  %v1679 = vpack.c.b16 %v1271, %v1259
  %v1680 = vpack.c.b16 %v1284, %v1272
  %v1681 = vpack.c.b16 %v1285, %v1273
  %v1682 = vpack.c.b16 %v1286, %v1274
  %v1683 = vpack.c.b16 %v1287, %v1275
  %v1684 = vpack.c.b16 %v1288, %v1276
  %v1685 = vpack.c.b16 %v1289, %v1277
  %v1686 = vpack.c.b16 %v1290, %v1278
  %v1687 = vpack.c.b16 %v1291, %v1279
  %v1688 = vpack.c.b16 %v1292, %v1280
  %v1689 = vpack.c.b16 %v1293, %v1281
  %v1690 = vpack.c.b16 %v1294, %v1282
  %v1691 = vpack.c.b16 %v1295, %v1283
  %v1692 = vpack.c.b16 %v1308, %v1296
  %v1693 = vpack.c.b16 %v1309, %v1297
  %v1694 = vpack.c.b16 %v1310, %v1298
  %v1695 = vpack.c.b16 %v1311, %v1299
  %v1696 = vpack.c.b16 %v1312, %v1300
  %v1697 = vpack.c.b16 %v1313, %v1301
  %v1698 = vpack.c.b16 %v1314, %v1302
  %v1699 = vpack.c.b16 %v1315, %v1303
  %v1700 = vpack.c.b16 %v1316, %v1304
  %v1701 = vpack.c.b16 %v1317, %v1305
  %v1702 = vpack.c.b16 %v1318, %v1306
  %v1703 = vpack.c.b16 %v1319, %v1307
  %v1704 = vpack.c.b16 %v1332, %v1320
  %v1705 = vpack.c.b16 %v1333, %v1321
  %v1706 = vpack.c.b16 %v1334, %v1322
  %v1707 = vpack.c.b16 %v1335, %v1323
  %v1708 = vpack.c.b16 %v1336, %v1324
  %v1709 = vpack.c.b16 %v1337, %v1325
  %v1710 = vpack.c.b16 %v1338, %v1326
  %v1711 = vpack.c.b16 %v1339, %v1327
  %v1712 = vpack.c.b16 %v1340, %v1328
  %v1713 = vpack.c.b16 %v1341, %v1329
  %v1714 = vpack.c.b16 %v1342, %v1330
  %v1715 = vpack.c.b16 %v1343, %v1331
  %v1716 = vpack.c.b16 %v1356, %v1344
  %v1717 = vpack.c.b16 %v1357, %v1345
  %v1718 = vpack.c.b16 %v1358, %v1346
  %v1719 = vpack.c.b16 %v1359, %v1347
  %v1720 = vpack.c.b16 %v1360, %v1348
  %v1721 = vpack.c.b16 %v1361, %v1349
  %v1722 = vpack.c.b16 %v1362, %v1350
  %v1723 = vpack.c.b16 %v1363, %v1351
  %v1724 = vpack.c.b16 %v1364, %v1352
  %v1725 = vpack.c.b16 %v1365, %v1353
  %v1726 = vpack.c.b16 %v1366, %v1354
  %v1727 = vpack.c.b16 %v1367, %v1355
  %v1728 = vpack.c.b16 %v1380, %v1368
  %v1729 = vpack.c.b16 %v1381, %v1369
  %v1730 = vpack.c.b16 %v1382, %v1370
  %v1731 = vpack.c.b16 %v1383, %v1371
  %v1732 = vpack.c.b16 %v1384, %v1372
  %v1733 = vpack.c.b16 %v1385, %v1373
  %v1734 = vpack.c.b16 %v1386, %v1374
  %v1735 = vpack.c.b16 %v1387, %v1375
  %v1736 = vpack.c.b16 %v1388, %v1376
  %v1737 = vpack.c.b16 %v1389, %v1377
  %v1738 = vpack.c.b16 %v1390, %v1378
  %v1739 = vpack.c.b16 %v1391, %v1379
  %v1740 = vpack.c.b16 %v1404, %v1392
  %v1741 = vpack.c.b16 %v1405, %v1393
  %v1742 = vpack.c.b16 %v1406, %v1394
  %v1743 = vpack.c.b16 %v1407, %v1395
  %v1744 = vpack.c.b16 %v1408, %v1396
  %v1745 = vpack.c.b16 %v1409, %v1397
  %v1746 = vpack.c.b16 %v1410, %v1398
  %v1747 = vpack.c.b16 %v1411, %v1399
  %v1748 = vpack.c.b16 %v1412, %v1400
  %v1749 = vpack.c.b16 %v1413, %v1401
  %v1750 = vpack.c.b16 %v1414, %v1402
  %v1751 = vpack.c.b16 %v1415, %v1403
  %v1752 = vpack.c.b16 %v1428, %v1416
  %v1753 = vpack.c.b16 %v1429, %v1417
  %v1754 = vpack.c.b16 %v1430, %v1418
  %v1755 = vpack.c.b16 %v1431, %v1419
  %v1756 = vpack.c.b16 %v1432, %v1420
  %v1757 = vpack.c.b16 %v1433, %v1421
  %v1758 = vpack.c.b16 %v1434, %v1422
  %v1759 = vpack.c.b16 %v1435, %v1423
  %v1760 = vpack.c.b16 %v1436, %v1424
  %v1761 = vpack.c.b16 %v1437, %v1425
  %v1762 = vpack.c.b16 %v1438, %v1426
  %v1763 = vpack.c.b16 %v1439, %v1427
  %v1764 = vpack.c.b16 %v1452, %v1440
  %v1765 = vpack.c.b16 %v1453, %v1441
  %v1766 = vpack.c.b16 %v1454, %v1442
  %v1767 = vpack.c.b16 %v1455, %v1443
  %v1768 = vpack.c.b16 %v1456, %v1444
  %v1769 = vpack.c.b16 %v1457, %v1445
  %v1770 = vpack.c.b16 %v1458, %v1446
  %v1771 = vpack.c.b16 %v1459, %v1447
  %v1772 = vpack.c.b16 %v1460, %v1448
  %v1773 = vpack.c.b16 %v1461, %v1449
  %v1774 = vpack.c.b16 %v1462, %v1450
  %v1775 = vpack.c.b16 %v1463, %v1451
  %v1776 = vpack.c.b16 %v1476, %v1464
  %v1777 = vpack.c.b16 %v1477, %v1465
  %v1778 = vpack.c.b16 %v1478, %v1466
  %v1779 = vpack.c.b16 %v1479, %v1467
  %v1780 = vpack.c.b16 %v1480, %v1468
  %v1781 = vpack.c.b16 %v1481, %v1469
  %v1782 = vpack.c.b16 %v1482, %v1470
  %v1783 = vpack.c.b16 %v1483, %v1471
  %v1784 = vpack.c.b16 %v1484, %v1472
  %v1785 = vpack.c.b16 %v1485, %v1473
  %v1786 = vpack.c.b16 %v1486, %v1474
  %v1787 = vpack.c.b16 %v1487, %v1475
  %v1788 = vpack.c.b16 %v1500, %v1488
  %v1789 = vpack.c.b16 %v1501, %v1489
  %v1790 = vpack.c.b16 %v1502, %v1490
  %v1791 = vpack.c.b16 %v1503, %v1491
  %v1792 = vpack.c.b16 %v1504, %v1492
  %v1793 = vpack.c.b16 %v1505, %v1493
  %v1794 = vpack.c.b16 %v1506, %v1494
  %v1795 = vpack.c.b16 %v1507, %v1495
  %v1796 = vpack.c.b16 %v1508, %v1496
  %v1797 = vpack.c.b16 %v1509, %v1497
  %v1798 = vpack.c.b16 %v1510, %v1498
  %v1799 = vpack.c.b16 %v1511, %v1499
  %2088 = vmatprep.subr.bf16.mxu0 %v1597
  %2089 = vmatpush1.bf16.msra.mxu0 %v1596
  %2090 = vmatprep.subr.bf16.mxu0 %v1585
  %2091 = vmatpush1.bf16.msra.mxu0 %v1584
  %2092 = vmatprep.subr.bf16.mxu0 %v1573
  %2093 = vmatpush1.bf16.msra.mxu0 %v1572
  %2094 = vmatprep.subr.bf16.mxu0 %v1561
  %2095 = vmatpush1.bf16.msra.mxu0 %v1560
  %2096 = vmatprep.subr.bf16.mxu0 %v1549
  %2097 = vmatpush1.bf16.msra.mxu0 %v1548
  %2098 = vmatprep.subr.bf16.mxu0 %v1537
  %2099 = vmatpush1.bf16.msra.mxu0 %v1536
  %2100 = vmatprep.subr.bf16.mxu0 %v1525
  %2101 = vmatpush1.bf16.msra.mxu0 %v1524
  %2102 = vmatprep.subr.bf16.mxu0 %v1513
  %2103 = vmatpush1.bf16.msra.mxu0 %v1512
  %2104 = vmatprep.subr.bf16.mxu0 %v1693
  %2105 = vmatpush2.bf16.msra.mxu0 %v1692
  %2106 = vmatprep.subr.bf16.mxu0 %v1681
  %2107 = vmatpush2.bf16.msra.mxu0 %v1680
  %2108 = vmatprep.subr.bf16.mxu0 %v1669
  %2109 = vmatpush2.bf16.msra.mxu0 %v1668
  %2110 = vmatprep.subr.bf16.mxu0 %v1657
  %2111 = vmatpush2.bf16.msra.mxu0 %v1656
  %2112 = vmatprep.subr.bf16.mxu0 %v1645
  %2113 = vmatpush2.bf16.msra.mxu0 %v1644
  %2114 = vmatprep.subr.bf16.mxu0 %v1633
  %2115 = vmatpush2.bf16.msra.mxu0 %v1632
  %2116 = vmatprep.subr.bf16.mxu0 %v1621
  %2117 = vmatpush2.bf16.msra.mxu0 %v1620
  %2118 = vmatprep.subr.bf16.mxu0 %v1609
  %2119 = vmatpush2.bf16.msra.mxu0 %v1608
  %2120 = vmatprep.mubr.bf16.mxu0 %v294
  %2121 = vmatmul.mubr.bf16.gmra.mxu0 %v293
  %v2122 = vpop.f32.mrf.mxu0
  %v2123 = vadd.f32 %v591, %v2122
  %v2124 = vpop.f32.mrf.mxu0
  %v2125 = vadd.f32 %v595, %v2124
  %v2126 = vpop.f32.mrf.mxu0
  %v2127 = vpop.f32.mrf.mxu0
  %2128 = vdwg.mxu0
  %2129 = vmatprep.subr.bf16.mxu0 %v1789
  %2130 = vmatpush1.bf16.msra.mxu0 %v1788
  %2131 = vmatprep.subr.bf16.mxu0 %v1777
  %2132 = vmatpush1.bf16.msra.mxu0 %v1776
  %2133 = vmatprep.subr.bf16.mxu0 %v1765
  %2134 = vmatpush1.bf16.msra.mxu0 %v1764
  %2135 = vmatprep.subr.bf16.mxu0 %v1753
  %2136 = vmatpush1.bf16.msra.mxu0 %v1752
  %2137 = vmatprep.subr.bf16.mxu0 %v1741
  %2138 = vmatpush1.bf16.msra.mxu0 %v1740
  %2139 = vmatprep.subr.bf16.mxu0 %v1729
  %2140 = vmatpush1.bf16.msra.mxu0 %v1728
  %2141 = vmatprep.subr.bf16.mxu0 %v1717
  %2142 = vmatpush1.bf16.msra.mxu0 %v1716
  %2143 = vmatprep.subr.bf16.mxu0 %v1705
  %2144 = vmatpush1.bf16.msra.mxu0 %v1704
  %2145 = vmatprep.subr.bf16.mxu0 0
  %2146 = vmatpush2.bf16.msra.mxu0 0
  %2147 = vmatprep.subr.bf16.mxu0 0
  %2148 = vmatpush2.bf16.msra.mxu0 0
  %2149 = vmatprep.subr.bf16.mxu0 0
  %2150 = vmatpush2.bf16.msra.mxu0 0
  %2151 = vmatprep.subr.bf16.mxu0 0
  %2152 = vmatpush2.bf16.msra.mxu0 0
  %2153 = vmatprep.subr.bf16.mxu0 0
  %2154 = vmatpush2.bf16.msra.mxu0 0
  %2155 = vmatprep.subr.bf16.mxu0 0
  %2156 = vmatpush2.bf16.msra.mxu0 0
  %2157 = vmatprep.subr.bf16.mxu0 0
  %2158 = vmatpush2.bf16.msra.mxu0 0
  %2159 = vmatprep.subr.bf16.mxu0 0
  %2160 = vmatpush2.bf16.msra.mxu0 0
  %2161 = vmatprep.mubr.bf16.mxu0 0
  %2162 = vmatmul.mubr.bf16.gmra.mxu0 %v295
  %v2163 = vpop.f32.mrf.mxu0
  %v2164 = vadd.f32 %v2123, %v2163
  %v2165 = vpop.f32.mrf.mxu0
  %v2166 = vadd.f32 %v2125, %v2165
  %v2167 = vpop.f32.mrf.mxu0
  %v2168 = vpop.f32.mrf.mxu0
  %2169 = vdwg.mxu0
  %2170 = vmatprep.subr.bf16.mxu0 %v1599
  %2171 = vmatpush1.bf16.msra.mxu0 %v1598
  %2172 = vmatprep.subr.bf16.mxu0 %v1587
  %2173 = vmatpush1.bf16.msra.mxu0 %v1586
  %2174 = vmatprep.subr.bf16.mxu0 %v1575
  %2175 = vmatpush1.bf16.msra.mxu0 %v1574
  %2176 = vmatprep.subr.bf16.mxu0 %v1563
  %2177 = vmatpush1.bf16.msra.mxu0 %v1562
  %2178 = vmatprep.subr.bf16.mxu0 %v1551
  %2179 = vmatpush1.bf16.msra.mxu0 %v1550
  %2180 = vmatprep.subr.bf16.mxu0 %v1539
  %2181 = vmatpush1.bf16.msra.mxu0 %v1538
  %2182 = vmatprep.subr.bf16.mxu0 %v1527
  %2183 = vmatpush1.bf16.msra.mxu0 %v1526
  %2184 = vmatprep.subr.bf16.mxu0 %v1515
  %2185 = vmatpush1.bf16.msra.mxu0 %v1514
  %2186 = vmatprep.subr.bf16.mxu0 %v1695
  %2187 = vmatpush2.bf16.msra.mxu0 %v1694
  %2188 = vmatprep.subr.bf16.mxu0 %v1683
  %2189 = vmatpush2.bf16.msra.mxu0 %v1682
  %2190 = vmatprep.subr.bf16.mxu0 %v1671
  %2191 = vmatpush2.bf16.msra.mxu0 %v1670
  %2192 = vmatprep.subr.bf16.mxu0 %v1659
  %2193 = vmatpush2.bf16.msra.mxu0 %v1658
  %2194 = vmatprep.subr.bf16.mxu0 %v1647
  %2195 = vmatpush2.bf16.msra.mxu0 %v1646
  %2196 = vmatprep.subr.bf16.mxu0 %v1635
  %2197 = vmatpush2.bf16.msra.mxu0 %v1634
  %2198 = vmatprep.subr.bf16.mxu0 %v1623
  %2199 = vmatpush2.bf16.msra.mxu0 %v1622
  %2200 = vmatprep.subr.bf16.mxu0 %v1611
  %2201 = vmatpush2.bf16.msra.mxu0 %v1610
  %2202 = vmatprep.mubr.bf16.mxu0 %v294
  %2203 = vmatmul.mubr.bf16.gmra.mxu0 %v293
  %v2204 = vpop.f32.mrf.mxu0
  %v2205 = vadd.f32 %v599, %v2204
  %v2206 = vpop.f32.mrf.mxu0
  %v2207 = vadd.f32 %v603, %v2206
  %v2208 = vpop.f32.mrf.mxu0
  %v2209 = vpop.f32.mrf.mxu0
  %2210 = vdwg.mxu0
  %2211 = vmatprep.subr.bf16.mxu0 %v1791
  %2212 = vmatpush1.bf16.msra.mxu0 %v1790
  %2213 = vmatprep.subr.bf16.mxu0 %v1779
  %2214 = vmatpush1.bf16.msra.mxu0 %v1778
  %2215 = vmatprep.subr.bf16.mxu0 %v1767
  %2216 = vmatpush1.bf16.msra.mxu0 %v1766
  %2217 = vmatprep.subr.bf16.mxu0 %v1755
  %2218 = vmatpush1.bf16.msra.mxu0 %v1754
  %2219 = vmatprep.subr.bf16.mxu0 %v1743
  %2220 = vmatpush1.bf16.msra.mxu0 %v1742
  %2221 = vmatprep.subr.bf16.mxu0 %v1731
  %2222 = vmatpush1.bf16.msra.mxu0 %v1730
  %2223 = vmatprep.subr.bf16.mxu0 %v1719
  %2224 = vmatpush1.bf16.msra.mxu0 %v1718
  %2225 = vmatprep.subr.bf16.mxu0 %v1707
  %2226 = vmatpush1.bf16.msra.mxu0 %v1706
  %2227 = vmatprep.subr.bf16.mxu0 0
  %2228 = vmatpush2.bf16.msra.mxu0 0
  %2229 = vmatprep.subr.bf16.mxu0 0
  %2230 = vmatpush2.bf16.msra.mxu0 0
  %2231 = vmatprep.subr.bf16.mxu0 0
  %2232 = vmatpush2.bf16.msra.mxu0 0
  %2233 = vmatprep.subr.bf16.mxu0 0
  %2234 = vmatpush2.bf16.msra.mxu0 0
  %2235 = vmatprep.subr.bf16.mxu0 0
  %2236 = vmatpush2.bf16.msra.mxu0 0
  %2237 = vmatprep.subr.bf16.mxu0 0
  %2238 = vmatpush2.bf16.msra.mxu0 0
  %2239 = vmatprep.subr.bf16.mxu0 0
  %2240 = vmatpush2.bf16.msra.mxu0 0
  %2241 = vmatprep.subr.bf16.mxu0 0
  %2242 = vmatpush2.bf16.msra.mxu0 0
  %2243 = vmatprep.mubr.bf16.mxu0 0
  %2244 = vmatmul.mubr.bf16.gmra.mxu0 %v295
  %v2245 = vpop.f32.mrf.mxu0
  %v2246 = vadd.f32 %v2205, %v2245
  %v2247 = vpop.f32.mrf.mxu0
  %v2248 = vadd.f32 %v2207, %v2247
  %v2249 = vpop.f32.mrf.mxu0
  %v2250 = vpop.f32.mrf.mxu0
  %2251 = vdwg.mxu0
  %2252 = vmatprep.subr.bf16.mxu0 %v1601
  %2253 = vmatpush1.bf16.msra.mxu0 %v1600
  %2254 = vmatprep.subr.bf16.mxu0 %v1589
  %2255 = vmatpush1.bf16.msra.mxu0 %v1588
  %2256 = vmatprep.subr.bf16.mxu0 %v1577
  %2257 = vmatpush1.bf16.msra.mxu0 %v1576
  %2258 = vmatprep.subr.bf16.mxu0 %v1565
  %2259 = vmatpush1.bf16.msra.mxu0 %v1564
  %2260 = vmatprep.subr.bf16.mxu0 %v1553
  %2261 = vmatpush1.bf16.msra.mxu0 %v1552
  %2262 = vmatprep.subr.bf16.mxu0 %v1541
  %2263 = vmatpush1.bf16.msra.mxu0 %v1540
  %2264 = vmatprep.subr.bf16.mxu0 %v1529
  %2265 = vmatpush1.bf16.msra.mxu0 %v1528
  %2266 = vmatprep.subr.bf16.mxu0 %v1517
  %2267 = vmatpush1.bf16.msra.mxu0 %v1516
  %2268 = vmatprep.subr.bf16.mxu0 %v1697
  %2269 = vmatpush2.bf16.msra.mxu0 %v1696
  %2270 = vmatprep.subr.bf16.mxu0 %v1685
  %2271 = vmatpush2.bf16.msra.mxu0 %v1684
  %2272 = vmatprep.subr.bf16.mxu0 %v1673
  %2273 = vmatpush2.bf16.msra.mxu0 %v1672
  %2274 = vmatprep.subr.bf16.mxu0 %v1661
  %2275 = vmatpush2.bf16.msra.mxu0 %v1660
  %2276 = vmatprep.subr.bf16.mxu0 %v1649
  %2277 = vmatpush2.bf16.msra.mxu0 %v1648
  %2278 = vmatprep.subr.bf16.mxu0 %v1637
  %2279 = vmatpush2.bf16.msra.mxu0 %v1636
  %2280 = vmatprep.subr.bf16.mxu0 %v1625
  %2281 = vmatpush2.bf16.msra.mxu0 %v1624
  %2282 = vmatprep.subr.bf16.mxu0 %v1613
  %2283 = vmatpush2.bf16.msra.mxu0 %v1612
  %2284 = vmatprep.mubr.bf16.mxu0 %v294
  %2285 = vmatmul.mubr.bf16.gmra.mxu0 %v293
  %v2286 = vpop.f32.mrf.mxu0
  %v2287 = vadd.f32 %v607, %v2286
  %v2288 = vpop.f32.mrf.mxu0
  %v2289 = vadd.f32 %v611, %v2288
  %v2290 = vpop.f32.mrf.mxu0
  %v2291 = vpop.f32.mrf.mxu0
  %2292 = vdwg.mxu0
  %2293 = vmatprep.subr.bf16.mxu0 %v1793
  %2294 = vmatpush1.bf16.msra.mxu0 %v1792
  %2295 = vmatprep.subr.bf16.mxu0 %v1781
  %2296 = vmatpush1.bf16.msra.mxu0 %v1780
  %2297 = vmatprep.subr.bf16.mxu0 %v1769
  %2298 = vmatpush1.bf16.msra.mxu0 %v1768
  %2299 = vmatprep.subr.bf16.mxu0 %v1757
  %2300 = vmatpush1.bf16.msra.mxu0 %v1756
  %2301 = vmatprep.subr.bf16.mxu0 %v1745
  %2302 = vmatpush1.bf16.msra.mxu0 %v1744
  %2303 = vmatprep.subr.bf16.mxu0 %v1733
  %2304 = vmatpush1.bf16.msra.mxu0 %v1732
  %2305 = vmatprep.subr.bf16.mxu0 %v1721
  %2306 = vmatpush1.bf16.msra.mxu0 %v1720
  %2307 = vmatprep.subr.bf16.mxu0 %v1709
  %2308 = vmatpush1.bf16.msra.mxu0 %v1708
  %2309 = vmatprep.subr.bf16.mxu0 0
  %2310 = vmatpush2.bf16.msra.mxu0 0
  %2311 = vmatprep.subr.bf16.mxu0 0
  %2312 = vmatpush2.bf16.msra.mxu0 0
  %2313 = vmatprep.subr.bf16.mxu0 0
  %2314 = vmatpush2.bf16.msra.mxu0 0
  %2315 = vmatprep.subr.bf16.mxu0 0
  %2316 = vmatpush2.bf16.msra.mxu0 0
  %2317 = vmatprep.subr.bf16.mxu0 0
  %2318 = vmatpush2.bf16.msra.mxu0 0
  %2319 = vmatprep.subr.bf16.mxu0 0
  %2320 = vmatpush2.bf16.msra.mxu0 0
  %2321 = vmatprep.subr.bf16.mxu0 0
  %2322 = vmatpush2.bf16.msra.mxu0 0
  %2323 = vmatprep.subr.bf16.mxu0 0
  %2324 = vmatpush2.bf16.msra.mxu0 0
  %2325 = vmatprep.mubr.bf16.mxu0 0
  %2326 = vmatmul.mubr.bf16.gmra.mxu0 %v295
  %v2327 = vpop.f32.mrf.mxu0
  %v2328 = vadd.f32 %v2287, %v2327
  %v2329 = vpop.f32.mrf.mxu0
  %v2330 = vadd.f32 %v2289, %v2329
  %v2331 = vpop.f32.mrf.mxu0
  %v2332 = vpop.f32.mrf.mxu0
  %2333 = vdwg.mxu0
  %2334 = vmatprep.subr.bf16.mxu0 %v1603
  %2335 = vmatpush1.bf16.msra.mxu0 %v1602
  %2336 = vmatprep.subr.bf16.mxu0 %v1591
  %2337 = vmatpush1.bf16.msra.mxu0 %v1590
  %2338 = vmatprep.subr.bf16.mxu0 %v1579
  %2339 = vmatpush1.bf16.msra.mxu0 %v1578
  %2340 = vmatprep.subr.bf16.mxu0 %v1567
  %2341 = vmatpush1.bf16.msra.mxu0 %v1566
  %2342 = vmatprep.subr.bf16.mxu0 %v1555
  %2343 = vmatpush1.bf16.msra.mxu0 %v1554
  %2344 = vmatprep.subr.bf16.mxu0 %v1543
  %2345 = vmatpush1.bf16.msra.mxu0 %v1542
  %2346 = vmatprep.subr.bf16.mxu0 %v1531
  %2347 = vmatpush1.bf16.msra.mxu0 %v1530
  %2348 = vmatprep.subr.bf16.mxu0 %v1519
  %2349 = vmatpush1.bf16.msra.mxu0 %v1518
  %2350 = vmatprep.subr.bf16.mxu0 %v1699
  %2351 = vmatpush2.bf16.msra.mxu0 %v1698
  %2352 = vmatprep.subr.bf16.mxu0 %v1687
  %2353 = vmatpush2.bf16.msra.mxu0 %v1686
  %2354 = vmatprep.subr.bf16.mxu0 %v1675
  %2355 = vmatpush2.bf16.msra.mxu0 %v1674
  %2356 = vmatprep.subr.bf16.mxu0 %v1663
  %2357 = vmatpush2.bf16.msra.mxu0 %v1662
  %2358 = vmatprep.subr.bf16.mxu0 %v1651
  %2359 = vmatpush2.bf16.msra.mxu0 %v1650
  %2360 = vmatprep.subr.bf16.mxu0 %v1639
  %2361 = vmatpush2.bf16.msra.mxu0 %v1638
  %2362 = vmatprep.subr.bf16.mxu0 %v1627
  %2363 = vmatpush2.bf16.msra.mxu0 %v1626
  %2364 = vmatprep.subr.bf16.mxu0 %v1615
  %2365 = vmatpush2.bf16.msra.mxu0 %v1614
  %2366 = vmatprep.mubr.bf16.mxu0 %v294
  %2367 = vmatmul.mubr.bf16.gmra.mxu0 %v293
  %v2368 = vpop.f32.mrf.mxu0
  %v2369 = vadd.f32 %v615, %v2368
  %v2370 = vpop.f32.mrf.mxu0
  %v2371 = vadd.f32 %v619, %v2370
  %v2372 = vpop.f32.mrf.mxu0
  %v2373 = vpop.f32.mrf.mxu0
  %2374 = vdwg.mxu0
  %2375 = vmatprep.subr.bf16.mxu0 %v1795
  %2376 = vmatpush1.bf16.msra.mxu0 %v1794
  %2377 = vmatprep.subr.bf16.mxu0 %v1783
  %2378 = vmatpush1.bf16.msra.mxu0 %v1782
  %2379 = vmatprep.subr.bf16.mxu0 %v1771
  %2380 = vmatpush1.bf16.msra.mxu0 %v1770
  %2381 = vmatprep.subr.bf16.mxu0 %v1759
  %2382 = vmatpush1.bf16.msra.mxu0 %v1758
  %2383 = vmatprep.subr.bf16.mxu0 %v1747
  %2384 = vmatpush1.bf16.msra.mxu0 %v1746
  %2385 = vmatprep.subr.bf16.mxu0 %v1735
  %2386 = vmatpush1.bf16.msra.mxu0 %v1734
  %2387 = vmatprep.subr.bf16.mxu0 %v1723
  %2388 = vmatpush1.bf16.msra.mxu0 %v1722
  %2389 = vmatprep.subr.bf16.mxu0 %v1711
  %2390 = vmatpush1.bf16.msra.mxu0 %v1710
  %2391 = vmatprep.subr.bf16.mxu0 0
  %2392 = vmatpush2.bf16.msra.mxu0 0
  %2393 = vmatprep.subr.bf16.mxu0 0
  %2394 = vmatpush2.bf16.msra.mxu0 0
  %2395 = vmatprep.subr.bf16.mxu0 0
  %2396 = vmatpush2.bf16.msra.mxu0 0
  %2397 = vmatprep.subr.bf16.mxu0 0
  %2398 = vmatpush2.bf16.msra.mxu0 0
  %2399 = vmatprep.subr.bf16.mxu0 0
  %2400 = vmatpush2.bf16.msra.mxu0 0
  %2401 = vmatprep.subr.bf16.mxu0 0
  %2402 = vmatpush2.bf16.msra.mxu0 0
  %2403 = vmatprep.subr.bf16.mxu0 0
  %2404 = vmatpush2.bf16.msra.mxu0 0
  %2405 = vmatprep.subr.bf16.mxu0 0
  %2406 = vmatpush2.bf16.msra.mxu0 0
  %2407 = vmatprep.mubr.bf16.mxu0 0
  %2408 = vmatmul.mubr.bf16.gmra.mxu0 %v295
  %v2409 = vpop.f32.mrf.mxu0
  %v2410 = vadd.f32 %v2369, %v2409
  %v2411 = vpop.f32.mrf.mxu0
  %v2412 = vadd.f32 %v2371, %v2411
  %v2413 = vpop.f32.mrf.mxu0
  %v2414 = vpop.f32.mrf.mxu0
  %2415 = vdwg.mxu0
  %2416 = vmatprep.subr.bf16.mxu0 %v1605
  %2417 = vmatpush1.bf16.msra.mxu0 %v1604
  %2418 = vmatprep.subr.bf16.mxu0 %v1593
  %2419 = vmatpush1.bf16.msra.mxu0 %v1592
  %2420 = vmatprep.subr.bf16.mxu0 %v1581
  %2421 = vmatpush1.bf16.msra.mxu0 %v1580
  %2422 = vmatprep.subr.bf16.mxu0 %v1569
  %2423 = vmatpush1.bf16.msra.mxu0 %v1568
  %2424 = vmatprep.subr.bf16.mxu0 %v1557
  %2425 = vmatpush1.bf16.msra.mxu0 %v1556
  %2426 = vmatprep.subr.bf16.mxu0 %v1545
  %2427 = vmatpush1.bf16.msra.mxu0 %v1544
  %2428 = vmatprep.subr.bf16.mxu0 %v1533
  %2429 = vmatpush1.bf16.msra.mxu0 %v1532
  %2430 = vmatprep.subr.bf16.mxu0 %v1521
  %2431 = vmatpush1.bf16.msra.mxu0 %v1520
  %2432 = vmatprep.subr.bf16.mxu0 %v1701
  %2433 = vmatpush2.bf16.msra.mxu0 %v1700
  %2434 = vmatprep.subr.bf16.mxu0 %v1689
  %2435 = vmatpush2.bf16.msra.mxu0 %v1688
  %2436 = vmatprep.subr.bf16.mxu0 %v1677
  %2437 = vmatpush2.bf16.msra.mxu0 %v1676
  %2438 = vmatprep.subr.bf16.mxu0 %v1665
  %2439 = vmatpush2.bf16.msra.mxu0 %v1664
  %2440 = vmatprep.subr.bf16.mxu0 %v1653
  %2441 = vmatpush2.bf16.msra.mxu0 %v1652
  %2442 = vmatprep.subr.bf16.mxu0 %v1641
  %2443 = vmatpush2.bf16.msra.mxu0 %v1640
  %2444 = vmatprep.subr.bf16.mxu0 %v1629
  %2445 = vmatpush2.bf16.msra.mxu0 %v1628
  %2446 = vmatprep.subr.bf16.mxu0 %v1617
  %2447 = vmatpush2.bf16.msra.mxu0 %v1616
  %2448 = vmatprep.mubr.bf16.mxu0 %v294
  %2449 = vmatmul.mubr.bf16.gmra.mxu0 %v293
  %v2450 = vpop.f32.mrf.mxu0
  %v2451 = vadd.f32 %v623, %v2450
  %v2452 = vpop.f32.mrf.mxu0
  %v2453 = vadd.f32 %v627, %v2452
  %v2454 = vpop.f32.mrf.mxu0
  %v2455 = vpop.f32.mrf.mxu0
  %2456 = vdwg.mxu0
  %2457 = vmatprep.subr.bf16.mxu0 %v1797
  %2458 = vmatpush1.bf16.msra.mxu0 %v1796
  %2459 = vmatprep.subr.bf16.mxu0 %v1785
  %2460 = vmatpush1.bf16.msra.mxu0 %v1784
  %2461 = vmatprep.subr.bf16.mxu0 %v1773
  %2462 = vmatpush1.bf16.msra.mxu0 %v1772
  %2463 = vmatprep.subr.bf16.mxu0 %v1761
  %2464 = vmatpush1.bf16.msra.mxu0 %v1760
  %2465 = vmatprep.subr.bf16.mxu0 %v1749
  %2466 = vmatpush1.bf16.msra.mxu0 %v1748
  %2467 = vmatprep.subr.bf16.mxu0 %v1737
  %2468 = vmatpush1.bf16.msra.mxu0 %v1736
  %2469 = vmatprep.subr.bf16.mxu0 %v1725
  %2470 = vmatpush1.bf16.msra.mxu0 %v1724
  %2471 = vmatprep.subr.bf16.mxu0 %v1713
  %2472 = vmatpush1.bf16.msra.mxu0 %v1712
  %2473 = vmatprep.subr.bf16.mxu0 0
  %2474 = vmatpush2.bf16.msra.mxu0 0
  %2475 = vmatprep.subr.bf16.mxu0 0
  %2476 = vmatpush2.bf16.msra.mxu0 0
  %2477 = vmatprep.subr.bf16.mxu0 0
  %2478 = vmatpush2.bf16.msra.mxu0 0
  %2479 = vmatprep.subr.bf16.mxu0 0
  %2480 = vmatpush2.bf16.msra.mxu0 0
  %2481 = vmatprep.subr.bf16.mxu0 0
  %2482 = vmatpush2.bf16.msra.mxu0 0
  %2483 = vmatprep.subr.bf16.mxu0 0
  %2484 = vmatpush2.bf16.msra.mxu0 0
  %2485 = vmatprep.subr.bf16.mxu0 0
  %2486 = vmatpush2.bf16.msra.mxu0 0
  %2487 = vmatprep.subr.bf16.mxu0 0
  %2488 = vmatpush2.bf16.msra.mxu0 0
  %2489 = vmatprep.mubr.bf16.mxu0 0
  %2490 = vmatmul.mubr.bf16.gmra.mxu0 %v295
  %v2491 = vpop.f32.mrf.mxu0
  %v2492 = vadd.f32 %v2451, %v2491
  %v2493 = vpop.f32.mrf.mxu0
  %v2494 = vadd.f32 %v2453, %v2493
  %v2495 = vpop.f32.mrf.mxu0
  %v2496 = vpop.f32.mrf.mxu0
  %2497 = vdwg.mxu0
  %2498 = vmatprep.subr.bf16.mxu0 %v1607
  %2499 = vmatpush1.bf16.msra.mxu0 %v1606
  %2500 = vmatprep.subr.bf16.mxu0 %v1595
  %2501 = vmatpush1.bf16.msra.mxu0 %v1594
  %2502 = vmatprep.subr.bf16.mxu0 %v1583
  %2503 = vmatpush1.bf16.msra.mxu0 %v1582
  %2504 = vmatprep.subr.bf16.mxu0 %v1571
  %2505 = vmatpush1.bf16.msra.mxu0 %v1570
  %2506 = vmatprep.subr.bf16.mxu0 %v1559
  %2507 = vmatpush1.bf16.msra.mxu0 %v1558
  %2508 = vmatprep.subr.bf16.mxu0 %v1547
  %2509 = vmatpush1.bf16.msra.mxu0 %v1546
  %2510 = vmatprep.subr.bf16.mxu0 %v1535
  %2511 = vmatpush1.bf16.msra.mxu0 %v1534
  %2512 = vmatprep.subr.bf16.mxu0 %v1523
  %2513 = vmatpush1.bf16.msra.mxu0 %v1522
  %2514 = vmatprep.subr.bf16.mxu0 %v1703
  %2515 = vmatpush2.bf16.msra.mxu0 %v1702
  %2516 = vmatprep.subr.bf16.mxu0 %v1691
  %2517 = vmatpush2.bf16.msra.mxu0 %v1690
  %2518 = vmatprep.subr.bf16.mxu0 %v1679
  %2519 = vmatpush2.bf16.msra.mxu0 %v1678
  %2520 = vmatprep.subr.bf16.mxu0 %v1667
  %2521 = vmatpush2.bf16.msra.mxu0 %v1666
  %2522 = vmatprep.subr.bf16.mxu0 %v1655
  %2523 = vmatpush2.bf16.msra.mxu0 %v1654
  %2524 = vmatprep.subr.bf16.mxu0 %v1643
  %2525 = vmatpush2.bf16.msra.mxu0 %v1642
  %2526 = vmatprep.subr.bf16.mxu0 %v1631
  %2527 = vmatpush2.bf16.msra.mxu0 %v1630
  %2528 = vmatprep.subr.bf16.mxu0 %v1619
  %2529 = vmatpush2.bf16.msra.mxu0 %v1618
  %2530 = vmatprep.mubr.bf16.mxu0 %v294
  %2531 = vmatmul.mubr.bf16.gmra.mxu0 %v293
  %v2532 = vpop.f32.mrf.mxu0
  %v2533 = vadd.f32 %v631, %v2532
  %v2534 = vpop.f32.mrf.mxu0
  %v2535 = vadd.f32 %v635, %v2534
  %v2536 = vpop.f32.mrf.mxu0
  %v2537 = vpop.f32.mrf.mxu0
  %2538 = vdwg.mxu0
  %2539 = vmatprep.subr.bf16.mxu0 %v1799
  %2540 = vmatpush1.bf16.msra.mxu0 %v1798
  %2541 = vmatprep.subr.bf16.mxu0 %v1787
  %2542 = vmatpush1.bf16.msra.mxu0 %v1786
  %2543 = vmatprep.subr.bf16.mxu0 %v1775
  %2544 = vmatpush1.bf16.msra.mxu0 %v1774
  %2545 = vmatprep.subr.bf16.mxu0 %v1763
  %2546 = vmatpush1.bf16.msra.mxu0 %v1762
  %2547 = vmatprep.subr.bf16.mxu0 %v1751
  %2548 = vmatpush1.bf16.msra.mxu0 %v1750
  %2549 = vmatprep.subr.bf16.mxu0 %v1739
  %2550 = vmatpush1.bf16.msra.mxu0 %v1738
  %2551 = vmatprep.subr.bf16.mxu0 %v1727
  %2552 = vmatpush1.bf16.msra.mxu0 %v1726
  %2553 = vmatprep.subr.bf16.mxu0 %v1715
  %2554 = vmatpush1.bf16.msra.mxu0 %v1714
  %2555 = vmatprep.subr.bf16.mxu0 0
  %2556 = vmatpush2.bf16.msra.mxu0 0
  %2557 = vmatprep.subr.bf16.mxu0 0
  %2558 = vmatpush2.bf16.msra.mxu0 0
  %2559 = vmatprep.subr.bf16.mxu0 0
  %2560 = vmatpush2.bf16.msra.mxu0 0
  %2561 = vmatprep.subr.bf16.mxu0 0
  %2562 = vmatpush2.bf16.msra.mxu0 0
  %2563 = vmatprep.subr.bf16.mxu0 0
  %2564 = vmatpush2.bf16.msra.mxu0 0
  %2565 = vmatprep.subr.bf16.mxu0 0
  %2566 = vmatpush2.bf16.msra.mxu0 0
  %2567 = vmatprep.subr.bf16.mxu0 0
  %2568 = vmatpush2.bf16.msra.mxu0 0
  %2569 = vmatprep.subr.bf16.mxu0 0
  %2570 = vmatpush2.bf16.msra.mxu0 0
  %2571 = vmatprep.mubr.bf16.mxu0 0
  %2572 = vmatmul.mubr.bf16.gmra.mxu0 %v295
  %v2573 = vpop.f32.mrf.mxu0
  %v2574 = vadd.f32 %v2533, %v2573
  %v2575 = vpop.f32.mrf.mxu0
  %v2576 = vadd.f32 %v2535, %v2575
  %v2577 = vpop.f32.mrf.mxu0
  %v2578 = vpop.f32.mrf.mxu0
  %2579 = vdwg.mxu0
  %2580 = vst [vmem:[%s5] sm:$0xff] %v2164
  %2581 = vst [vmem:[%s5 + $0x8] sm:$0xff] %v2166
  %2582 = vst [vmem:[%s5 + $0x10] sm:$0xff] %v2246
  %2583 = vst [vmem:[%s5 + $0x18] sm:$0xff] %v2248
  %2584 = vst [vmem:[%s5 + $0x20] sm:$0xff] %v2328
  %2585 = vst [vmem:[%s5 + $0x28] sm:$0xff] %v2330
  %2586 = vst [vmem:[%s5 + $0x30] sm:$0xff] %v2410
  %2587 = vst [vmem:[%s5 + $0x38] sm:$0xff] %v2412
  %2588 = vst [vmem:[%s5 + $0x40] sm:$0xff] %v2492
  %2589 = vst [vmem:[%s5 + $0x48] sm:$0xff] %v2494
  %2590 = vst [vmem:[%s5 + $0x50] sm:$0xff] %v2574
  %2591 = vst [vmem:[%s5 + $0x58] sm:$0xff] %v2576
  // Predicated region
  $region22: #{model_forward.2} parent=0 // pred_check
    _
  $region23: #{model_forward.2} parent=0 // pred_check_branch
    %2593 = sbr.rel (0) target = $region25
  $region24: #{model_forward.2} parent=0 // pred_region
    _
  $region25: #{model_forward.2} parent=0 // pred_fallthru
    _
  // Predicated region
  $region26: #{model_forward.2} parent=0 // pred_check
    _
  $region27: #{model_forward.2} parent=0 // pred_check_branch
    %2595 = sbr.rel (0) target = $region29
  $region28: #{model_forward.2} parent=0 // pred_region
    _
  $region29: #{model_forward.2} parent=0 // pred_fallthru
    _

// kernel: model_forward.3
$region0: #{model_forward.3}
  #allocation0 [shape = 'u32[]', space=smem, size = 0x4, offset = 0x4, fixed_abs, tag = 'smem constant byte address 0x4 - core index']
  #allocation1 [shape = 'u32[144,128]{1,0:T(1,128)}', space=vmem, size = 0x12000, scoped, tag = 'internal scratch']
  %s0 = inlined_call_operand.vmem [shape: f32[2,6144], index: 0, kind: input, shape index: {}]
  %s1 = inlined_call_operand.vmem [shape: bf16[384,1536], index: 1, kind: input, shape index: {}]
  %s2 = inlined_call_operand.vmem [shape: bf16[384,128], index: 2, kind: input, shape index: {}]
  %s3 = inlined_call_operand.vmem [shape: f32[1,128], index: 3, kind: input, shape index: {}]
  %s4 = inlined_call_operand.hbm [shape: f32[2,128], index: 4, kind: output, shape index: {}]
  %s5 = sld [smem:[#allocation0]]
  $region26: #{model_forward.3} parent=0
    _
  %s7 = ssub.s32 1, %s5
  %s8 = scalar_select 0, %s7, %s5
  $region1: #{model_forward.3} parent=0
    #allocation2 [shape = 'u8[1024]{0}', space=vmem, size = 0x400, scoped, tag = 'output window, operand 0, single buffered']
    #allocation3 [shape = 's32[1]{0}', space=sflag, size = 0x4, scoped, tag = 'scoped memory for model_forward.3']
    %9 = vsyncpa [#allocation3], 0
    // Predicated region
    $region2: #{model_forward.3} parent=1 // pred_check
      _
    $region3: #{model_forward.3} parent=1 // pred_check_branch
      %11 = sbr.rel (0) target = $region5
    $region4: #{model_forward.3} parent=1 // pred_region
      _
    $region5: #{model_forward.3} parent=1 // pred_fallthru
      _
    // Predicated region
    $region6: #{model_forward.3} parent=1 // pred_check
      _
    $region7: #{model_forward.3} parent=1 // pred_check_branch
      %13 = sbr.rel (0) target = $region9
    $region8: #{model_forward.3} parent=1 // pred_region
      _
    $region9: #{model_forward.3} parent=1 // pred_fallthru
      _
    // Predicated region
    $region10: #{model_forward.3} parent=1 // pred_check
      _
    $region11: #{model_forward.3} parent=1 // pred_check_branch
      %15 = sbr.rel (0) target = $region13
    $region12: #{model_forward.3} parent=1 // pred_region
      _
    $region13: #{model_forward.3} parent=1 // pred_fallthru
      _
    // Predicated region
    $region14: #{model_forward.3} parent=1 // pred_check
      _
    $region15: #{model_forward.3} parent=1 // pred_check_branch
      %17 = sbr.rel (0) target = $region17
    $region16: #{model_forward.3} parent=1 // pred_region
      _
    $region17: #{model_forward.3} parent=1 // pred_fallthru
      _
    %v19 = vld [vmem:[%s1] sm:$0xff]
    %v20 = vld [vmem:[%s1 + $0x8] sm:$0xff]
    %v21 = vld [vmem:[%s1 + $0x10] sm:$0xff]
    %v22 = vld [vmem:[%s1 + $0x18] sm:$0xff]
    %v23 = vld [vmem:[%s1 + $0x20] sm:$0xff]
    %v24 = vld [vmem:[%s1 + $0x28] sm:$0xff]
    %v25 = vld [vmem:[%s1 + $0x30] sm:$0xff]
    %v26 = vld [vmem:[%s1 + $0x38] sm:$0xff]
    %v27 = vld [vmem:[%s1 + $0x40] sm:$0xff]
    %v28 = vld [vmem:[%s1 + $0x48] sm:$0xff]
    %v29 = vld [vmem:[%s1 + $0x50] sm:$0xff]
    %v30 = vld [vmem:[%s1 + $0x58] sm:$0xff]
    %v31 = vld [vmem:[%s1 + $0x60] sm:$0xff]
    %v32 = vld [vmem:[%s1 + $0x68] sm:$0xff]
    %v33 = vld [vmem:[%s1 + $0x70] sm:$0xff]
    %v34 = vld [vmem:[%s1 + $0x78] sm:$0xff]
    %v35 = vld [vmem:[%s1 + $0x80] sm:$0xff]
    %v36 = vld [vmem:[%s1 + $0x88] sm:$0xff]
    %v37 = vld [vmem:[%s1 + $0x90] sm:$0xff]
    %v38 = vld [vmem:[%s1 + $0x98] sm:$0xff]
    %v39 = vld [vmem:[%s1 + $0xa0] sm:$0xff]
    %v40 = vld [vmem:[%s1 + $0xa8] sm:$0xff]
    %v41 = vld [vmem:[%s1 + $0xb0] sm:$0xff]
    %v42 = vld [vmem:[%s1 + $0xb8] sm:$0xff]
    %v43 = vld [vmem:[%s1 + $0xc0] sm:$0xff]
    %v44 = vld [vmem:[%s1 + $0xc8] sm:$0xff]
    %v45 = vld [vmem:[%s1 + $0xd0] sm:$0xff]
    %v46 = vld [vmem:[%s1 + $0xd8] sm:$0xff]
    %v47 = vld [vmem:[%s1 + $0xe0] sm:$0xff]
    %v48 = vld [vmem:[%s1 + $0xe8] sm:$0xff]
    %v49 = vld [vmem:[%s1 + $0xf0] sm:$0xff]
    %v50 = vld [vmem:[%s1 + $0xf8] sm:$0xff]
    %v51 = vld [vmem:[%s1 + $0x100] sm:$0xff]
    %v52 = vld [vmem:[%s1 + $0x108] sm:$0xff]
    %v53 = vld [vmem:[%s1 + $0x110] sm:$0xff]
    %v54 = vld [vmem:[%s1 + $0x118] sm:$0xff]
    %v55 = vld [vmem:[%s1 + $0x120] sm:$0xff]
    %v56 = vld [vmem:[%s1 + $0x128] sm:$0xff]
    %v57 = vld [vmem:[%s1 + $0x130] sm:$0xff]
    %v58 = vld [vmem:[%s1 + $0x138] sm:$0xff]
    %v59 = vld [vmem:[%s1 + $0x140] sm:$0xff]
    %v60 = vld [vmem:[%s1 + $0x148] sm:$0xff]
    %v61 = vld [vmem:[%s1 + $0x150] sm:$0xff]
    %v62 = vld [vmem:[%s1 + $0x158] sm:$0xff]
    %v63 = vld [vmem:[%s1 + $0x160] sm:$0xff]
    %v64 = vld [vmem:[%s1 + $0x168] sm:$0xff]
    %v65 = vld [vmem:[%s1 + $0x170] sm:$0xff]
    %v66 = vld [vmem:[%s1 + $0x178] sm:$0xff]
    %v67 = vld [vmem:[%s1 + $0x180] sm:$0xff]
    %v68 = vld [vmem:[%s1 + $0x188] sm:$0xff]
    %v69 = vld [vmem:[%s1 + $0x190] sm:$0xff]
    %v70 = vld [vmem:[%s1 + $0x198] sm:$0xff]
    %v71 = vld [vmem:[%s1 + $0x1a0] sm:$0xff]
    %v72 = vld [vmem:[%s1 + $0x1a8] sm:$0xff]
    %v73 = vld [vmem:[%s1 + $0x1b0] sm:$0xff]
    %v74 = vld [vmem:[%s1 + $0x1b8] sm:$0xff]
    %v75 = vld [vmem:[%s1 + $0x1c0] sm:$0xff]
    %v76 = vld [vmem:[%s1 + $0x1c8] sm:$0xff]
    %v77 = vld [vmem:[%s1 + $0x1d0] sm:$0xff]
    %v78 = vld [vmem:[%s1 + $0x1d8] sm:$0xff]
    %v79 = vld [vmem:[%s1 + $0x1e0] sm:$0xff]
    %v80 = vld [vmem:[%s1 + $0x1e8] sm:$0xff]
    %v81 = vld [vmem:[%s1 + $0x1f0] sm:$0xff]
    %v82 = vld [vmem:[%s1 + $0x1f8] sm:$0xff]
    %v83 = vld [vmem:[%s1 + $0x200] sm:$0xff]
    %v84 = vld [vmem:[%s1 + $0x208] sm:$0xff]
    %v85 = vld [vmem:[%s1 + $0x210] sm:$0xff]
    %v86 = vld [vmem:[%s1 + $0x218] sm:$0xff]
    %v87 = vld [vmem:[%s1 + $0x220] sm:$0xff]
    %v88 = vld [vmem:[%s1 + $0x228] sm:$0xff]
    %v89 = vld [vmem:[%s1 + $0x230] sm:$0xff]
    %v90 = vld [vmem:[%s1 + $0x238] sm:$0xff]
    %v91 = vld [vmem:[%s1 + $0x240] sm:$0xff]
    %v92 = vld [vmem:[%s1 + $0x248] sm:$0xff]
    %v93 = vld [vmem:[%s1 + $0x250] sm:$0xff]
    %v94 = vld [vmem:[%s1 + $0x258] sm:$0xff]
    %v95 = vld [vmem:[%s1 + $0x260] sm:$0xff]
    %v96 = vld [vmem:[%s1 + $0x268] sm:$0xff]
    %v97 = vld [vmem:[%s1 + $0x270] sm:$0xff]
    %v98 = vld [vmem:[%s1 + $0x278] sm:$0xff]
    %v99 = vld [vmem:[%s1 + $0x280] sm:$0xff]
    %v100 = vld [vmem:[%s1 + $0x288] sm:$0xff]
    %v101 = vld [vmem:[%s1 + $0x290] sm:$0xff]
    %v102 = vld [vmem:[%s1 + $0x298] sm:$0xff]
    %v103 = vld [vmem:[%s1 + $0x2a0] sm:$0xff]
    %v104 = vld [vmem:[%s1 + $0x2a8] sm:$0xff]
    %v105 = vld [vmem:[%s1 + $0x2b0] sm:$0xff]
    %v106 = vld [vmem:[%s1 + $0x2b8] sm:$0xff]
    %v107 = vld [vmem:[%s1 + $0x2c0] sm:$0xff]
    %v108 = vld [vmem:[%s1 + $0x2c8] sm:$0xff]
    %v109 = vld [vmem:[%s1 + $0x2d0] sm:$0xff]
    %v110 = vld [vmem:[%s1 + $0x2d8] sm:$0xff]
    %v111 = vld [vmem:[%s1 + $0x2e0] sm:$0xff]
    %v112 = vld [vmem:[%s1 + $0x2e8] sm:$0xff]
    %v113 = vld [vmem:[%s1 + $0x2f0] sm:$0xff]
    %v114 = vld [vmem:[%s1 + $0x2f8] sm:$0xff]
    %v115 = vld [vmem:[%s1 + $0x300] sm:$0xff]
    %v116 = vld [vmem:[%s1 + $0x308] sm:$0xff]
    %v117 = vld [vmem:[%s1 + $0x310] sm:$0xff]
    %v118 = vld [vmem:[%s1 + $0x318] sm:$0xff]
    %v119 = vld [vmem:[%s1 + $0x320] sm:$0xff]
    %v120 = vld [vmem:[%s1 + $0x328] sm:$0xff]
    %v121 = vld [vmem:[%s1 + $0x330] sm:$0xff]
    %v122 = vld [vmem:[%s1 + $0x338] sm:$0xff]
    %v123 = vld [vmem:[%s1 + $0x340] sm:$0xff]
    %v124 = vld [vmem:[%s1 + $0x348] sm:$0xff]
    %v125 = vld [vmem:[%s1 + $0x350] sm:$0xff]
    %v126 = vld [vmem:[%s1 + $0x358] sm:$0xff]
    %v127 = vld [vmem:[%s1 + $0x360] sm:$0xff]
    %v128 = vld [vmem:[%s1 + $0x368] sm:$0xff]
    %v129 = vld [vmem:[%s1 + $0x370] sm:$0xff]
    %v130 = vld [vmem:[%s1 + $0x378] sm:$0xff]
    %v131 = vld [vmem:[%s1 + $0x380] sm:$0xff]
    %v132 = vld [vmem:[%s1 + $0x388] sm:$0xff]
    %v133 = vld [vmem:[%s1 + $0x390] sm:$0xff]
    %v134 = vld [vmem:[%s1 + $0x398] sm:$0xff]
    %v135 = vld [vmem:[%s1 + $0x3a0] sm:$0xff]
    %v136 = vld [vmem:[%s1 + $0x3a8] sm:$0xff]
    %v137 = vld [vmem:[%s1 + $0x3b0] sm:$0xff]
    %v138 = vld [vmem:[%s1 + $0x3b8] sm:$0xff]
    %v139 = vld [vmem:[%s1 + $0x3c0] sm:$0xff]
    %v140 = vld [vmem:[%s1 + $0x3c8] sm:$0xff]
    %v141 = vld [vmem:[%s1 + $0x3d0] sm:$0xff]
    %v142 = vld [vmem:[%s1 + $0x3d8] sm:$0xff]
    %v143 = vld [vmem:[%s1 + $0x3e0] sm:$0xff]
    %v144 = vld [vmem:[%s1 + $0x3e8] sm:$0xff]
    %v145 = vld [vmem:[%s1 + $0x3f0] sm:$0xff]
    %v146 = vld [vmem:[%s1 + $0x3f8] sm:$0xff]
    %v147 = vld [vmem:[%s1 + $0x400] sm:$0xff]
    %v148 = vld [vmem:[%s1 + $0x408] sm:$0xff]
    %v149 = vld [vmem:[%s1 + $0x410] sm:$0xff]
    %v150 = vld [vmem:[%s1 + $0x418] sm:$0xff]
    %v151 = vld [vmem:[%s1 + $0x420] sm:$0xff]
    %v152 = vld [vmem:[%s1 + $0x428] sm:$0xff]
    %v153 = vld [vmem:[%s1 + $0x430] sm:$0xff]
    %v154 = vld [vmem:[%s1 + $0x438] sm:$0xff]
    %v155 = vld [vmem:[%s1 + $0x440] sm:$0xff]
    %v156 = vld [vmem:[%s1 + $0x448] sm:$0xff]
    %v157 = vld [vmem:[%s1 + $0x450] sm:$0xff]
    %v158 = vld [vmem:[%s1 + $0x458] sm:$0xff]
    %v159 = vld [vmem:[%s1 + $0x460] sm:$0xff]
    %v160 = vld [vmem:[%s1 + $0x468] sm:$0xff]
    %v161 = vld [vmem:[%s1 + $0x470] sm:$0xff]
    %v162 = vld [vmem:[%s1 + $0x478] sm:$0xff]
    %v163 = vld [vmem:[%s1 + $0x480] sm:$0xff]
    %v164 = vld [vmem:[%s1 + $0x488] sm:$0xff]
    %v165 = vld [vmem:[%s1 + $0x490] sm:$0xff]
    %v166 = vld [vmem:[%s1 + $0x498] sm:$0xff]
    %v167 = vld [vmem:[%s1 + $0x4a0] sm:$0xff]
    %v168 = vld [vmem:[%s1 + $0x4a8] sm:$0xff]
    %v169 = vld [vmem:[%s1 + $0x4b0] sm:$0xff]
    %v170 = vld [vmem:[%s1 + $0x4b8] sm:$0xff]
    %v171 = vld [vmem:[%s1 + $0x4c0] sm:$0xff]
    %v172 = vld [vmem:[%s1 + $0x4c8] sm:$0xff]
    %v173 = vld [vmem:[%s1 + $0x4d0] sm:$0xff]
    %v174 = vld [vmem:[%s1 + $0x4d8] sm:$0xff]
    %v175 = vld [vmem:[%s1 + $0x4e0] sm:$0xff]
    %v176 = vld [vmem:[%s1 + $0x4e8] sm:$0xff]
    %v177 = vld [vmem:[%s1 + $0x4f0] sm:$0xff]
    %v178 = vld [vmem:[%s1 + $0x4f8] sm:$0xff]
    %v179 = vld [vmem:[%s1 + $0x500] sm:$0xff]
    %v180 = vld [vmem:[%s1 + $0x508] sm:$0xff]
    %v181 = vld [vmem:[%s1 + $0x510] sm:$0xff]
    %v182 = vld [vmem:[%s1 + $0x518] sm:$0xff]
    %v183 = vld [vmem:[%s1 + $0x520] sm:$0xff]
    %v184 = vld [vmem:[%s1 + $0x528] sm:$0xff]
    %v185 = vld [vmem:[%s1 + $0x530] sm:$0xff]
    %v186 = vld [vmem:[%s1 + $0x538] sm:$0xff]
    %v187 = vld [vmem:[%s1 + $0x540] sm:$0xff]
    %v188 = vld [vmem:[%s1 + $0x548] sm:$0xff]
    %v189 = vld [vmem:[%s1 + $0x550] sm:$0xff]
    %v190 = vld [vmem:[%s1 + $0x558] sm:$0xff]
    %v191 = vld [vmem:[%s1 + $0x560] sm:$0xff]
    %v192 = vld [vmem:[%s1 + $0x568] sm:$0xff]
    %v193 = vld [vmem:[%s1 + $0x570] sm:$0xff]
    %v194 = vld [vmem:[%s1 + $0x578] sm:$0xff]
    %v195 = vld [vmem:[%s1 + $0x580] sm:$0xff]
    %v196 = vld [vmem:[%s1 + $0x588] sm:$0xff]
    %v197 = vld [vmem:[%s1 + $0x590] sm:$0xff]
    %v198 = vld [vmem:[%s1 + $0x598] sm:$0xff]
    %v199 = vld [vmem:[%s1 + $0x5a0] sm:$0xff]
    %v200 = vld [vmem:[%s1 + $0x5a8] sm:$0xff]
    %v201 = vld [vmem:[%s1 + $0x5b0] sm:$0xff]
    %v202 = vld [vmem:[%s1 + $0x5b8] sm:$0xff]
    %v203 = vld [vmem:[%s1 + $0x5c0] sm:$0xff]
    %v204 = vld [vmem:[%s1 + $0x5c8] sm:$0xff]
    %v205 = vld [vmem:[%s1 + $0x5d0] sm:$0xff]
    %v206 = vld [vmem:[%s1 + $0x5d8] sm:$0xff]
    %v207 = vld [vmem:[%s1 + $0x5e0] sm:$0xff]
    %v208 = vld [vmem:[%s1 + $0x5e8] sm:$0xff]
    %v209 = vld [vmem:[%s1 + $0x5f0] sm:$0xff]
    %v210 = vld [vmem:[%s1 + $0x5f8] sm:$0xff]
    %v211 = vld [vmem:[%s1 + $0x600] sm:$0xff]
    %v212 = vld [vmem:[%s1 + $0x608] sm:$0xff]
    %v213 = vld [vmem:[%s1 + $0x610] sm:$0xff]
    %v214 = vld [vmem:[%s1 + $0x618] sm:$0xff]
    %v215 = vld [vmem:[%s1 + $0x620] sm:$0xff]
    %v216 = vld [vmem:[%s1 + $0x628] sm:$0xff]
    %v217 = vld [vmem:[%s1 + $0x630] sm:$0xff]
    %v218 = vld [vmem:[%s1 + $0x638] sm:$0xff]
    %v219 = vld [vmem:[%s1 + $0x640] sm:$0xff]
    %v220 = vld [vmem:[%s1 + $0x648] sm:$0xff]
    %v221 = vld [vmem:[%s1 + $0x650] sm:$0xff]
    %v222 = vld [vmem:[%s1 + $0x658] sm:$0xff]
    %v223 = vld [vmem:[%s1 + $0x660] sm:$0xff]
    %v224 = vld [vmem:[%s1 + $0x668] sm:$0xff]
    %v225 = vld [vmem:[%s1 + $0x670] sm:$0xff]
    %v226 = vld [vmem:[%s1 + $0x678] sm:$0xff]
    %v227 = vld [vmem:[%s1 + $0x680] sm:$0xff]
    %v228 = vld [vmem:[%s1 + $0x688] sm:$0xff]
    %v229 = vld [vmem:[%s1 + $0x690] sm:$0xff]
    %v230 = vld [vmem:[%s1 + $0x698] sm:$0xff]
    %v231 = vld [vmem:[%s1 + $0x6a0] sm:$0xff]
    %v232 = vld [vmem:[%s1 + $0x6a8] sm:$0xff]
    %v233 = vld [vmem:[%s1 + $0x6b0] sm:$0xff]
    %v234 = vld [vmem:[%s1 + $0x6b8] sm:$0xff]
    %v235 = vld [vmem:[%s1 + $0x6c0] sm:$0xff]
    %v236 = vld [vmem:[%s1 + $0x6c8] sm:$0xff]
    %v237 = vld [vmem:[%s1 + $0x6d0] sm:$0xff]
    %v238 = vld [vmem:[%s1 + $0x6d8] sm:$0xff]
    %v239 = vld [vmem:[%s1 + $0x6e0] sm:$0xff]
    %v240 = vld [vmem:[%s1 + $0x6e8] sm:$0xff]
    %v241 = vld [vmem:[%s1 + $0x6f0] sm:$0xff]
    %v242 = vld [vmem:[%s1 + $0x6f8] sm:$0xff]
    %v243 = vld [vmem:[%s1 + $0x700] sm:$0xff]
    %v244 = vld [vmem:[%s1 + $0x708] sm:$0xff]
    %v245 = vld [vmem:[%s1 + $0x710] sm:$0xff]
    %v246 = vld [vmem:[%s1 + $0x718] sm:$0xff]
    %v247 = vld [vmem:[%s1 + $0x720] sm:$0xff]
    %v248 = vld [vmem:[%s1 + $0x728] sm:$0xff]
    %v249 = vld [vmem:[%s1 + $0x730] sm:$0xff]
    %v250 = vld [vmem:[%s1 + $0x738] sm:$0xff]
    %v251 = vld [vmem:[%s1 + $0x740] sm:$0xff]
    %v252 = vld [vmem:[%s1 + $0x748] sm:$0xff]
    %v253 = vld [vmem:[%s1 + $0x750] sm:$0xff]
    %v254 = vld [vmem:[%s1 + $0x758] sm:$0xff]
    %v255 = vld [vmem:[%s1 + $0x760] sm:$0xff]
    %v256 = vld [vmem:[%s1 + $0x768] sm:$0xff]
    %v257 = vld [vmem:[%s1 + $0x770] sm:$0xff]
    %v258 = vld [vmem:[%s1 + $0x778] sm:$0xff]
    %v259 = vld [vmem:[%s1 + $0x780] sm:$0xff]
    %v260 = vld [vmem:[%s1 + $0x788] sm:$0xff]
    %v261 = vld [vmem:[%s1 + $0x790] sm:$0xff]
    %v262 = vld [vmem:[%s1 + $0x798] sm:$0xff]
    %v263 = vld [vmem:[%s1 + $0x7a0] sm:$0xff]
    %v264 = vld [vmem:[%s1 + $0x7a8] sm:$0xff]
    %v265 = vld [vmem:[%s1 + $0x7b0] sm:$0xff]
    %v266 = vld [vmem:[%s1 + $0x7b8] sm:$0xff]
    %v267 = vld [vmem:[%s1 + $0x7c0] sm:$0xff]
    %v268 = vld [vmem:[%s1 + $0x7c8] sm:$0xff]
    %v269 = vld [vmem:[%s1 + $0x7d0] sm:$0xff]
    %v270 = vld [vmem:[%s1 + $0x7d8] sm:$0xff]
    %v271 = vld [vmem:[%s1 + $0x7e0] sm:$0xff]
    %v272 = vld [vmem:[%s1 + $0x7e8] sm:$0xff]
    %v273 = vld [vmem:[%s1 + $0x7f0] sm:$0xff]
    %v274 = vld [vmem:[%s1 + $0x7f8] sm:$0xff]
    %v275 = vld [vmem:[%s1 + $0x800] sm:$0xff]
    %v276 = vld [vmem:[%s1 + $0x808] sm:$0xff]
    %v277 = vld [vmem:[%s1 + $0x810] sm:$0xff]
    %v278 = vld [vmem:[%s1 + $0x818] sm:$0xff]
    %v279 = vld [vmem:[%s1 + $0x820] sm:$0xff]
    %v280 = vld [vmem:[%s1 + $0x828] sm:$0xff]
    %v281 = vld [vmem:[%s1 + $0x830] sm:$0xff]
    %v282 = vld [vmem:[%s1 + $0x838] sm:$0xff]
    %v283 = vld [vmem:[%s1 + $0x840] sm:$0xff]
    %v284 = vld [vmem:[%s1 + $0x848] sm:$0xff]
    %v285 = vld [vmem:[%s1 + $0x850] sm:$0xff]
    %v286 = vld [vmem:[%s1 + $0x858] sm:$0xff]
    %v287 = vld [vmem:[%s1 + $0x860] sm:$0xff]
    %v288 = vld [vmem:[%s1 + $0x868] sm:$0xff]
    %v289 = vld [vmem:[%s1 + $0x870] sm:$0xff]
    %v290 = vld [vmem:[%s1 + $0x878] sm:$0xff]
    %v291 = vld [vmem:[%s1 + $0x880] sm:$0xff]
    %v292 = vld [vmem:[%s1 + $0x888] sm:$0xff]
    %v293 = vld [vmem:[%s1 + $0x890] sm:$0xff]
    %v294 = vld [vmem:[%s1 + $0x898] sm:$0xff]
    %v295 = vld [vmem:[%s1 + $0x8a0] sm:$0xff]
    %v296 = vld [vmem:[%s1 + $0x8a8] sm:$0xff]
    %v297 = vld [vmem:[%s1 + $0x8b0] sm:$0xff]
    %v298 = vld [vmem:[%s1 + $0x8b8] sm:$0xff]
    %v299 = vld [vmem:[%s1 + $0x8c0] sm:$0xff]
    %v300 = vld [vmem:[%s1 + $0x8c8] sm:$0xff]
    %v301 = vld [vmem:[%s1 + $0x8d0] sm:$0xff]
    %v302 = vld [vmem:[%s1 + $0x8d8] sm:$0xff]
    %v303 = vld [vmem:[%s1 + $0x8e0] sm:$0xff]
    %v304 = vld [vmem:[%s1 + $0x8e8] sm:$0xff]
    %v305 = vld [vmem:[%s1 + $0x8f0] sm:$0xff]
    %v306 = vld [vmem:[%s1 + $0x8f8] sm:$0xff]
    %v307 = vld [vmem:[%s0] sm:$0xff]
    %v308 = vld [vmem:[%s0 + $0x8] sm:$0xff]
    %v309 = vld [vmem:[%s0 + $0x10] sm:$0xff]
    %v598 = vunpack.c.l.b16 %v19
    %v599 = vunpack.c.h.b16 %v19
    %v600 = vunpack.c.l.b16 %v20
    %v601 = vunpack.c.h.b16 %v20
    %v602 = vunpack.c.l.b16 %v21
    %v603 = vunpack.c.h.b16 %v21
    %v604 = vunpack.c.l.b16 %v22
    %v605 = vunpack.c.h.b16 %v22
    %v606 = vunpack.c.l.b16 %v23
    %v607 = vunpack.c.h.b16 %v23
    %v608 = vunpack.c.l.b16 %v24
    %v609 = vunpack.c.h.b16 %v24
    %v610 = vunpack.c.l.b16 %v25
    %v611 = vunpack.c.h.b16 %v25
    %v612 = vunpack.c.l.b16 %v26
    %v613 = vunpack.c.h.b16 %v26
    %v614 = vunpack.c.l.b16 %v27
    %v615 = vunpack.c.h.b16 %v27
    %v616 = vunpack.c.l.b16 %v28
    %v617 = vunpack.c.h.b16 %v28
    %v618 = vunpack.c.l.b16 %v29
    %v619 = vunpack.c.h.b16 %v29
    %v620 = vunpack.c.l.b16 %v30
    %v621 = vunpack.c.h.b16 %v30
    %v622 = vunpack.c.l.b16 %v31
    %v623 = vunpack.c.h.b16 %v31
    %v624 = vunpack.c.l.b16 %v32
    %v625 = vunpack.c.h.b16 %v32
    %v626 = vunpack.c.l.b16 %v33
    %v627 = vunpack.c.h.b16 %v33
    %v628 = vunpack.c.l.b16 %v34
    %v629 = vunpack.c.h.b16 %v34
    %v630 = vunpack.c.l.b16 %v35
    %v631 = vunpack.c.h.b16 %v35
    %v632 = vunpack.c.l.b16 %v36
    %v633 = vunpack.c.h.b16 %v36
    %v634 = vunpack.c.l.b16 %v37
    %v635 = vunpack.c.h.b16 %v37
    %v636 = vunpack.c.l.b16 %v38
    %v637 = vunpack.c.h.b16 %v38
    %v638 = vunpack.c.l.b16 %v39
    %v639 = vunpack.c.h.b16 %v39
    %v640 = vunpack.c.l.b16 %v40
    %v641 = vunpack.c.h.b16 %v40
    %v642 = vunpack.c.l.b16 %v41
    %v643 = vunpack.c.h.b16 %v41
    %v644 = vunpack.c.l.b16 %v42
    %v645 = vunpack.c.h.b16 %v42
    %v646 = vunpack.c.l.b16 %v43
    %v647 = vunpack.c.h.b16 %v43
    %v648 = vunpack.c.l.b16 %v44
    %v649 = vunpack.c.h.b16 %v44
    %v650 = vunpack.c.l.b16 %v45
    %v651 = vunpack.c.h.b16 %v45
    %v652 = vunpack.c.l.b16 %v46
    %v653 = vunpack.c.h.b16 %v46
    %v654 = vunpack.c.l.b16 %v47
    %v655 = vunpack.c.h.b16 %v47
    %v656 = vunpack.c.l.b16 %v48
    %v657 = vunpack.c.h.b16 %v48
    %v658 = vunpack.c.l.b16 %v49
    %v659 = vunpack.c.h.b16 %v49
    %v660 = vunpack.c.l.b16 %v50
    %v661 = vunpack.c.h.b16 %v50
    %v662 = vunpack.c.l.b16 %v51
    %v663 = vunpack.c.h.b16 %v51
    %v664 = vunpack.c.l.b16 %v52
    %v665 = vunpack.c.h.b16 %v52
    %v666 = vunpack.c.l.b16 %v53
    %v667 = vunpack.c.h.b16 %v53
    %v668 = vunpack.c.l.b16 %v54
    %v669 = vunpack.c.h.b16 %v54
    %v670 = vunpack.c.l.b16 %v55
    %v671 = vunpack.c.h.b16 %v55
    %v672 = vunpack.c.l.b16 %v56
    %v673 = vunpack.c.h.b16 %v56
    %v674 = vunpack.c.l.b16 %v57
    %v675 = vunpack.c.h.b16 %v57
    %v676 = vunpack.c.l.b16 %v58
    %v677 = vunpack.c.h.b16 %v58
    %v678 = vunpack.c.l.b16 %v59
    %v679 = vunpack.c.h.b16 %v59
    %v680 = vunpack.c.l.b16 %v60
    %v681 = vunpack.c.h.b16 %v60
    %v682 = vunpack.c.l.b16 %v61
    %v683 = vunpack.c.h.b16 %v61
    %v684 = vunpack.c.l.b16 %v62
    %v685 = vunpack.c.h.b16 %v62
    %v686 = vunpack.c.l.b16 %v63
    %v687 = vunpack.c.h.b16 %v63
    %v688 = vunpack.c.l.b16 %v64
    %v689 = vunpack.c.h.b16 %v64
    %v690 = vunpack.c.l.b16 %v65
    %v691 = vunpack.c.h.b16 %v65
    %v692 = vunpack.c.l.b16 %v66
    %v693 = vunpack.c.h.b16 %v66
    %v694 = vunpack.c.l.b16 %v67
    %v695 = vunpack.c.h.b16 %v67
    %v696 = vunpack.c.l.b16 %v68
    %v697 = vunpack.c.h.b16 %v68
    %v698 = vunpack.c.l.b16 %v69
    %v699 = vunpack.c.h.b16 %v69
    %v700 = vunpack.c.l.b16 %v70
    %v701 = vunpack.c.h.b16 %v70
    %v702 = vunpack.c.l.b16 %v71
    %v703 = vunpack.c.h.b16 %v71
    %v704 = vunpack.c.l.b16 %v72
    %v705 = vunpack.c.h.b16 %v72
    %v706 = vunpack.c.l.b16 %v73
    %v707 = vunpack.c.h.b16 %v73
    %v708 = vunpack.c.l.b16 %v74
    %v709 = vunpack.c.h.b16 %v74
    %v710 = vunpack.c.l.b16 %v75
    %v711 = vunpack.c.h.b16 %v75
    %v712 = vunpack.c.l.b16 %v76
    %v713 = vunpack.c.h.b16 %v76
    %v714 = vunpack.c.l.b16 %v77
    %v715 = vunpack.c.h.b16 %v77
    %v716 = vunpack.c.l.b16 %v78
    %v717 = vunpack.c.h.b16 %v78
    %v718 = vunpack.c.l.b16 %v79
    %v719 = vunpack.c.h.b16 %v79
    %v720 = vunpack.c.l.b16 %v80
    %v721 = vunpack.c.h.b16 %v80
    %v722 = vunpack.c.l.b16 %v81
    %v723 = vunpack.c.h.b16 %v81
    %v724 = vunpack.c.l.b16 %v82
    %v725 = vunpack.c.h.b16 %v82
    %v726 = vunpack.c.l.b16 %v83
    %v727 = vunpack.c.h.b16 %v83
    %v728 = vunpack.c.l.b16 %v84
    %v729 = vunpack.c.h.b16 %v84
    %v730 = vunpack.c.l.b16 %v85
    %v731 = vunpack.c.h.b16 %v85
    %v732 = vunpack.c.l.b16 %v86
    %v733 = vunpack.c.h.b16 %v86
    %v734 = vunpack.c.l.b16 %v87
    %v735 = vunpack.c.h.b16 %v87
    %v736 = vunpack.c.l.b16 %v88
    %v737 = vunpack.c.h.b16 %v88
    %v738 = vunpack.c.l.b16 %v89
    %v739 = vunpack.c.h.b16 %v89
    %v740 = vunpack.c.l.b16 %v90
    %v741 = vunpack.c.h.b16 %v90
    %v742 = vunpack.c.l.b16 %v91
    %v743 = vunpack.c.h.b16 %v91
    %v744 = vunpack.c.l.b16 %v92
    %v745 = vunpack.c.h.b16 %v92
    %v746 = vunpack.c.l.b16 %v93
    %v747 = vunpack.c.h.b16 %v93
    %v748 = vunpack.c.l.b16 %v94
    %v749 = vunpack.c.h.b16 %v94
    %v750 = vunpack.c.l.b16 %v95
    %v751 = vunpack.c.h.b16 %v95
    %v752 = vunpack.c.l.b16 %v96
    %v753 = vunpack.c.h.b16 %v96
    %v754 = vunpack.c.l.b16 %v97
    %v755 = vunpack.c.h.b16 %v97
    %v756 = vunpack.c.l.b16 %v98
    %v757 = vunpack.c.h.b16 %v98
    %v758 = vunpack.c.l.b16 %v99
    %v759 = vunpack.c.h.b16 %v99
    %v760 = vunpack.c.l.b16 %v100
    %v761 = vunpack.c.h.b16 %v100
    %v762 = vunpack.c.l.b16 %v101
    %v763 = vunpack.c.h.b16 %v101
    %v764 = vunpack.c.l.b16 %v102
    %v765 = vunpack.c.h.b16 %v102
    %v766 = vunpack.c.l.b16 %v103
    %v767 = vunpack.c.h.b16 %v103
    %v768 = vunpack.c.l.b16 %v104
    %v769 = vunpack.c.h.b16 %v104
    %v770 = vunpack.c.l.b16 %v105
    %v771 = vunpack.c.h.b16 %v105
    %v772 = vunpack.c.l.b16 %v106
    %v773 = vunpack.c.h.b16 %v106
    %v774 = vunpack.c.l.b16 %v107
    %v775 = vunpack.c.h.b16 %v107
    %v776 = vunpack.c.l.b16 %v108
    %v777 = vunpack.c.h.b16 %v108
    %v778 = vunpack.c.l.b16 %v109
    %v779 = vunpack.c.h.b16 %v109
    %v780 = vunpack.c.l.b16 %v110
    %v781 = vunpack.c.h.b16 %v110
    %v782 = vunpack.c.l.b16 %v111
    %v783 = vunpack.c.h.b16 %v111
    %v784 = vunpack.c.l.b16 %v112
    %v785 = vunpack.c.h.b16 %v112
    %v786 = vunpack.c.l.b16 %v113
    %v787 = vunpack.c.h.b16 %v113
    %v788 = vunpack.c.l.b16 %v114
    %v789 = vunpack.c.h.b16 %v114
    %v790 = vunpack.c.l.b16 %v115
    %v791 = vunpack.c.h.b16 %v115
    %v792 = vunpack.c.l.b16 %v116
    %v793 = vunpack.c.h.b16 %v116
    %v794 = vunpack.c.l.b16 %v117
    %v795 = vunpack.c.h.b16 %v117
    %v796 = vunpack.c.l.b16 %v118
    %v797 = vunpack.c.h.b16 %v118
    %v798 = vunpack.c.l.b16 %v119
    %v799 = vunpack.c.h.b16 %v119
    %v800 = vunpack.c.l.b16 %v120
    %v801 = vunpack.c.h.b16 %v120
    %v802 = vunpack.c.l.b16 %v121
    %v803 = vunpack.c.h.b16 %v121
    %v804 = vunpack.c.l.b16 %v122
    %v805 = vunpack.c.h.b16 %v122
    %v806 = vunpack.c.l.b16 %v123
    %v807 = vunpack.c.h.b16 %v123
    %v808 = vunpack.c.l.b16 %v124
    %v809 = vunpack.c.h.b16 %v124
    %v810 = vunpack.c.l.b16 %v125
    %v811 = vunpack.c.h.b16 %v125
    %v812 = vunpack.c.l.b16 %v126
    %v813 = vunpack.c.h.b16 %v126
    %v814 = vunpack.c.l.b16 %v127
    %v815 = vunpack.c.h.b16 %v127
    %v816 = vunpack.c.l.b16 %v128
    %v817 = vunpack.c.h.b16 %v128
    %v818 = vunpack.c.l.b16 %v129
    %v819 = vunpack.c.h.b16 %v129
    %v820 = vunpack.c.l.b16 %v130
    %v821 = vunpack.c.h.b16 %v130
    %v822 = vunpack.c.l.b16 %v131
    %v823 = vunpack.c.h.b16 %v131
    %v824 = vunpack.c.l.b16 %v132
    %v825 = vunpack.c.h.b16 %v132
    %v826 = vunpack.c.l.b16 %v133
    %v827 = vunpack.c.h.b16 %v133
    %v828 = vunpack.c.l.b16 %v134
    %v829 = vunpack.c.h.b16 %v134
    %v830 = vunpack.c.l.b16 %v135
    %v831 = vunpack.c.h.b16 %v135
    %v832 = vunpack.c.l.b16 %v136
    %v833 = vunpack.c.h.b16 %v136
    %v834 = vunpack.c.l.b16 %v137
    %v835 = vunpack.c.h.b16 %v137
    %v836 = vunpack.c.l.b16 %v138
    %v837 = vunpack.c.h.b16 %v138
    %v838 = vunpack.c.l.b16 %v139
    %v839 = vunpack.c.h.b16 %v139
    %v840 = vunpack.c.l.b16 %v140
    %v841 = vunpack.c.h.b16 %v140
    %v842 = vunpack.c.l.b16 %v141
    %v843 = vunpack.c.h.b16 %v141
    %v844 = vunpack.c.l.b16 %v142
    %v845 = vunpack.c.h.b16 %v142
    %v846 = vunpack.c.l.b16 %v143
    %v847 = vunpack.c.h.b16 %v143
    %v848 = vunpack.c.l.b16 %v144
    %v849 = vunpack.c.h.b16 %v144
    %v850 = vunpack.c.l.b16 %v145
    %v851 = vunpack.c.h.b16 %v145
    %v852 = vunpack.c.l.b16 %v146
    %v853 = vunpack.c.h.b16 %v146
    %v854 = vunpack.c.l.b16 %v147
    %v855 = vunpack.c.h.b16 %v147
    %v856 = vunpack.c.l.b16 %v148
    %v857 = vunpack.c.h.b16 %v148
    %v858 = vunpack.c.l.b16 %v149
    %v859 = vunpack.c.h.b16 %v149
    %v860 = vunpack.c.l.b16 %v150
    %v861 = vunpack.c.h.b16 %v150
    %v862 = vunpack.c.l.b16 %v151
    %v863 = vunpack.c.h.b16 %v151
    %v864 = vunpack.c.l.b16 %v152
    %v865 = vunpack.c.h.b16 %v152
    %v866 = vunpack.c.l.b16 %v153
    %v867 = vunpack.c.h.b16 %v153
    %v868 = vunpack.c.l.b16 %v154
    %v869 = vunpack.c.h.b16 %v154
    %v870 = vunpack.c.l.b16 %v155
    %v871 = vunpack.c.h.b16 %v155
    %v872 = vunpack.c.l.b16 %v156
    %v873 = vunpack.c.h.b16 %v156
    %v874 = vunpack.c.l.b16 %v157
    %v875 = vunpack.c.h.b16 %v157
    %v876 = vunpack.c.l.b16 %v158
    %v877 = vunpack.c.h.b16 %v158
    %v878 = vunpack.c.l.b16 %v159
    %v879 = vunpack.c.h.b16 %v159
    %v880 = vunpack.c.l.b16 %v160
    %v881 = vunpack.c.h.b16 %v160
    %v882 = vunpack.c.l.b16 %v161
    %v883 = vunpack.c.h.b16 %v161
    %v884 = vunpack.c.l.b16 %v162
    %v885 = vunpack.c.h.b16 %v162
    %v886 = vunpack.c.l.b16 %v163
    %v887 = vunpack.c.h.b16 %v163
    %v888 = vunpack.c.l.b16 %v164
    %v889 = vunpack.c.h.b16 %v164
    %v890 = vunpack.c.l.b16 %v165
    %v891 = vunpack.c.h.b16 %v165
    %v892 = vunpack.c.l.b16 %v166
    %v893 = vunpack.c.h.b16 %v166
    %v894 = vunpack.c.l.b16 %v167
    %v895 = vunpack.c.h.b16 %v167
    %v896 = vunpack.c.l.b16 %v168
    %v897 = vunpack.c.h.b16 %v168
    %v898 = vunpack.c.l.b16 %v169
    %v899 = vunpack.c.h.b16 %v169
    %v900 = vunpack.c.l.b16 %v170
    %v901 = vunpack.c.h.b16 %v170
    %v902 = vunpack.c.l.b16 %v171
    %v903 = vunpack.c.h.b16 %v171
    %v904 = vunpack.c.l.b16 %v172
    %v905 = vunpack.c.h.b16 %v172
    %v906 = vunpack.c.l.b16 %v173
    %v907 = vunpack.c.h.b16 %v173
    %v908 = vunpack.c.l.b16 %v174
    %v909 = vunpack.c.h.b16 %v174
    %v910 = vunpack.c.l.b16 %v175
    %v911 = vunpack.c.h.b16 %v175
    %v912 = vunpack.c.l.b16 %v176
    %v913 = vunpack.c.h.b16 %v176
    %v914 = vunpack.c.l.b16 %v177
    %v915 = vunpack.c.h.b16 %v177
    %v916 = vunpack.c.l.b16 %v178
    %v917 = vunpack.c.h.b16 %v178
    %v918 = vunpack.c.l.b16 %v179
    %v919 = vunpack.c.h.b16 %v179
    %v920 = vunpack.c.l.b16 %v180
    %v921 = vunpack.c.h.b16 %v180
    %v922 = vunpack.c.l.b16 %v181
    %v923 = vunpack.c.h.b16 %v181
    %v924 = vunpack.c.l.b16 %v182
    %v925 = vunpack.c.h.b16 %v182
    %v926 = vunpack.c.l.b16 %v183
    %v927 = vunpack.c.h.b16 %v183
    %v928 = vunpack.c.l.b16 %v184
    %v929 = vunpack.c.h.b16 %v184
    %v930 = vunpack.c.l.b16 %v185
    %v931 = vunpack.c.h.b16 %v185
    %v932 = vunpack.c.l.b16 %v186
    %v933 = vunpack.c.h.b16 %v186
    %v934 = vunpack.c.l.b16 %v187
    %v935 = vunpack.c.h.b16 %v187
    %v936 = vunpack.c.l.b16 %v188
    %v937 = vunpack.c.h.b16 %v188
    %v938 = vunpack.c.l.b16 %v189
    %v939 = vunpack.c.h.b16 %v189
    %v940 = vunpack.c.l.b16 %v190
    %v941 = vunpack.c.h.b16 %v190
    %v942 = vunpack.c.l.b16 %v191
    %v943 = vunpack.c.h.b16 %v191
    %v944 = vunpack.c.l.b16 %v192
    %v945 = vunpack.c.h.b16 %v192
    %v946 = vunpack.c.l.b16 %v193
    %v947 = vunpack.c.h.b16 %v193
    %v948 = vunpack.c.l.b16 %v194
    %v949 = vunpack.c.h.b16 %v194
    %v950 = vunpack.c.l.b16 %v195
    %v951 = vunpack.c.h.b16 %v195
    %v952 = vunpack.c.l.b16 %v196
    %v953 = vunpack.c.h.b16 %v196
    %v954 = vunpack.c.l.b16 %v197
    %v955 = vunpack.c.h.b16 %v197
    %v956 = vunpack.c.l.b16 %v198
    %v957 = vunpack.c.h.b16 %v198
    %v958 = vunpack.c.l.b16 %v199
    %v959 = vunpack.c.h.b16 %v199
    %v960 = vunpack.c.l.b16 %v200
    %v961 = vunpack.c.h.b16 %v200
    %v962 = vunpack.c.l.b16 %v201
    %v963 = vunpack.c.h.b16 %v201
    %v964 = vunpack.c.l.b16 %v202
    %v965 = vunpack.c.h.b16 %v202
    %v966 = vunpack.c.l.b16 %v203
    %v967 = vunpack.c.h.b16 %v203
    %v968 = vunpack.c.l.b16 %v204
    %v969 = vunpack.c.h.b16 %v204
    %v970 = vunpack.c.l.b16 %v205
    %v971 = vunpack.c.h.b16 %v205
    %v972 = vunpack.c.l.b16 %v206
    %v973 = vunpack.c.h.b16 %v206
    %v974 = vunpack.c.l.b16 %v207
    %v975 = vunpack.c.h.b16 %v207
    %v976 = vunpack.c.l.b16 %v208
    %v977 = vunpack.c.h.b16 %v208
    %v978 = vunpack.c.l.b16 %v209
    %v979 = vunpack.c.h.b16 %v209
    %v980 = vunpack.c.l.b16 %v210
    %v981 = vunpack.c.h.b16 %v210
    %v982 = vunpack.c.l.b16 %v211
    %v983 = vunpack.c.h.b16 %v211
    %v984 = vunpack.c.l.b16 %v212
    %v985 = vunpack.c.h.b16 %v212
    %v986 = vunpack.c.l.b16 %v213
    %v987 = vunpack.c.h.b16 %v213
    %v988 = vunpack.c.l.b16 %v214
    %v989 = vunpack.c.h.b16 %v214
    %v990 = vunpack.c.l.b16 %v215
    %v991 = vunpack.c.h.b16 %v215
    %v992 = vunpack.c.l.b16 %v216
    %v993 = vunpack.c.h.b16 %v216
    %v994 = vunpack.c.l.b16 %v217
    %v995 = vunpack.c.h.b16 %v217
    %v996 = vunpack.c.l.b16 %v218
    %v997 = vunpack.c.h.b16 %v218
    %v998 = vunpack.c.l.b16 %v219
    %v999 = vunpack.c.h.b16 %v219
    %v1000 = vunpack.c.l.b16 %v220
    %v1001 = vunpack.c.h.b16 %v220
    %v1002 = vunpack.c.l.b16 %v221
    %v1003 = vunpack.c.h.b16 %v221
    %v1004 = vunpack.c.l.b16 %v222
    %v1005 = vunpack.c.h.b16 %v222
    %v1006 = vunpack.c.l.b16 %v223
    %v1007 = vunpack.c.h.b16 %v223
    %v1008 = vunpack.c.l.b16 %v224
    %v1009 = vunpack.c.h.b16 %v224
    %v1010 = vunpack.c.l.b16 %v225
    %v1011 = vunpack.c.h.b16 %v225
    %v1012 = vunpack.c.l.b16 %v226
    %v1013 = vunpack.c.h.b16 %v226
    %v1014 = vunpack.c.l.b16 %v227
    %v1015 = vunpack.c.h.b16 %v227
    %v1016 = vunpack.c.l.b16 %v228
    %v1017 = vunpack.c.h.b16 %v228
    %v1018 = vunpack.c.l.b16 %v229
    %v1019 = vunpack.c.h.b16 %v229
    %v1020 = vunpack.c.l.b16 %v230
    %v1021 = vunpack.c.h.b16 %v230
    %v1022 = vunpack.c.l.b16 %v231
    %v1023 = vunpack.c.h.b16 %v231
    %v1024 = vunpack.c.l.b16 %v232
    %v1025 = vunpack.c.h.b16 %v232
    %v1026 = vunpack.c.l.b16 %v233
    %v1027 = vunpack.c.h.b16 %v233
    %v1028 = vunpack.c.l.b16 %v234
    %v1029 = vunpack.c.h.b16 %v234
    %v1030 = vunpack.c.l.b16 %v235
    %v1031 = vunpack.c.h.b16 %v235
    %v1032 = vunpack.c.l.b16 %v236
    %v1033 = vunpack.c.h.b16 %v236
    %v1034 = vunpack.c.l.b16 %v237
    %v1035 = vunpack.c.h.b16 %v237
    %v1036 = vunpack.c.l.b16 %v238
    %v1037 = vunpack.c.h.b16 %v238
    %v1038 = vunpack.c.l.b16 %v239
    %v1039 = vunpack.c.h.b16 %v239
    %v1040 = vunpack.c.l.b16 %v240
    %v1041 = vunpack.c.h.b16 %v240
    %v1042 = vunpack.c.l.b16 %v241
    %v1043 = vunpack.c.h.b16 %v241
    %v1044 = vunpack.c.l.b16 %v242
    %v1045 = vunpack.c.h.b16 %v242
    %v1046 = vunpack.c.l.b16 %v243
    %v1047 = vunpack.c.h.b16 %v243
    %v1048 = vunpack.c.l.b16 %v244
    %v1049 = vunpack.c.h.b16 %v244
    %v1050 = vunpack.c.l.b16 %v245
    %v1051 = vunpack.c.h.b16 %v245
    %v1052 = vunpack.c.l.b16 %v246
    %v1053 = vunpack.c.h.b16 %v246
    %v1054 = vunpack.c.l.b16 %v247
    %v1055 = vunpack.c.h.b16 %v247
    %v1056 = vunpack.c.l.b16 %v248
    %v1057 = vunpack.c.h.b16 %v248
    %v1058 = vunpack.c.l.b16 %v249
    %v1059 = vunpack.c.h.b16 %v249
    %v1060 = vunpack.c.l.b16 %v250
    %v1061 = vunpack.c.h.b16 %v250
    %v1062 = vunpack.c.l.b16 %v251
    %v1063 = vunpack.c.h.b16 %v251
    %v1064 = vunpack.c.l.b16 %v252
    %v1065 = vunpack.c.h.b16 %v252
    %v1066 = vunpack.c.l.b16 %v253
    %v1067 = vunpack.c.h.b16 %v253
    %v1068 = vunpack.c.l.b16 %v254
    %v1069 = vunpack.c.h.b16 %v254
    %v1070 = vunpack.c.l.b16 %v255
    %v1071 = vunpack.c.h.b16 %v255
    %v1072 = vunpack.c.l.b16 %v256
    %v1073 = vunpack.c.h.b16 %v256
    %v1074 = vunpack.c.l.b16 %v257
    %v1075 = vunpack.c.h.b16 %v257
    %v1076 = vunpack.c.l.b16 %v258
    %v1077 = vunpack.c.h.b16 %v258
    %v1078 = vunpack.c.l.b16 %v259
    %v1079 = vunpack.c.h.b16 %v259
    %v1080 = vunpack.c.l.b16 %v260
    %v1081 = vunpack.c.h.b16 %v260
    %v1082 = vunpack.c.l.b16 %v261
    %v1083 = vunpack.c.h.b16 %v261
    %v1084 = vunpack.c.l.b16 %v262
    %v1085 = vunpack.c.h.b16 %v262
    %v1086 = vunpack.c.l.b16 %v263
    %v1087 = vunpack.c.h.b16 %v263
    %v1088 = vunpack.c.l.b16 %v264
    %v1089 = vunpack.c.h.b16 %v264
    %v1090 = vunpack.c.l.b16 %v265
    %v1091 = vunpack.c.h.b16 %v265
    %v1092 = vunpack.c.l.b16 %v266
    %v1093 = vunpack.c.h.b16 %v266
    %v1094 = vunpack.c.l.b16 %v267
    %v1095 = vunpack.c.h.b16 %v267
    %v1096 = vunpack.c.l.b16 %v268
    %v1097 = vunpack.c.h.b16 %v268
    %v1098 = vunpack.c.l.b16 %v269
    %v1099 = vunpack.c.h.b16 %v269
    %v1100 = vunpack.c.l.b16 %v270
    %v1101 = vunpack.c.h.b16 %v270
    %v1102 = vunpack.c.l.b16 %v271
    %v1103 = vunpack.c.h.b16 %v271
    %v1104 = vunpack.c.l.b16 %v272
    %v1105 = vunpack.c.h.b16 %v272
    %v1106 = vunpack.c.l.b16 %v273
    %v1107 = vunpack.c.h.b16 %v273
    %v1108 = vunpack.c.l.b16 %v274
    %v1109 = vunpack.c.h.b16 %v274
    %v1110 = vunpack.c.l.b16 %v275
    %v1111 = vunpack.c.h.b16 %v275
    %v1112 = vunpack.c.l.b16 %v276
    %v1113 = vunpack.c.h.b16 %v276
    %v1114 = vunpack.c.l.b16 %v277
    %v1115 = vunpack.c.h.b16 %v277
    %v1116 = vunpack.c.l.b16 %v278
    %v1117 = vunpack.c.h.b16 %v278
    %v1118 = vunpack.c.l.b16 %v279
    %v1119 = vunpack.c.h.b16 %v279
    %v1120 = vunpack.c.l.b16 %v280
    %v1121 = vunpack.c.h.b16 %v280
    %v1122 = vunpack.c.l.b16 %v281
    %v1123 = vunpack.c.h.b16 %v281
    %v1124 = vunpack.c.l.b16 %v282
    %v1125 = vunpack.c.h.b16 %v282
    %v1126 = vunpack.c.l.b16 %v283
    %v1127 = vunpack.c.h.b16 %v283
    %v1128 = vunpack.c.l.b16 %v284
    %v1129 = vunpack.c.h.b16 %v284
    %v1130 = vunpack.c.l.b16 %v285
    %v1131 = vunpack.c.h.b16 %v285
    %v1132 = vunpack.c.l.b16 %v286
    %v1133 = vunpack.c.h.b16 %v286
    %v1134 = vunpack.c.l.b16 %v287
    %v1135 = vunpack.c.h.b16 %v287
    %v1136 = vunpack.c.l.b16 %v288
    %v1137 = vunpack.c.h.b16 %v288
    %v1138 = vunpack.c.l.b16 %v289
    %v1139 = vunpack.c.h.b16 %v289
    %v1140 = vunpack.c.l.b16 %v290
    %v1141 = vunpack.c.h.b16 %v290
    %v1142 = vunpack.c.l.b16 %v291
    %v1143 = vunpack.c.h.b16 %v291
    %v1144 = vunpack.c.l.b16 %v292
    %v1145 = vunpack.c.h.b16 %v292
    %v1146 = vunpack.c.l.b16 %v293
    %v1147 = vunpack.c.h.b16 %v293
    %v1148 = vunpack.c.l.b16 %v294
    %v1149 = vunpack.c.h.b16 %v294
    %v1150 = vunpack.c.l.b16 %v295
    %v1151 = vunpack.c.h.b16 %v295
    %v1152 = vunpack.c.l.b16 %v296
    %v1153 = vunpack.c.h.b16 %v296
    %v1154 = vunpack.c.l.b16 %v297
    %v1155 = vunpack.c.h.b16 %v297
    %v1156 = vunpack.c.l.b16 %v298
    %v1157 = vunpack.c.h.b16 %v298
    %v1158 = vunpack.c.l.b16 %v299
    %v1159 = vunpack.c.h.b16 %v299
    %v1160 = vunpack.c.l.b16 %v300
    %v1161 = vunpack.c.h.b16 %v300
    %v1162 = vunpack.c.l.b16 %v301
    %v1163 = vunpack.c.h.b16 %v301
    %v1164 = vunpack.c.l.b16 %v302
    %v1165 = vunpack.c.h.b16 %v302
    %v1166 = vunpack.c.l.b16 %v303
    %v1167 = vunpack.c.h.b16 %v303
    %v1168 = vunpack.c.l.b16 %v304
    %v1169 = vunpack.c.h.b16 %v304
    %v1170 = vunpack.c.l.b16 %v305
    %v1171 = vunpack.c.h.b16 %v305
    %v1172 = vunpack.c.l.b16 %v306
    %v1173 = vunpack.c.h.b16 %v306
    %v1174 = vpack.c.b16 %v610, %v598
    %v1175 = vpack.c.b16 %v611, %v599
    %v1176 = vpack.c.b16 %v612, %v600
    %v1177 = vpack.c.b16 %v613, %v601
    %v1178 = vpack.c.b16 %v614, %v602
    %v1179 = vpack.c.b16 %v615, %v603
    %v1180 = vpack.c.b16 %v616, %v604
    %v1181 = vpack.c.b16 %v617, %v605
    %v1182 = vpack.c.b16 %v618, %v606
    %v1183 = vpack.c.b16 %v619, %v607
    %v1184 = vpack.c.b16 %v620, %v608
    %v1185 = vpack.c.b16 %v621, %v609
    %v1186 = vpack.c.b16 %v634, %v622
    %v1187 = vpack.c.b16 %v635, %v623
    %v1188 = vpack.c.b16 %v636, %v624
    %v1189 = vpack.c.b16 %v637, %v625
    %v1190 = vpack.c.b16 %v638, %v626
    %v1191 = vpack.c.b16 %v639, %v627
    %v1192 = vpack.c.b16 %v640, %v628
    %v1193 = vpack.c.b16 %v641, %v629
    %v1194 = vpack.c.b16 %v642, %v630
    %v1195 = vpack.c.b16 %v643, %v631
    %v1196 = vpack.c.b16 %v644, %v632
    %v1197 = vpack.c.b16 %v645, %v633
    %v1198 = vpack.c.b16 %v658, %v646
    %v1199 = vpack.c.b16 %v659, %v647
    %v1200 = vpack.c.b16 %v660, %v648
    %v1201 = vpack.c.b16 %v661, %v649
    %v1202 = vpack.c.b16 %v662, %v650
    %v1203 = vpack.c.b16 %v663, %v651
    %v1204 = vpack.c.b16 %v664, %v652
    %v1205 = vpack.c.b16 %v665, %v653
    %v1206 = vpack.c.b16 %v666, %v654
    %v1207 = vpack.c.b16 %v667, %v655
    %v1208 = vpack.c.b16 %v668, %v656
    %v1209 = vpack.c.b16 %v669, %v657
    %v1210 = vpack.c.b16 %v682, %v670
    %v1211 = vpack.c.b16 %v683, %v671
    %v1212 = vpack.c.b16 %v684, %v672
    %v1213 = vpack.c.b16 %v685, %v673
    %v1214 = vpack.c.b16 %v686, %v674
    %v1215 = vpack.c.b16 %v687, %v675
    %v1216 = vpack.c.b16 %v688, %v676
    %v1217 = vpack.c.b16 %v689, %v677
    %v1218 = vpack.c.b16 %v690, %v678
    %v1219 = vpack.c.b16 %v691, %v679
    %v1220 = vpack.c.b16 %v692, %v680
    %v1221 = vpack.c.b16 %v693, %v681
    %v1222 = vpack.c.b16 %v706, %v694
    %v1223 = vpack.c.b16 %v707, %v695
    %v1224 = vpack.c.b16 %v708, %v696
    %v1225 = vpack.c.b16 %v709, %v697
    %v1226 = vpack.c.b16 %v710, %v698
    %v1227 = vpack.c.b16 %v711, %v699
    %v1228 = vpack.c.b16 %v712, %v700
    %v1229 = vpack.c.b16 %v713, %v701
    %v1230 = vpack.c.b16 %v714, %v702
    %v1231 = vpack.c.b16 %v715, %v703
    %v1232 = vpack.c.b16 %v716, %v704
    %v1233 = vpack.c.b16 %v717, %v705
    %v1234 = vpack.c.b16 %v730, %v718
    %v1235 = vpack.c.b16 %v731, %v719
    %v1236 = vpack.c.b16 %v732, %v720
    %v1237 = vpack.c.b16 %v733, %v721
    %v1238 = vpack.c.b16 %v734, %v722
    %v1239 = vpack.c.b16 %v735, %v723
    %v1240 = vpack.c.b16 %v736, %v724
    %v1241 = vpack.c.b16 %v737, %v725
    %v1242 = vpack.c.b16 %v738, %v726
    %v1243 = vpack.c.b16 %v739, %v727
    %v1244 = vpack.c.b16 %v740, %v728
    %v1245 = vpack.c.b16 %v741, %v729
    %v1246 = vpack.c.b16 %v754, %v742
    %v1247 = vpack.c.b16 %v755, %v743
    %v1248 = vpack.c.b16 %v756, %v744
    %v1249 = vpack.c.b16 %v757, %v745
    %v1250 = vpack.c.b16 %v758, %v746
    %v1251 = vpack.c.b16 %v759, %v747
    %v1252 = vpack.c.b16 %v760, %v748
    %v1253 = vpack.c.b16 %v761, %v749
    %v1254 = vpack.c.b16 %v762, %v750
    %v1255 = vpack.c.b16 %v763, %v751
    %v1256 = vpack.c.b16 %v764, %v752
    %v1257 = vpack.c.b16 %v765, %v753
    %v1258 = vpack.c.b16 %v778, %v766
    %v1259 = vpack.c.b16 %v779, %v767
    %v1260 = vpack.c.b16 %v780, %v768
    %v1261 = vpack.c.b16 %v781, %v769
    %v1262 = vpack.c.b16 %v782, %v770
    %v1263 = vpack.c.b16 %v783, %v771
    %v1264 = vpack.c.b16 %v784, %v772
    %v1265 = vpack.c.b16 %v785, %v773
    %v1266 = vpack.c.b16 %v786, %v774
    %v1267 = vpack.c.b16 %v787, %v775
    %v1268 = vpack.c.b16 %v788, %v776
    %v1269 = vpack.c.b16 %v789, %v777
    %v1270 = vpack.c.b16 %v802, %v790
    %v1271 = vpack.c.b16 %v803, %v791
    %v1272 = vpack.c.b16 %v804, %v792
    %v1273 = vpack.c.b16 %v805, %v793
    %v1274 = vpack.c.b16 %v806, %v794
    %v1275 = vpack.c.b16 %v807, %v795
    %v1276 = vpack.c.b16 %v808, %v796
    %v1277 = vpack.c.b16 %v809, %v797
    %v1278 = vpack.c.b16 %v810, %v798
    %v1279 = vpack.c.b16 %v811, %v799
    %v1280 = vpack.c.b16 %v812, %v800
    %v1281 = vpack.c.b16 %v813, %v801
    %v1282 = vpack.c.b16 %v826, %v814
    %v1283 = vpack.c.b16 %v827, %v815
    %v1284 = vpack.c.b16 %v828, %v816
    %v1285 = vpack.c.b16 %v829, %v817
    %v1286 = vpack.c.b16 %v830, %v818
    %v1287 = vpack.c.b16 %v831, %v819
    %v1288 = vpack.c.b16 %v832, %v820
    %v1289 = vpack.c.b16 %v833, %v821
    %v1290 = vpack.c.b16 %v834, %v822
    %v1291 = vpack.c.b16 %v835, %v823
    %v1292 = vpack.c.b16 %v836, %v824
    %v1293 = vpack.c.b16 %v837, %v825
    %v1294 = vpack.c.b16 %v850, %v838
    %v1295 = vpack.c.b16 %v851, %v839
    %v1296 = vpack.c.b16 %v852, %v840
    %v1297 = vpack.c.b16 %v853, %v841
    %v1298 = vpack.c.b16 %v854, %v842
    %v1299 = vpack.c.b16 %v855, %v843
    %v1300 = vpack.c.b16 %v856, %v844
    %v1301 = vpack.c.b16 %v857, %v845
    %v1302 = vpack.c.b16 %v858, %v846
    %v1303 = vpack.c.b16 %v859, %v847
    %v1304 = vpack.c.b16 %v860, %v848
    %v1305 = vpack.c.b16 %v861, %v849
    %v1306 = vpack.c.b16 %v874, %v862
    %v1307 = vpack.c.b16 %v875, %v863
    %v1308 = vpack.c.b16 %v876, %v864
    %v1309 = vpack.c.b16 %v877, %v865
    %v1310 = vpack.c.b16 %v878, %v866
    %v1311 = vpack.c.b16 %v879, %v867
    %v1312 = vpack.c.b16 %v880, %v868
    %v1313 = vpack.c.b16 %v881, %v869
    %v1314 = vpack.c.b16 %v882, %v870
    %v1315 = vpack.c.b16 %v883, %v871
    %v1316 = vpack.c.b16 %v884, %v872
    %v1317 = vpack.c.b16 %v885, %v873
    %v1318 = vpack.c.b16 %v898, %v886
    %v1319 = vpack.c.b16 %v899, %v887
    %v1320 = vpack.c.b16 %v900, %v888
    %v1321 = vpack.c.b16 %v901, %v889
    %v1322 = vpack.c.b16 %v902, %v890
    %v1323 = vpack.c.b16 %v903, %v891
    %v1324 = vpack.c.b16 %v904, %v892
    %v1325 = vpack.c.b16 %v905, %v893
    %v1326 = vpack.c.b16 %v906, %v894
    %v1327 = vpack.c.b16 %v907, %v895
    %v1328 = vpack.c.b16 %v908, %v896
    %v1329 = vpack.c.b16 %v909, %v897
    %v1330 = vpack.c.b16 %v922, %v910
    %v1331 = vpack.c.b16 %v923, %v911
    %v1332 = vpack.c.b16 %v924, %v912
    %v1333 = vpack.c.b16 %v925, %v913
    %v1334 = vpack.c.b16 %v926, %v914
    %v1335 = vpack.c.b16 %v927, %v915
    %v1336 = vpack.c.b16 %v928, %v916
    %v1337 = vpack.c.b16 %v929, %v917
    %v1338 = vpack.c.b16 %v930, %v918
    %v1339 = vpack.c.b16 %v931, %v919
    %v1340 = vpack.c.b16 %v932, %v920
    %v1341 = vpack.c.b16 %v933, %v921
    %v1342 = vpack.c.b16 %v946, %v934
    %v1343 = vpack.c.b16 %v947, %v935
    %v1344 = vpack.c.b16 %v948, %v936
    %v1345 = vpack.c.b16 %v949, %v937
    %v1346 = vpack.c.b16 %v950, %v938
    %v1347 = vpack.c.b16 %v951, %v939
    %v1348 = vpack.c.b16 %v952, %v940
    %v1349 = vpack.c.b16 %v953, %v941
    %v1350 = vpack.c.b16 %v954, %v942
    %v1351 = vpack.c.b16 %v955, %v943
    %v1352 = vpack.c.b16 %v956, %v944
    %v1353 = vpack.c.b16 %v957, %v945
    %v1354 = vpack.c.b16 %v970, %v958
    %v1355 = vpack.c.b16 %v971, %v959
    %v1356 = vpack.c.b16 %v972, %v960
    %v1357 = vpack.c.b16 %v973, %v961
    %v1358 = vpack.c.b16 %v974, %v962
    %v1359 = vpack.c.b16 %v975, %v963
    %v1360 = vpack.c.b16 %v976, %v964
    %v1361 = vpack.c.b16 %v977, %v965
    %v1362 = vpack.c.b16 %v978, %v966
    %v1363 = vpack.c.b16 %v979, %v967
    %v1364 = vpack.c.b16 %v980, %v968
    %v1365 = vpack.c.b16 %v981, %v969
    %v1366 = vpack.c.b16 %v994, %v982
    %v1367 = vpack.c.b16 %v995, %v983
    %v1368 = vpack.c.b16 %v996, %v984
    %v1369 = vpack.c.b16 %v997, %v985
    %v1370 = vpack.c.b16 %v998, %v986
    %v1371 = vpack.c.b16 %v999, %v987
    %v1372 = vpack.c.b16 %v1000, %v988
    %v1373 = vpack.c.b16 %v1001, %v989
    %v1374 = vpack.c.b16 %v1002, %v990
    %v1375 = vpack.c.b16 %v1003, %v991
    %v1376 = vpack.c.b16 %v1004, %v992
    %v1377 = vpack.c.b16 %v1005, %v993
    %v1378 = vpack.c.b16 %v1018, %v1006
    %v1379 = vpack.c.b16 %v1019, %v1007
    %v1380 = vpack.c.b16 %v1020, %v1008
    %v1381 = vpack.c.b16 %v1021, %v1009
    %v1382 = vpack.c.b16 %v1022, %v1010
    %v1383 = vpack.c.b16 %v1023, %v1011
    %v1384 = vpack.c.b16 %v1024, %v1012
    %v1385 = vpack.c.b16 %v1025, %v1013
    %v1386 = vpack.c.b16 %v1026, %v1014
    %v1387 = vpack.c.b16 %v1027, %v1015
    %v1388 = vpack.c.b16 %v1028, %v1016
    %v1389 = vpack.c.b16 %v1029, %v1017
    %v1390 = vpack.c.b16 %v1042, %v1030
    %v1391 = vpack.c.b16 %v1043, %v1031
    %v1392 = vpack.c.b16 %v1044, %v1032
    %v1393 = vpack.c.b16 %v1045, %v1033
    %v1394 = vpack.c.b16 %v1046, %v1034
    %v1395 = vpack.c.b16 %v1047, %v1035
    %v1396 = vpack.c.b16 %v1048, %v1036
    %v1397 = vpack.c.b16 %v1049, %v1037
    %v1398 = vpack.c.b16 %v1050, %v1038
    %v1399 = vpack.c.b16 %v1051, %v1039
    %v1400 = vpack.c.b16 %v1052, %v1040
    %v1401 = vpack.c.b16 %v1053, %v1041
    %v1402 = vpack.c.b16 %v1066, %v1054
    %v1403 = vpack.c.b16 %v1067, %v1055
    %v1404 = vpack.c.b16 %v1068, %v1056
    %v1405 = vpack.c.b16 %v1069, %v1057
    %v1406 = vpack.c.b16 %v1070, %v1058
    %v1407 = vpack.c.b16 %v1071, %v1059
    %v1408 = vpack.c.b16 %v1072, %v1060
    %v1409 = vpack.c.b16 %v1073, %v1061
    %v1410 = vpack.c.b16 %v1074, %v1062
    %v1411 = vpack.c.b16 %v1075, %v1063
    %v1412 = vpack.c.b16 %v1076, %v1064
    %v1413 = vpack.c.b16 %v1077, %v1065
    %v1414 = vpack.c.b16 %v1090, %v1078
    %v1415 = vpack.c.b16 %v1091, %v1079
    %v1416 = vpack.c.b16 %v1092, %v1080
    %v1417 = vpack.c.b16 %v1093, %v1081
    %v1418 = vpack.c.b16 %v1094, %v1082
    %v1419 = vpack.c.b16 %v1095, %v1083
    %v1420 = vpack.c.b16 %v1096, %v1084
    %v1421 = vpack.c.b16 %v1097, %v1085
    %v1422 = vpack.c.b16 %v1098, %v1086
    %v1423 = vpack.c.b16 %v1099, %v1087
    %v1424 = vpack.c.b16 %v1100, %v1088
    %v1425 = vpack.c.b16 %v1101, %v1089
    %v1426 = vpack.c.b16 %v1114, %v1102
    %v1427 = vpack.c.b16 %v1115, %v1103
    %v1428 = vpack.c.b16 %v1116, %v1104
    %v1429 = vpack.c.b16 %v1117, %v1105
    %v1430 = vpack.c.b16 %v1118, %v1106
    %v1431 = vpack.c.b16 %v1119, %v1107
    %v1432 = vpack.c.b16 %v1120, %v1108
    %v1433 = vpack.c.b16 %v1121, %v1109
    %v1434 = vpack.c.b16 %v1122, %v1110
    %v1435 = vpack.c.b16 %v1123, %v1111
    %v1436 = vpack.c.b16 %v1124, %v1112
    %v1437 = vpack.c.b16 %v1125, %v1113
    %v1438 = vpack.c.b16 %v1138, %v1126
    %v1439 = vpack.c.b16 %v1139, %v1127
    %v1440 = vpack.c.b16 %v1140, %v1128
    %v1441 = vpack.c.b16 %v1141, %v1129
    %v1442 = vpack.c.b16 %v1142, %v1130
    %v1443 = vpack.c.b16 %v1143, %v1131
    %v1444 = vpack.c.b16 %v1144, %v1132
    %v1445 = vpack.c.b16 %v1145, %v1133
    %v1446 = vpack.c.b16 %v1146, %v1134
    %v1447 = vpack.c.b16 %v1147, %v1135
    %v1448 = vpack.c.b16 %v1148, %v1136
    %v1449 = vpack.c.b16 %v1149, %v1137
    %v1450 = vpack.c.b16 %v1162, %v1150
    %v1451 = vpack.c.b16 %v1163, %v1151
    %v1452 = vpack.c.b16 %v1164, %v1152
    %v1453 = vpack.c.b16 %v1165, %v1153
    %v1454 = vpack.c.b16 %v1166, %v1154
    %v1455 = vpack.c.b16 %v1167, %v1155
    %v1456 = vpack.c.b16 %v1168, %v1156
    %v1457 = vpack.c.b16 %v1169, %v1157
    %v1458 = vpack.c.b16 %v1170, %v1158
    %v1459 = vpack.c.b16 %v1171, %v1159
    %v1460 = vpack.c.b16 %v1172, %v1160
    %v1461 = vpack.c.b16 %v1173, %v1161
    %1750 = vmatprep.subr.bf16.mxu0 %v1259
    %1751 = vmatpush1.bf16.msra.mxu0 %v1258
    %1752 = vmatprep.subr.bf16.mxu0 %v1247
    %1753 = vmatpush1.bf16.msra.mxu0 %v1246
    %1754 = vmatprep.subr.bf16.mxu0 %v1235
    %1755 = vmatpush1.bf16.msra.mxu0 %v1234
    %1756 = vmatprep.subr.bf16.mxu0 %v1223
    %1757 = vmatpush1.bf16.msra.mxu0 %v1222
    %1758 = vmatprep.subr.bf16.mxu0 %v1211
    %1759 = vmatpush1.bf16.msra.mxu0 %v1210
    %1760 = vmatprep.subr.bf16.mxu0 %v1199
    %1761 = vmatpush1.bf16.msra.mxu0 %v1198
    %1762 = vmatprep.subr.bf16.mxu0 %v1187
    %1763 = vmatpush1.bf16.msra.mxu0 %v1186
    %1764 = vmatprep.subr.bf16.mxu0 %v1175
    %1765 = vmatpush1.bf16.msra.mxu0 %v1174
    %1766 = vmatprep.subr.bf16.mxu0 %v1355
    %1767 = vmatpush2.bf16.msra.mxu0 %v1354
    %1768 = vmatprep.subr.bf16.mxu0 %v1343
    %1769 = vmatpush2.bf16.msra.mxu0 %v1342
    %1770 = vmatprep.subr.bf16.mxu0 %v1331
    %1771 = vmatpush2.bf16.msra.mxu0 %v1330
    %1772 = vmatprep.subr.bf16.mxu0 %v1319
    %1773 = vmatpush2.bf16.msra.mxu0 %v1318
    %1774 = vmatprep.subr.bf16.mxu0 %v1307
    %1775 = vmatpush2.bf16.msra.mxu0 %v1306
    %1776 = vmatprep.subr.bf16.mxu0 %v1295
    %1777 = vmatpush2.bf16.msra.mxu0 %v1294
    %1778 = vmatprep.subr.bf16.mxu0 %v1283
    %1779 = vmatpush2.bf16.msra.mxu0 %v1282
    %1780 = vmatprep.subr.bf16.mxu0 %v1271
    %1781 = vmatpush2.bf16.msra.mxu0 %v1270
    %1782 = vmatprep.mubr.bf16.mxu0 0
    %1783 = vmatmul.mubr.bf16.gmra.mxu0 0
    %v1784 = vpop.f32.mrf.mxu0
    %v1785 = vadd.f32 0.0, %v1784
    %v1786 = vpop.f32.mrf.mxu0
    %v1787 = vadd.f32 0.0, %v1786
    %v1788 = vpop.f32.mrf.mxu0
    %v1789 = vpop.f32.mrf.mxu0
    %1790 = vdwg.mxu0
    %1791 = vmatprep.subr.bf16.mxu0 %v1451
    %1792 = vmatpush1.bf16.msra.mxu0 %v1450
    %1793 = vmatprep.subr.bf16.mxu0 %v1439
    %1794 = vmatpush1.bf16.msra.mxu0 %v1438
    %1795 = vmatprep.subr.bf16.mxu0 %v1427
    %1796 = vmatpush1.bf16.msra.mxu0 %v1426
    %1797 = vmatprep.subr.bf16.mxu0 %v1415
    %1798 = vmatpush1.bf16.msra.mxu0 %v1414
    %1799 = vmatprep.subr.bf16.mxu0 %v1403
    %1800 = vmatpush1.bf16.msra.mxu0 %v1402
    %1801 = vmatprep.subr.bf16.mxu0 %v1391
    %1802 = vmatpush1.bf16.msra.mxu0 %v1390
    %1803 = vmatprep.subr.bf16.mxu0 %v1379
    %1804 = vmatpush1.bf16.msra.mxu0 %v1378
    %1805 = vmatprep.subr.bf16.mxu0 %v1367
    %1806 = vmatpush1.bf16.msra.mxu0 %v1366
    %1807 = vmatprep.subr.bf16.mxu0 0
    %1808 = vmatpush2.bf16.msra.mxu0 0
    %1809 = vmatprep.subr.bf16.mxu0 0
    %1810 = vmatpush2.bf16.msra.mxu0 0
    %1811 = vmatprep.subr.bf16.mxu0 0
    %1812 = vmatpush2.bf16.msra.mxu0 0
    %1813 = vmatprep.subr.bf16.mxu0 0
    %1814 = vmatpush2.bf16.msra.mxu0 0
    %1815 = vmatprep.subr.bf16.mxu0 0
    %1816 = vmatpush2.bf16.msra.mxu0 0
    %1817 = vmatprep.subr.bf16.mxu0 0
    %1818 = vmatpush2.bf16.msra.mxu0 0
    %1819 = vmatprep.subr.bf16.mxu0 0
    %1820 = vmatpush2.bf16.msra.mxu0 0
    %1821 = vmatprep.subr.bf16.mxu0 0
    %1822 = vmatpush2.bf16.msra.mxu0 0
    %1823 = vmatprep.mubr.bf16.mxu0 0
    %1824 = vmatmul.mubr.bf16.gmra.mxu0 0
    %v1825 = vpop.f32.mrf.mxu0
    %v1826 = vadd.f32 %v1785, %v1825
    %v1827 = vpop.f32.mrf.mxu0
    %v1828 = vadd.f32 %v1787, %v1827
    %v1829 = vpop.f32.mrf.mxu0
    %v1830 = vpop.f32.mrf.mxu0
    %1831 = vdwg.mxu0
    %1832 = vmatprep.subr.bf16.mxu0 %v1261
    %1833 = vmatpush1.bf16.msra.mxu0 %v1260
    %1834 = vmatprep.subr.bf16.mxu0 %v1249
    %1835 = vmatpush1.bf16.msra.mxu0 %v1248
    %1836 = vmatprep.subr.bf16.mxu0 %v1237
    %1837 = vmatpush1.bf16.msra.mxu0 %v1236
    %1838 = vmatprep.subr.bf16.mxu0 %v1225
    %1839 = vmatpush1.bf16.msra.mxu0 %v1224
    %1840 = vmatprep.subr.bf16.mxu0 %v1213
    %1841 = vmatpush1.bf16.msra.mxu0 %v1212
    %1842 = vmatprep.subr.bf16.mxu0 %v1201
    %1843 = vmatpush1.bf16.msra.mxu0 %v1200
    %1844 = vmatprep.subr.bf16.mxu0 %v1189
    %1845 = vmatpush1.bf16.msra.mxu0 %v1188
    %1846 = vmatprep.subr.bf16.mxu0 %v1177
    %1847 = vmatpush1.bf16.msra.mxu0 %v1176
    %1848 = vmatprep.subr.bf16.mxu0 %v1357
    %1849 = vmatpush2.bf16.msra.mxu0 %v1356
    %1850 = vmatprep.subr.bf16.mxu0 %v1345
    %1851 = vmatpush2.bf16.msra.mxu0 %v1344
    %1852 = vmatprep.subr.bf16.mxu0 %v1333
    %1853 = vmatpush2.bf16.msra.mxu0 %v1332
    %1854 = vmatprep.subr.bf16.mxu0 %v1321
    %1855 = vmatpush2.bf16.msra.mxu0 %v1320
    %1856 = vmatprep.subr.bf16.mxu0 %v1309
    %1857 = vmatpush2.bf16.msra.mxu0 %v1308
    %1858 = vmatprep.subr.bf16.mxu0 %v1297
    %1859 = vmatpush2.bf16.msra.mxu0 %v1296
    %1860 = vmatprep.subr.bf16.mxu0 %v1285
    %1861 = vmatpush2.bf16.msra.mxu0 %v1284
    %1862 = vmatprep.subr.bf16.mxu0 %v1273
    %1863 = vmatpush2.bf16.msra.mxu0 %v1272
    %1864 = vmatprep.mubr.bf16.mxu0 0
    %1865 = vmatmul.mubr.bf16.gmra.mxu0 0
    %v1866 = vpop.f32.mrf.mxu0
    %v1867 = vadd.f32 0.0, %v1866
    %v1868 = vpop.f32.mrf.mxu0
    %v1869 = vadd.f32 0.0, %v1868
    %v1870 = vpop.f32.mrf.mxu0
    %v1871 = vpop.f32.mrf.mxu0
    %1872 = vdwg.mxu0
    %1873 = vmatprep.subr.bf16.mxu0 %v1453
    %1874 = vmatpush1.bf16.msra.mxu0 %v1452
    %1875 = vmatprep.subr.bf16.mxu0 %v1441
    %1876 = vmatpush1.bf16.msra.mxu0 %v1440
    %1877 = vmatprep.subr.bf16.mxu0 %v1429
    %1878 = vmatpush1.bf16.msra.mxu0 %v1428
    %1879 = vmatprep.subr.bf16.mxu0 %v1417
    %1880 = vmatpush1.bf16.msra.mxu0 %v1416
    %1881 = vmatprep.subr.bf16.mxu0 %v1405
    %1882 = vmatpush1.bf16.msra.mxu0 %v1404
    %1883 = vmatprep.subr.bf16.mxu0 %v1393
    %1884 = vmatpush1.bf16.msra.mxu0 %v1392
    %1885 = vmatprep.subr.bf16.mxu0 %v1381
    %1886 = vmatpush1.bf16.msra.mxu0 %v1380
    %1887 = vmatprep.subr.bf16.mxu0 %v1369
    %1888 = vmatpush1.bf16.msra.mxu0 %v1368
    %1889 = vmatprep.subr.bf16.mxu0 0
    %1890 = vmatpush2.bf16.msra.mxu0 0
    %1891 = vmatprep.subr.bf16.mxu0 0
    %1892 = vmatpush2.bf16.msra.mxu0 0
    %1893 = vmatprep.subr.bf16.mxu0 0
    %1894 = vmatpush2.bf16.msra.mxu0 0
    %1895 = vmatprep.subr.bf16.mxu0 0
    %1896 = vmatpush2.bf16.msra.mxu0 0
    %1897 = vmatprep.subr.bf16.mxu0 0
    %1898 = vmatpush2.bf16.msra.mxu0 0
    %1899 = vmatprep.subr.bf16.mxu0 0
    %1900 = vmatpush2.bf16.msra.mxu0 0
    %1901 = vmatprep.subr.bf16.mxu0 0
    %1902 = vmatpush2.bf16.msra.mxu0 0
    %1903 = vmatprep.subr.bf16.mxu0 0
    %1904 = vmatpush2.bf16.msra.mxu0 0
    %1905 = vmatprep.mubr.bf16.mxu0 0
    %1906 = vmatmul.mubr.bf16.gmra.mxu0 0
    %v1907 = vpop.f32.mrf.mxu0
    %v1908 = vadd.f32 %v1867, %v1907
    %v1909 = vpop.f32.mrf.mxu0
    %v1910 = vadd.f32 %v1869, %v1909
    %v1911 = vpop.f32.mrf.mxu0
    %v1912 = vpop.f32.mrf.mxu0
    %1913 = vdwg.mxu0
    %1914 = vmatprep.subr.bf16.mxu0 %v1263
    %1915 = vmatpush1.bf16.msra.mxu0 %v1262
    %1916 = vmatprep.subr.bf16.mxu0 %v1251
    %1917 = vmatpush1.bf16.msra.mxu0 %v1250
    %1918 = vmatprep.subr.bf16.mxu0 %v1239
    %1919 = vmatpush1.bf16.msra.mxu0 %v1238
    %1920 = vmatprep.subr.bf16.mxu0 %v1227
    %1921 = vmatpush1.bf16.msra.mxu0 %v1226
    %1922 = vmatprep.subr.bf16.mxu0 %v1215
    %1923 = vmatpush1.bf16.msra.mxu0 %v1214
    %1924 = vmatprep.subr.bf16.mxu0 %v1203
    %1925 = vmatpush1.bf16.msra.mxu0 %v1202
    %1926 = vmatprep.subr.bf16.mxu0 %v1191
    %1927 = vmatpush1.bf16.msra.mxu0 %v1190
    %1928 = vmatprep.subr.bf16.mxu0 %v1179
    %1929 = vmatpush1.bf16.msra.mxu0 %v1178
    %1930 = vmatprep.subr.bf16.mxu0 %v1359
    %1931 = vmatpush2.bf16.msra.mxu0 %v1358
    %1932 = vmatprep.subr.bf16.mxu0 %v1347
    %1933 = vmatpush2.bf16.msra.mxu0 %v1346
    %1934 = vmatprep.subr.bf16.mxu0 %v1335
    %1935 = vmatpush2.bf16.msra.mxu0 %v1334
    %1936 = vmatprep.subr.bf16.mxu0 %v1323
    %1937 = vmatpush2.bf16.msra.mxu0 %v1322
    %1938 = vmatprep.subr.bf16.mxu0 %v1311
    %1939 = vmatpush2.bf16.msra.mxu0 %v1310
    %1940 = vmatprep.subr.bf16.mxu0 %v1299
    %1941 = vmatpush2.bf16.msra.mxu0 %v1298
    %1942 = vmatprep.subr.bf16.mxu0 %v1287
    %1943 = vmatpush2.bf16.msra.mxu0 %v1286
    %1944 = vmatprep.subr.bf16.mxu0 %v1275
    %1945 = vmatpush2.bf16.msra.mxu0 %v1274
    %1946 = vmatprep.mubr.bf16.mxu0 0
    %1947 = vmatmul.mubr.bf16.gmra.mxu0 0
    %v1948 = vpop.f32.mrf.mxu0
    %v1949 = vadd.f32 0.0, %v1948
    %v1950 = vpop.f32.mrf.mxu0
    %v1951 = vadd.f32 0.0, %v1950
    %v1952 = vpop.f32.mrf.mxu0
    %v1953 = vpop.f32.mrf.mxu0
    %1954 = vdwg.mxu0
    %1955 = vmatprep.subr.bf16.mxu0 %v1455
    %1956 = vmatpush1.bf16.msra.mxu0 %v1454
    %1957 = vmatprep.subr.bf16.mxu0 %v1443
    %1958 = vmatpush1.bf16.msra.mxu0 %v1442
    %1959 = vmatprep.subr.bf16.mxu0 %v1431
    %1960 = vmatpush1.bf16.msra.mxu0 %v1430
    %1961 = vmatprep.subr.bf16.mxu0 %v1419
    %1962 = vmatpush1.bf16.msra.mxu0 %v1418
    %1963 = vmatprep.subr.bf16.mxu0 %v1407
    %1964 = vmatpush1.bf16.msra.mxu0 %v1406
    %1965 = vmatprep.subr.bf16.mxu0 %v1395
    %1966 = vmatpush1.bf16.msra.mxu0 %v1394
    %1967 = vmatprep.subr.bf16.mxu0 %v1383
    %1968 = vmatpush1.bf16.msra.mxu0 %v1382
    %1969 = vmatprep.subr.bf16.mxu0 %v1371
    %1970 = vmatpush1.bf16.msra.mxu0 %v1370
    %1971 = vmatprep.subr.bf16.mxu0 0
    %1972 = vmatpush2.bf16.msra.mxu0 0
    %1973 = vmatprep.subr.bf16.mxu0 0
    %1974 = vmatpush2.bf16.msra.mxu0 0
    %1975 = vmatprep.subr.bf16.mxu0 0
    %1976 = vmatpush2.bf16.msra.mxu0 0
    %1977 = vmatprep.subr.bf16.mxu0 0
    %1978 = vmatpush2.bf16.msra.mxu0 0
    %1979 = vmatprep.subr.bf16.mxu0 0
    %1980 = vmatpush2.bf16.msra.mxu0 0
    %1981 = vmatprep.subr.bf16.mxu0 0
    %1982 = vmatpush2.bf16.msra.mxu0 0
    %1983 = vmatprep.subr.bf16.mxu0 0
    %1984 = vmatpush2.bf16.msra.mxu0 0
    %1985 = vmatprep.subr.bf16.mxu0 0
    %1986 = vmatpush2.bf16.msra.mxu0 0
    %1987 = vmatprep.mubr.bf16.mxu0 0
    %1988 = vmatmul.mubr.bf16.gmra.mxu0 0
    %v1989 = vpop.f32.mrf.mxu0
    %v1990 = vadd.f32 %v1949, %v1989
    %v1991 = vpop.f32.mrf.mxu0
    %v1992 = vadd.f32 %v1951, %v1991
    %v1993 = vpop.f32.mrf.mxu0
    %v1994 = vpop.f32.mrf.mxu0
    %1995 = vdwg.mxu0
    %1996 = vmatprep.subr.bf16.mxu0 %v1265
    %1997 = vmatpush1.bf16.msra.mxu0 %v1264
    %1998 = vmatprep.subr.bf16.mxu0 %v1253
    %1999 = vmatpush1.bf16.msra.mxu0 %v1252
    %2000 = vmatprep.subr.bf16.mxu0 %v1241
    %2001 = vmatpush1.bf16.msra.mxu0 %v1240
    %2002 = vmatprep.subr.bf16.mxu0 %v1229
    %2003 = vmatpush1.bf16.msra.mxu0 %v1228
    %2004 = vmatprep.subr.bf16.mxu0 %v1217
    %2005 = vmatpush1.bf16.msra.mxu0 %v1216
    %2006 = vmatprep.subr.bf16.mxu0 %v1205
    %2007 = vmatpush1.bf16.msra.mxu0 %v1204
    %2008 = vmatprep.subr.bf16.mxu0 %v1193
    %2009 = vmatpush1.bf16.msra.mxu0 %v1192
    %2010 = vmatprep.subr.bf16.mxu0 %v1181
    %2011 = vmatpush1.bf16.msra.mxu0 %v1180
    %2012 = vmatprep.subr.bf16.mxu0 %v1361
    %2013 = vmatpush2.bf16.msra.mxu0 %v1360
    %2014 = vmatprep.subr.bf16.mxu0 %v1349
    %2015 = vmatpush2.bf16.msra.mxu0 %v1348
    %2016 = vmatprep.subr.bf16.mxu0 %v1337
    %2017 = vmatpush2.bf16.msra.mxu0 %v1336
    %2018 = vmatprep.subr.bf16.mxu0 %v1325
    %2019 = vmatpush2.bf16.msra.mxu0 %v1324
    %2020 = vmatprep.subr.bf16.mxu0 %v1313
    %2021 = vmatpush2.bf16.msra.mxu0 %v1312
    %2022 = vmatprep.subr.bf16.mxu0 %v1301
    %2023 = vmatpush2.bf16.msra.mxu0 %v1300
    %2024 = vmatprep.subr.bf16.mxu0 %v1289
    %2025 = vmatpush2.bf16.msra.mxu0 %v1288
    %2026 = vmatprep.subr.bf16.mxu0 %v1277
    %2027 = vmatpush2.bf16.msra.mxu0 %v1276
    %2028 = vmatprep.mubr.bf16.mxu0 0
    %2029 = vmatmul.mubr.bf16.gmra.mxu0 0
    %v2030 = vpop.f32.mrf.mxu0
    %v2031 = vadd.f32 0.0, %v2030
    %v2032 = vpop.f32.mrf.mxu0
    %v2033 = vadd.f32 0.0, %v2032
    %v2034 = vpop.f32.mrf.mxu0
    %v2035 = vpop.f32.mrf.mxu0
    %2036 = vdwg.mxu0
    %2037 = vmatprep.subr.bf16.mxu0 %v1457
    %2038 = vmatpush1.bf16.msra.mxu0 %v1456
    %2039 = vmatprep.subr.bf16.mxu0 %v1445
    %2040 = vmatpush1.bf16.msra.mxu0 %v1444
    %2041 = vmatprep.subr.bf16.mxu0 %v1433
    %2042 = vmatpush1.bf16.msra.mxu0 %v1432
    %2043 = vmatprep.subr.bf16.mxu0 %v1421
    %2044 = vmatpush1.bf16.msra.mxu0 %v1420
    %2045 = vmatprep.subr.bf16.mxu0 %v1409
    %2046 = vmatpush1.bf16.msra.mxu0 %v1408
    %2047 = vmatprep.subr.bf16.mxu0 %v1397
    %2048 = vmatpush1.bf16.msra.mxu0 %v1396
    %2049 = vmatprep.subr.bf16.mxu0 %v1385
    %2050 = vmatpush1.bf16.msra.mxu0 %v1384
    %2051 = vmatprep.subr.bf16.mxu0 %v1373
    %2052 = vmatpush1.bf16.msra.mxu0 %v1372
    %2053 = vmatprep.subr.bf16.mxu0 0
    %2054 = vmatpush2.bf16.msra.mxu0 0
    %2055 = vmatprep.subr.bf16.mxu0 0
    %2056 = vmatpush2.bf16.msra.mxu0 0
    %2057 = vmatprep.subr.bf16.mxu0 0
    %2058 = vmatpush2.bf16.msra.mxu0 0
    %2059 = vmatprep.subr.bf16.mxu0 0
    %2060 = vmatpush2.bf16.msra.mxu0 0
    %2061 = vmatprep.subr.bf16.mxu0 0
    %2062 = vmatpush2.bf16.msra.mxu0 0
    %2063 = vmatprep.subr.bf16.mxu0 0
    %2064 = vmatpush2.bf16.msra.mxu0 0
    %2065 = vmatprep.subr.bf16.mxu0 0
    %2066 = vmatpush2.bf16.msra.mxu0 0
    %2067 = vmatprep.subr.bf16.mxu0 0
    %2068 = vmatpush2.bf16.msra.mxu0 0
    %2069 = vmatprep.mubr.bf16.mxu0 0
    %2070 = vmatmul.mubr.bf16.gmra.mxu0 0
    %v2071 = vpop.f32.mrf.mxu0
    %v2072 = vadd.f32 %v2031, %v2071
    %v2073 = vpop.f32.mrf.mxu0
    %v2074 = vadd.f32 %v2033, %v2073
    %v2075 = vpop.f32.mrf.mxu0
    %v2076 = vpop.f32.mrf.mxu0
    %2077 = vdwg.mxu0
    %2078 = vmatprep.subr.bf16.mxu0 %v1267
    %2079 = vmatpush1.bf16.msra.mxu0 %v1266
    %2080 = vmatprep.subr.bf16.mxu0 %v1255
    %2081 = vmatpush1.bf16.msra.mxu0 %v1254
    %2082 = vmatprep.subr.bf16.mxu0 %v1243
    %2083 = vmatpush1.bf16.msra.mxu0 %v1242
    %2084 = vmatprep.subr.bf16.mxu0 %v1231
    %2085 = vmatpush1.bf16.msra.mxu0 %v1230
    %2086 = vmatprep.subr.bf16.mxu0 %v1219
    %2087 = vmatpush1.bf16.msra.mxu0 %v1218
    %2088 = vmatprep.subr.bf16.mxu0 %v1207
    %2089 = vmatpush1.bf16.msra.mxu0 %v1206
    %2090 = vmatprep.subr.bf16.mxu0 %v1195
    %2091 = vmatpush1.bf16.msra.mxu0 %v1194
    %2092 = vmatprep.subr.bf16.mxu0 %v1183
    %2093 = vmatpush1.bf16.msra.mxu0 %v1182
    %2094 = vmatprep.subr.bf16.mxu0 %v1363
    %2095 = vmatpush2.bf16.msra.mxu0 %v1362
    %2096 = vmatprep.subr.bf16.mxu0 %v1351
    %2097 = vmatpush2.bf16.msra.mxu0 %v1350
    %2098 = vmatprep.subr.bf16.mxu0 %v1339
    %2099 = vmatpush2.bf16.msra.mxu0 %v1338
    %2100 = vmatprep.subr.bf16.mxu0 %v1327
    %2101 = vmatpush2.bf16.msra.mxu0 %v1326
    %2102 = vmatprep.subr.bf16.mxu0 %v1315
    %2103 = vmatpush2.bf16.msra.mxu0 %v1314
    %2104 = vmatprep.subr.bf16.mxu0 %v1303
    %2105 = vmatpush2.bf16.msra.mxu0 %v1302
    %2106 = vmatprep.subr.bf16.mxu0 %v1291
    %2107 = vmatpush2.bf16.msra.mxu0 %v1290
    %2108 = vmatprep.subr.bf16.mxu0 %v1279
    %2109 = vmatpush2.bf16.msra.mxu0 %v1278
    %2110 = vmatprep.mubr.bf16.mxu0 0
    %2111 = vmatmul.mubr.bf16.gmra.mxu0 0
    %v2112 = vpop.f32.mrf.mxu0
    %v2113 = vadd.f32 0.0, %v2112
    %v2114 = vpop.f32.mrf.mxu0
    %v2115 = vadd.f32 0.0, %v2114
    %v2116 = vpop.f32.mrf.mxu0
    %v2117 = vpop.f32.mrf.mxu0
    %2118 = vdwg.mxu0
    %2119 = vmatprep.subr.bf16.mxu0 %v1459
    %2120 = vmatpush1.bf16.msra.mxu0 %v1458
    %2121 = vmatprep.subr.bf16.mxu0 %v1447
    %2122 = vmatpush1.bf16.msra.mxu0 %v1446
    %2123 = vmatprep.subr.bf16.mxu0 %v1435
    %2124 = vmatpush1.bf16.msra.mxu0 %v1434
    %2125 = vmatprep.subr.bf16.mxu0 %v1423
    %2126 = vmatpush1.bf16.msra.mxu0 %v1422
    %2127 = vmatprep.subr.bf16.mxu0 %v1411
    %2128 = vmatpush1.bf16.msra.mxu0 %v1410
    %2129 = vmatprep.subr.bf16.mxu0 %v1399
    %2130 = vmatpush1.bf16.msra.mxu0 %v1398
    %2131 = vmatprep.subr.bf16.mxu0 %v1387
    %2132 = vmatpush1.bf16.msra.mxu0 %v1386
    %2133 = vmatprep.subr.bf16.mxu0 %v1375
    %2134 = vmatpush1.bf16.msra.mxu0 %v1374
    %2135 = vmatprep.subr.bf16.mxu0 0
    %2136 = vmatpush2.bf16.msra.mxu0 0
    %2137 = vmatprep.subr.bf16.mxu0 0
    %2138 = vmatpush2.bf16.msra.mxu0 0
    %2139 = vmatprep.subr.bf16.mxu0 0
    %2140 = vmatpush2.bf16.msra.mxu0 0
    %2141 = vmatprep.subr.bf16.mxu0 0
    %2142 = vmatpush2.bf16.msra.mxu0 0
    %2143 = vmatprep.subr.bf16.mxu0 0
    %2144 = vmatpush2.bf16.msra.mxu0 0
    %2145 = vmatprep.subr.bf16.mxu0 0
    %2146 = vmatpush2.bf16.msra.mxu0 0
    %2147 = vmatprep.subr.bf16.mxu0 0
    %2148 = vmatpush2.bf16.msra.mxu0 0
    %2149 = vmatprep.subr.bf16.mxu0 0
    %2150 = vmatpush2.bf16.msra.mxu0 0
    %2151 = vmatprep.mubr.bf16.mxu0 0
    %2152 = vmatmul.mubr.bf16.gmra.mxu0 0
    %v2153 = vpop.f32.mrf.mxu0
    %v2154 = vadd.f32 %v2113, %v2153
    %v2155 = vpop.f32.mrf.mxu0
    %v2156 = vadd.f32 %v2115, %v2155
    %v2157 = vpop.f32.mrf.mxu0
    %v2158 = vpop.f32.mrf.mxu0
    %2159 = vdwg.mxu0
    %2160 = vmatprep.subr.bf16.mxu0 %v1269
    %2161 = vmatpush1.bf16.msra.mxu0 %v1268
    %2162 = vmatprep.subr.bf16.mxu0 %v1257
    %2163 = vmatpush1.bf16.msra.mxu0 %v1256
    %2164 = vmatprep.subr.bf16.mxu0 %v1245
    %2165 = vmatpush1.bf16.msra.mxu0 %v1244
    %2166 = vmatprep.subr.bf16.mxu0 %v1233
    %2167 = vmatpush1.bf16.msra.mxu0 %v1232
    %2168 = vmatprep.subr.bf16.mxu0 %v1221
    %2169 = vmatpush1.bf16.msra.mxu0 %v1220
    %2170 = vmatprep.subr.bf16.mxu0 %v1209
    %2171 = vmatpush1.bf16.msra.mxu0 %v1208
    %2172 = vmatprep.subr.bf16.mxu0 %v1197
    %2173 = vmatpush1.bf16.msra.mxu0 %v1196
    %2174 = vmatprep.subr.bf16.mxu0 %v1185
    %2175 = vmatpush1.bf16.msra.mxu0 %v1184
    %2176 = vmatprep.subr.bf16.mxu0 %v1365
    %2177 = vmatpush2.bf16.msra.mxu0 %v1364
    %2178 = vmatprep.subr.bf16.mxu0 %v1353
    %2179 = vmatpush2.bf16.msra.mxu0 %v1352
    %2180 = vmatprep.subr.bf16.mxu0 %v1341
    %2181 = vmatpush2.bf16.msra.mxu0 %v1340
    %2182 = vmatprep.subr.bf16.mxu0 %v1329
    %2183 = vmatpush2.bf16.msra.mxu0 %v1328
    %2184 = vmatprep.subr.bf16.mxu0 %v1317
    %2185 = vmatpush2.bf16.msra.mxu0 %v1316
    %2186 = vmatprep.subr.bf16.mxu0 %v1305
    %2187 = vmatpush2.bf16.msra.mxu0 %v1304
    %2188 = vmatprep.subr.bf16.mxu0 %v1293
    %2189 = vmatpush2.bf16.msra.mxu0 %v1292
    %2190 = vmatprep.subr.bf16.mxu0 %v1281
    %2191 = vmatpush2.bf16.msra.mxu0 %v1280
    %2192 = vmatprep.mubr.bf16.mxu0 0
    %2193 = vmatmul.mubr.bf16.gmra.mxu0 0
    %v2194 = vpop.f32.mrf.mxu0
    %v2195 = vadd.f32 0.0, %v2194
    %v2196 = vpop.f32.mrf.mxu0
    %v2197 = vadd.f32 0.0, %v2196
    %v2198 = vpop.f32.mrf.mxu0
    %v2199 = vpop.f32.mrf.mxu0
    %2200 = vdwg.mxu0
    %2201 = vmatprep.subr.bf16.mxu0 %v1461
    %2202 = vmatpush1.bf16.msra.mxu0 %v1460
    %2203 = vmatprep.subr.bf16.mxu0 %v1449
    %2204 = vmatpush1.bf16.msra.mxu0 %v1448
    %2205 = vmatprep.subr.bf16.mxu0 %v1437
    %2206 = vmatpush1.bf16.msra.mxu0 %v1436
    %2207 = vmatprep.subr.bf16.mxu0 %v1425
    %2208 = vmatpush1.bf16.msra.mxu0 %v1424
    %2209 = vmatprep.subr.bf16.mxu0 %v1413
    %2210 = vmatpush1.bf16.msra.mxu0 %v1412
    %2211 = vmatprep.subr.bf16.mxu0 %v1401
    %2212 = vmatpush1.bf16.msra.mxu0 %v1400
    %2213 = vmatprep.subr.bf16.mxu0 %v1389
    %2214 = vmatpush1.bf16.msra.mxu0 %v1388
    %2215 = vmatprep.subr.bf16.mxu0 %v1377
    %2216 = vmatpush1.bf16.msra.mxu0 %v1376
    %2217 = vmatprep.subr.bf16.mxu0 0
    %2218 = vmatpush2.bf16.msra.mxu0 0
    %2219 = vmatprep.subr.bf16.mxu0 0
    %2220 = vmatpush2.bf16.msra.mxu0 0
    %2221 = vmatprep.subr.bf16.mxu0 0
    %2222 = vmatpush2.bf16.msra.mxu0 0
    %2223 = vmatprep.subr.bf16.mxu0 0
    %2224 = vmatpush2.bf16.msra.mxu0 0
    %2225 = vmatprep.subr.bf16.mxu0 0
    %2226 = vmatpush2.bf16.msra.mxu0 0
    %2227 = vmatprep.subr.bf16.mxu0 0
    %2228 = vmatpush2.bf16.msra.mxu0 0
    %2229 = vmatprep.subr.bf16.mxu0 0
    %2230 = vmatpush2.bf16.msra.mxu0 0
    %2231 = vmatprep.subr.bf16.mxu0 0
    %2232 = vmatpush2.bf16.msra.mxu0 0
    %2233 = vmatprep.mubr.bf16.mxu0 0
    %2234 = vmatmul.mubr.bf16.gmra.mxu0 0
    %v2235 = vpop.f32.mrf.mxu0
    %v2236 = vadd.f32 %v2195, %v2235
    %v2237 = vpop.f32.mrf.mxu0
    %v2238 = vadd.f32 %v2197, %v2237
    %v2239 = vpop.f32.mrf.mxu0
    %v2240 = vpop.f32.mrf.mxu0
    %2241 = vdwg.mxu0
    %v2254 = vcombine.low %v1826, %v1828
    %v2255 = vcombine.low %v1908, %v1910
    %v2257 = vunpack.c.l.s4 1983009808
    %v2258 = vunpack.c.0.s8 %v2257
    %v2259 = vlaneseq
    %v2260 = vshrl.u32 %v2259, 7
    %v2261 = vsub.s32 %v2258, %v2260
    %v2262 = vrot.slane %v2254, %v2261
    %v2264 = vunpack.c.l.s4 1983009808
    %v2265 = vunpack.c.0.s8 %v2264
    %v2266 = vlaneseq
    %v2267 = vshrl.u32 %v2266, 7
    %v2268 = vsub.s32 %v2265, %v2267
    %v2269 = vrot.slane %v2255, %v2268
    %v2270 = vcombine.low %v2262, %v2269
    %v2271 = vcombine.low %v1990, %v1992
    %v2272 = vcombine.low %v2072, %v2074
    %v2274 = vunpack.c.l.s4 1983009808
    %v2275 = vunpack.c.0.s8 %v2274
    %v2276 = vlaneseq
    %v2277 = vshrl.u32 %v2276, 7
    %v2278 = vsub.s32 %v2275, %v2277
    %v2279 = vrot.slane %v2271, %v2278
    %v2281 = vunpack.c.l.s4 1983009808
    %v2282 = vunpack.c.0.s8 %v2281
    %v2283 = vlaneseq
    %v2284 = vshrl.u32 %v2283, 7
    %v2285 = vsub.s32 %v2282, %v2284
    %v2286 = vrot.slane %v2272, %v2285
    %v2287 = vcombine.low %v2279, %v2286
    %v2288 = vcombine.low %v2154, %v2156
    %v2289 = vcombine.low %v2236, %v2238
    %v2291 = vunpack.c.l.s4 1983009808
    %v2292 = vunpack.c.0.s8 %v2291
    %v2293 = vlaneseq
    %v2294 = vshrl.u32 %v2293, 7
    %v2295 = vsub.s32 %v2292, %v2294
    %v2296 = vrot.slane %v2288, %v2295
    %v2298 = vunpack.c.l.s4 1983009808
    %v2299 = vunpack.c.0.s8 %v2298
    %v2300 = vlaneseq
    %v2301 = vshrl.u32 %v2300, 7
    %v2302 = vsub.s32 %v2299, %v2301
    %v2303 = vrot.slane %v2289, %v2302
    %v2304 = vcombine.low %v2296, %v2303
    %v2308 = vadd.f32 %v307, %v2270
    %v2309 = vadd.f32 %v308, %v2287
    %v2310 = vadd.f32 %v309, %v2304
    %v2311 = vxor.u32 %v2308, 2147483648
    %v2312 = vmul.f32 %v2311, 1.442695
    %v2313 = vpow.pop %v2312
    %v2314 = vadd.f32 %v2313, 1.0
    %v2315 = vrcp.pop %v2314
    %v2316 = vmul.f32 1.0, %v2315
    %v2319 = vrot.slane %v2308, 6
    %v2320 = vrot.slane %v2309, 6
    %vm2321 = vcmask 1041408
    %v2322 = vsel %vm2321, %v2319, %v2320
    %v2324 = vxor.u32 %v2322, 2147483648
    %v2325 = vmul.f32 %v2324, 1.442695
    %v2326 = vpow.pop %v2325
    %v2327 = vadd.f32 %v2326, 1.0
    %v2328 = vrcp.pop %v2327
    %v2329 = vmul.f32 1.0, %v2328
    %v2331 = vrot.slane %v2309, 4
    %v2332 = vrot.slane %v2310, 4
    %vm2333 = vcmask 1043456
    %v2334 = vsel %vm2333, %v2331, %v2332
    %v2336 = vtanh.pop %v2334
    %v2337 = vrot.slane %v2310, 2
    %v2339 = vxor.u32 %v2337, 2147483648
    %v2340 = vmul.f32 %v2339, 1.442695
    %v2341 = vpow.pop %v2340
    %v2342 = vadd.f32 %v2341, 1.0
    %v2343 = vrcp.pop %v2342
    %v2344 = vmul.f32 1.0, %v2343
    %v2345 = vmul.f32 %v2329, 0.0
    %v2346 = vmul.f32 %v2316, %v2336
    %v2347 = vadd.f32 %v2345, %v2346
    %v2348 = vtanh.pop %v2347
    %v2349 = vmul.f32 %v2344, %v2348
    %v2350 = vld [vmem:[%s0 + $0x18] sm:$0xff]
    %v2351 = vld [vmem:[%s0 + $0x20] sm:$0xff]
    %v2352 = vld [vmem:[%s0 + $0x28] sm:$0xff]
    %v2354 = vcombine.high %v2349, %v2349
    %v2356 = vunpack.c.l.s4 1983009808
    %v2357 = vunpack.c.0.s8 %v2356
    %v2358 = vlaneseq
    %v2359 = vshrl.u32 %v2358, 7
    %v2360 = vsub.s32 %v2357, %v2359
    %v2361 = vrot.slane %v2349, %v2360
    %v2363 = vunpack.c.l.s4 1983009808
    %v2364 = vunpack.c.0.s8 %v2363
    %v2365 = vlaneseq
    %v2366 = vshrl.u32 %v2365, 7
    %v2367 = vsub.s32 %v2364, %v2366
    %v2368 = vrot.slane %v2354, %v2367
    %v2369 = vcombine.high %v2361, %v2361
    %v2373 = vpack.c.bf16 %v2361, %v2361
    %v2374 = vpack.c.bf16 %v2369, %v2369
    %v2375 = vpack.c.bf16 %v2368, %v2368
    %2376 = vmatprep.subr.bf16.mxu0 %v1259
    %2377 = vmatpush1.bf16.msra.mxu0 %v1258
    %2378 = vmatprep.subr.bf16.mxu0 %v1247
    %2379 = vmatpush1.bf16.msra.mxu0 %v1246
    %2380 = vmatprep.subr.bf16.mxu0 %v1235
    %2381 = vmatpush1.bf16.msra.mxu0 %v1234
    %2382 = vmatprep.subr.bf16.mxu0 %v1223
    %2383 = vmatpush1.bf16.msra.mxu0 %v1222
    %2384 = vmatprep.subr.bf16.mxu0 %v1211
    %2385 = vmatpush1.bf16.msra.mxu0 %v1210
    %2386 = vmatprep.subr.bf16.mxu0 %v1199
    %2387 = vmatpush1.bf16.msra.mxu0 %v1198
    %2388 = vmatprep.subr.bf16.mxu0 %v1187
    %2389 = vmatpush1.bf16.msra.mxu0 %v1186
    %2390 = vmatprep.subr.bf16.mxu0 %v1175
    %2391 = vmatpush1.bf16.msra.mxu0 %v1174
    %2392 = vmatprep.subr.bf16.mxu0 %v1355
    %2393 = vmatpush2.bf16.msra.mxu0 %v1354
    %2394 = vmatprep.subr.bf16.mxu0 %v1343
    %2395 = vmatpush2.bf16.msra.mxu0 %v1342
    %2396 = vmatprep.subr.bf16.mxu0 %v1331
    %2397 = vmatpush2.bf16.msra.mxu0 %v1330
    %2398 = vmatprep.subr.bf16.mxu0 %v1319
    %2399 = vmatpush2.bf16.msra.mxu0 %v1318
    %2400 = vmatprep.subr.bf16.mxu0 %v1307
    %2401 = vmatpush2.bf16.msra.mxu0 %v1306
    %2402 = vmatprep.subr.bf16.mxu0 %v1295
    %2403 = vmatpush2.bf16.msra.mxu0 %v1294
    %2404 = vmatprep.subr.bf16.mxu0 %v1283
    %2405 = vmatpush2.bf16.msra.mxu0 %v1282
    %2406 = vmatprep.subr.bf16.mxu0 %v1271
    %2407 = vmatpush2.bf16.msra.mxu0 %v1270
    %2408 = vmatprep.mubr.bf16.mxu0 %v2374
    %2409 = vmatmul.mubr.bf16.gmra.mxu0 %v2373
    %v2410 = vpop.f32.mrf.mxu0
    %v2411 = vadd.f32 0.0, %v2410
    %v2412 = vpop.f32.mrf.mxu0
    %v2413 = vadd.f32 0.0, %v2412
    %v2414 = vpop.f32.mrf.mxu0
    %v2415 = vpop.f32.mrf.mxu0
    %2416 = vdwg.mxu0
    %2417 = vmatprep.subr.bf16.mxu0 %v1451
    %2418 = vmatpush1.bf16.msra.mxu0 %v1450
    %2419 = vmatprep.subr.bf16.mxu0 %v1439
    %2420 = vmatpush1.bf16.msra.mxu0 %v1438
    %2421 = vmatprep.subr.bf16.mxu0 %v1427
    %2422 = vmatpush1.bf16.msra.mxu0 %v1426
    %2423 = vmatprep.subr.bf16.mxu0 %v1415
    %2424 = vmatpush1.bf16.msra.mxu0 %v1414
    %2425 = vmatprep.subr.bf16.mxu0 %v1403
    %2426 = vmatpush1.bf16.msra.mxu0 %v1402
    %2427 = vmatprep.subr.bf16.mxu0 %v1391
    %2428 = vmatpush1.bf16.msra.mxu0 %v1390
    %2429 = vmatprep.subr.bf16.mxu0 %v1379
    %2430 = vmatpush1.bf16.msra.mxu0 %v1378
    %2431 = vmatprep.subr.bf16.mxu0 %v1367
    %2432 = vmatpush1.bf16.msra.mxu0 %v1366
    %2433 = vmatprep.subr.bf16.mxu0 0
    %2434 = vmatpush2.bf16.msra.mxu0 0
    %2435 = vmatprep.subr.bf16.mxu0 0
    %2436 = vmatpush2.bf16.msra.mxu0 0
    %2437 = vmatprep.subr.bf16.mxu0 0
    %2438 = vmatpush2.bf16.msra.mxu0 0
    %2439 = vmatprep.subr.bf16.mxu0 0
    %2440 = vmatpush2.bf16.msra.mxu0 0
    %2441 = vmatprep.subr.bf16.mxu0 0
    %2442 = vmatpush2.bf16.msra.mxu0 0
    %2443 = vmatprep.subr.bf16.mxu0 0
    %2444 = vmatpush2.bf16.msra.mxu0 0
    %2445 = vmatprep.subr.bf16.mxu0 0
    %2446 = vmatpush2.bf16.msra.mxu0 0
    %2447 = vmatprep.subr.bf16.mxu0 0
    %2448 = vmatpush2.bf16.msra.mxu0 0
    %2449 = vmatprep.mubr.bf16.mxu0 0
    %2450 = vmatmul.mubr.bf16.gmra.mxu0 %v2375
    %v2451 = vpop.f32.mrf.mxu0
    %v2452 = vadd.f32 %v2411, %v2451
    %v2453 = vpop.f32.mrf.mxu0
    %v2454 = vadd.f32 %v2413, %v2453
    %v2455 = vpop.f32.mrf.mxu0
    %v2456 = vpop.f32.mrf.mxu0
    %2457 = vdwg.mxu0
    %2458 = vmatprep.subr.bf16.mxu0 %v1261
    %2459 = vmatpush1.bf16.msra.mxu0 %v1260
    %2460 = vmatprep.subr.bf16.mxu0 %v1249
    %2461 = vmatpush1.bf16.msra.mxu0 %v1248
    %2462 = vmatprep.subr.bf16.mxu0 %v1237
    %2463 = vmatpush1.bf16.msra.mxu0 %v1236
    %2464 = vmatprep.subr.bf16.mxu0 %v1225
    %2465 = vmatpush1.bf16.msra.mxu0 %v1224
    %2466 = vmatprep.subr.bf16.mxu0 %v1213
    %2467 = vmatpush1.bf16.msra.mxu0 %v1212
    %2468 = vmatprep.subr.bf16.mxu0 %v1201
    %2469 = vmatpush1.bf16.msra.mxu0 %v1200
    %2470 = vmatprep.subr.bf16.mxu0 %v1189
    %2471 = vmatpush1.bf16.msra.mxu0 %v1188
    %2472 = vmatprep.subr.bf16.mxu0 %v1177
    %2473 = vmatpush1.bf16.msra.mxu0 %v1176
    %2474 = vmatprep.subr.bf16.mxu0 %v1357
    %2475 = vmatpush2.bf16.msra.mxu0 %v1356
    %2476 = vmatprep.subr.bf16.mxu0 %v1345
    %2477 = vmatpush2.bf16.msra.mxu0 %v1344
    %2478 = vmatprep.subr.bf16.mxu0 %v1333
    %2479 = vmatpush2.bf16.msra.mxu0 %v1332
    %2480 = vmatprep.subr.bf16.mxu0 %v1321
    %2481 = vmatpush2.bf16.msra.mxu0 %v1320
    %2482 = vmatprep.subr.bf16.mxu0 %v1309
    %2483 = vmatpush2.bf16.msra.mxu0 %v1308
    %2484 = vmatprep.subr.bf16.mxu0 %v1297
    %2485 = vmatpush2.bf16.msra.mxu0 %v1296
    %2486 = vmatprep.subr.bf16.mxu0 %v1285
    %2487 = vmatpush2.bf16.msra.mxu0 %v1284
    %2488 = vmatprep.subr.bf16.mxu0 %v1273
    %2489 = vmatpush2.bf16.msra.mxu0 %v1272
    %2490 = vmatprep.mubr.bf16.mxu0 %v2374
    %2491 = vmatmul.mubr.bf16.gmra.mxu0 %v2373
    %v2492 = vpop.f32.mrf.mxu0
    %v2493 = vadd.f32 0.0, %v2492
    %v2494 = vpop.f32.mrf.mxu0
    %v2495 = vadd.f32 0.0, %v2494
    %v2496 = vpop.f32.mrf.mxu0
    %v2497 = vpop.f32.mrf.mxu0
    %2498 = vdwg.mxu0
    %2499 = vmatprep.subr.bf16.mxu0 %v1453
    %2500 = vmatpush1.bf16.msra.mxu0 %v1452
    %2501 = vmatprep.subr.bf16.mxu0 %v1441
    %2502 = vmatpush1.bf16.msra.mxu0 %v1440
    %2503 = vmatprep.subr.bf16.mxu0 %v1429
    %2504 = vmatpush1.bf16.msra.mxu0 %v1428
    %2505 = vmatprep.subr.bf16.mxu0 %v1417
    %2506 = vmatpush1.bf16.msra.mxu0 %v1416
    %2507 = vmatprep.subr.bf16.mxu0 %v1405
    %2508 = vmatpush1.bf16.msra.mxu0 %v1404
    %2509 = vmatprep.subr.bf16.mxu0 %v1393
    %2510 = vmatpush1.bf16.msra.mxu0 %v1392
    %2511 = vmatprep.subr.bf16.mxu0 %v1381
    %2512 = vmatpush1.bf16.msra.mxu0 %v1380
    %2513 = vmatprep.subr.bf16.mxu0 %v1369
    %2514 = vmatpush1.bf16.msra.mxu0 %v1368
    %2515 = vmatprep.subr.bf16.mxu0 0
    %2516 = vmatpush2.bf16.msra.mxu0 0
    %2517 = vmatprep.subr.bf16.mxu0 0
    %2518 = vmatpush2.bf16.msra.mxu0 0
    %2519 = vmatprep.subr.bf16.mxu0 0
    %2520 = vmatpush2.bf16.msra.mxu0 0
    %2521 = vmatprep.subr.bf16.mxu0 0
    %2522 = vmatpush2.bf16.msra.mxu0 0
    %2523 = vmatprep.subr.bf16.mxu0 0
    %2524 = vmatpush2.bf16.msra.mxu0 0
    %2525 = vmatprep.subr.bf16.mxu0 0
    %2526 = vmatpush2.bf16.msra.mxu0 0
    %2527 = vmatprep.subr.bf16.mxu0 0
    %2528 = vmatpush2.bf16.msra.mxu0 0
    %2529 = vmatprep.subr.bf16.mxu0 0
    %2530 = vmatpush2.bf16.msra.mxu0 0
    %2531 = vmatprep.mubr.bf16.mxu0 0
    %2532 = vmatmul.mubr.bf16.gmra.mxu0 %v2375
    %v2533 = vpop.f32.mrf.mxu0
    %v2534 = vadd.f32 %v2493, %v2533
    %v2535 = vpop.f32.mrf.mxu0
    %v2536 = vadd.f32 %v2495, %v2535
    %v2537 = vpop.f32.mrf.mxu0
    %v2538 = vpop.f32.mrf.mxu0
    %2539 = vdwg.mxu0
    %2540 = vmatprep.subr.bf16.mxu0 %v1263
    %2541 = vmatpush1.bf16.msra.mxu0 %v1262
    %2542 = vmatprep.subr.bf16.mxu0 %v1251
    %2543 = vmatpush1.bf16.msra.mxu0 %v1250
    %2544 = vmatprep.subr.bf16.mxu0 %v1239
    %2545 = vmatpush1.bf16.msra.mxu0 %v1238
    %2546 = vmatprep.subr.bf16.mxu0 %v1227
    %2547 = vmatpush1.bf16.msra.mxu0 %v1226
    %2548 = vmatprep.subr.bf16.mxu0 %v1215
    %2549 = vmatpush1.bf16.msra.mxu0 %v1214
    %2550 = vmatprep.subr.bf16.mxu0 %v1203
    %2551 = vmatpush1.bf16.msra.mxu0 %v1202
    %2552 = vmatprep.subr.bf16.mxu0 %v1191
    %2553 = vmatpush1.bf16.msra.mxu0 %v1190
    %2554 = vmatprep.subr.bf16.mxu0 %v1179
    %2555 = vmatpush1.bf16.msra.mxu0 %v1178
    %2556 = vmatprep.subr.bf16.mxu0 %v1359
    %2557 = vmatpush2.bf16.msra.mxu0 %v1358
    %2558 = vmatprep.subr.bf16.mxu0 %v1347
    %2559 = vmatpush2.bf16.msra.mxu0 %v1346
    %2560 = vmatprep.subr.bf16.mxu0 %v1335
    %2561 = vmatpush2.bf16.msra.mxu0 %v1334
    %2562 = vmatprep.subr.bf16.mxu0 %v1323
    %2563 = vmatpush2.bf16.msra.mxu0 %v1322
    %2564 = vmatprep.subr.bf16.mxu0 %v1311
    %2565 = vmatpush2.bf16.msra.mxu0 %v1310
    %2566 = vmatprep.subr.bf16.mxu0 %v1299
    %2567 = vmatpush2.bf16.msra.mxu0 %v1298
    %2568 = vmatprep.subr.bf16.mxu0 %v1287
    %2569 = vmatpush2.bf16.msra.mxu0 %v1286
    %2570 = vmatprep.subr.bf16.mxu0 %v1275
    %2571 = vmatpush2.bf16.msra.mxu0 %v1274
    %2572 = vmatprep.mubr.bf16.mxu0 %v2374
    %2573 = vmatmul.mubr.bf16.gmra.mxu0 %v2373
    %v2574 = vpop.f32.mrf.mxu0
    %v2575 = vadd.f32 0.0, %v2574
    %v2576 = vpop.f32.mrf.mxu0
    %v2577 = vadd.f32 0.0, %v2576
    %v2578 = vpop.f32.mrf.mxu0
    %v2579 = vpop.f32.mrf.mxu0
    %2580 = vdwg.mxu0
    %2581 = vmatprep.subr.bf16.mxu0 %v1455
    %2582 = vmatpush1.bf16.msra.mxu0 %v1454
    %2583 = vmatprep.subr.bf16.mxu0 %v1443
    %2584 = vmatpush1.bf16.msra.mxu0 %v1442
    %2585 = vmatprep.subr.bf16.mxu0 %v1431
    %2586 = vmatpush1.bf16.msra.mxu0 %v1430
    %2587 = vmatprep.subr.bf16.mxu0 %v1419
    %2588 = vmatpush1.bf16.msra.mxu0 %v1418
    %2589 = vmatprep.subr.bf16.mxu0 %v1407
    %2590 = vmatpush1.bf16.msra.mxu0 %v1406
    %2591 = vmatprep.subr.bf16.mxu0 %v1395
    %2592 = vmatpush1.bf16.msra.mxu0 %v1394
    %2593 = vmatprep.subr.bf16.mxu0 %v1383
    %2594 = vmatpush1.bf16.msra.mxu0 %v1382
    %2595 = vmatprep.subr.bf16.mxu0 %v1371
    %2596 = vmatpush1.bf16.msra.mxu0 %v1370
    %2597 = vmatprep.subr.bf16.mxu0 0
    %2598 = vmatpush2.bf16.msra.mxu0 0
    %2599 = vmatprep.subr.bf16.mxu0 0
    %2600 = vmatpush2.bf16.msra.mxu0 0
    %2601 = vmatprep.subr.bf16.mxu0 0
    %2602 = vmatpush2.bf16.msra.mxu0 0
    %2603 = vmatprep.subr.bf16.mxu0 0
    %2604 = vmatpush2.bf16.msra.mxu0 0
    %2605 = vmatprep.subr.bf16.mxu0 0
    %2606 = vmatpush2.bf16.msra.mxu0 0
    %2607 = vmatprep.subr.bf16.mxu0 0
    %2608 = vmatpush2.bf16.msra.mxu0 0
    %2609 = vmatprep.subr.bf16.mxu0 0
    %2610 = vmatpush2.bf16.msra.mxu0 0
    %2611 = vmatprep.subr.bf16.mxu0 0
    %2612 = vmatpush2.bf16.msra.mxu0 0
    %2613 = vmatprep.mubr.bf16.mxu0 0
    %2614 = vmatmul.mubr.bf16.gmra.mxu0 %v2375
    %v2615 = vpop.f32.mrf.mxu0
    %v2616 = vadd.f32 %v2575, %v2615
    %v2617 = vpop.f32.mrf.mxu0
    %v2618 = vadd.f32 %v2577, %v2617
    %v2619 = vpop.f32.mrf.mxu0
    %v2620 = vpop.f32.mrf.mxu0
    %2621 = vdwg.mxu0
    %2622 = vmatprep.subr.bf16.mxu0 %v1265
    %2623 = vmatpush1.bf16.msra.mxu0 %v1264
    %2624 = vmatprep.subr.bf16.mxu0 %v1253
    %2625 = vmatpush1.bf16.msra.mxu0 %v1252
    %2626 = vmatprep.subr.bf16.mxu0 %v1241
    %2627 = vmatpush1.bf16.msra.mxu0 %v1240
    %2628 = vmatprep.subr.bf16.mxu0 %v1229
    %2629 = vmatpush1.bf16.msra.mxu0 %v1228
    %2630 = vmatprep.subr.bf16.mxu0 %v1217
    %2631 = vmatpush1.bf16.msra.mxu0 %v1216
    %2632 = vmatprep.subr.bf16.mxu0 %v1205
    %2633 = vmatpush1.bf16.msra.mxu0 %v1204
    %2634 = vmatprep.subr.bf16.mxu0 %v1193
    %2635 = vmatpush1.bf16.msra.mxu0 %v1192
    %2636 = vmatprep.subr.bf16.mxu0 %v1181
    %2637 = vmatpush1.bf16.msra.mxu0 %v1180
    %2638 = vmatprep.subr.bf16.mxu0 %v1361
    %2639 = vmatpush2.bf16.msra.mxu0 %v1360
    %2640 = vmatprep.subr.bf16.mxu0 %v1349
    %2641 = vmatpush2.bf16.msra.mxu0 %v1348
    %2642 = vmatprep.subr.bf16.mxu0 %v1337
    %2643 = vmatpush2.bf16.msra.mxu0 %v1336
    %2644 = vmatprep.subr.bf16.mxu0 %v1325
    %2645 = vmatpush2.bf16.msra.mxu0 %v1324
    %2646 = vmatprep.subr.bf16.mxu0 %v1313
    %2647 = vmatpush2.bf16.msra.mxu0 %v1312
    %2648 = vmatprep.subr.bf16.mxu0 %v1301
    %2649 = vmatpush2.bf16.msra.mxu0 %v1300
    %2650 = vmatprep.subr.bf16.mxu0 %v1289
    %2651 = vmatpush2.bf16.msra.mxu0 %v1288
    %2652 = vmatprep.subr.bf16.mxu0 %v1277
    %2653 = vmatpush2.bf16.msra.mxu0 %v1276
    %2654 = vmatprep.mubr.bf16.mxu0 %v2374
    %2655 = vmatmul.mubr.bf16.gmra.mxu0 %v2373
    %v2656 = vpop.f32.mrf.mxu0
    %v2657 = vadd.f32 0.0, %v2656
    %v2658 = vpop.f32.mrf.mxu0
    %v2659 = vadd.f32 0.0, %v2658
    %v2660 = vpop.f32.mrf.mxu0
    %v2661 = vpop.f32.mrf.mxu0
    %2662 = vdwg.mxu0
    %2663 = vmatprep.subr.bf16.mxu0 %v1457
    %2664 = vmatpush1.bf16.msra.mxu0 %v1456
    %2665 = vmatprep.subr.bf16.mxu0 %v1445
    %2666 = vmatpush1.bf16.msra.mxu0 %v1444
    %2667 = vmatprep.subr.bf16.mxu0 %v1433
    %2668 = vmatpush1.bf16.msra.mxu0 %v1432
    %2669 = vmatprep.subr.bf16.mxu0 %v1421
    %2670 = vmatpush1.bf16.msra.mxu0 %v1420
    %2671 = vmatprep.subr.bf16.mxu0 %v1409
    %2672 = vmatpush1.bf16.msra.mxu0 %v1408
    %2673 = vmatprep.subr.bf16.mxu0 %v1397
    %2674 = vmatpush1.bf16.msra.mxu0 %v1396
    %2675 = vmatprep.subr.bf16.mxu0 %v1385
    %2676 = vmatpush1.bf16.msra.mxu0 %v1384
    %2677 = vmatprep.subr.bf16.mxu0 %v1373
    %2678 = vmatpush1.bf16.msra.mxu0 %v1372
    %2679 = vmatprep.subr.bf16.mxu0 0
    %2680 = vmatpush2.bf16.msra.mxu0 0
    %2681 = vmatprep.subr.bf16.mxu0 0
    %2682 = vmatpush2.bf16.msra.mxu0 0
    %2683 = vmatprep.subr.bf16.mxu0 0
    %2684 = vmatpush2.bf16.msra.mxu0 0
    %2685 = vmatprep.subr.bf16.mxu0 0
    %2686 = vmatpush2.bf16.msra.mxu0 0
    %2687 = vmatprep.subr.bf16.mxu0 0
    %2688 = vmatpush2.bf16.msra.mxu0 0
    %2689 = vmatprep.subr.bf16.mxu0 0
    %2690 = vmatpush2.bf16.msra.mxu0 0
    %2691 = vmatprep.subr.bf16.mxu0 0
    %2692 = vmatpush2.bf16.msra.mxu0 0
    %2693 = vmatprep.subr.bf16.mxu0 0
    %2694 = vmatpush2.bf16.msra.mxu0 0
    %2695 = vmatprep.mubr.bf16.mxu0 0
    %2696 = vmatmul.mubr.bf16.gmra.mxu0 %v2375
    %v2697 = vpop.f32.mrf.mxu0
    %v2698 = vadd.f32 %v2657, %v2697
    %v2699 = vpop.f32.mrf.mxu0
    %v2700 = vadd.f32 %v2659, %v2699
    %v2701 = vpop.f32.mrf.mxu0
    %v2702 = vpop.f32.mrf.mxu0
    %2703 = vdwg.mxu0
    %2704 = vmatprep.subr.bf16.mxu0 %v1267
    %2705 = vmatpush1.bf16.msra.mxu0 %v1266
    %2706 = vmatprep.subr.bf16.mxu0 %v1255
    %2707 = vmatpush1.bf16.msra.mxu0 %v1254
    %2708 = vmatprep.subr.bf16.mxu0 %v1243
    %2709 = vmatpush1.bf16.msra.mxu0 %v1242
    %2710 = vmatprep.subr.bf16.mxu0 %v1231
    %2711 = vmatpush1.bf16.msra.mxu0 %v1230
    %2712 = vmatprep.subr.bf16.mxu0 %v1219
    %2713 = vmatpush1.bf16.msra.mxu0 %v1218
    %2714 = vmatprep.subr.bf16.mxu0 %v1207
    %2715 = vmatpush1.bf16.msra.mxu0 %v1206
    %2716 = vmatprep.subr.bf16.mxu0 %v1195
    %2717 = vmatpush1.bf16.msra.mxu0 %v1194
    %2718 = vmatprep.subr.bf16.mxu0 %v1183
    %2719 = vmatpush1.bf16.msra.mxu0 %v1182
    %2720 = vmatprep.subr.bf16.mxu0 %v1363
    %2721 = vmatpush2.bf16.msra.mxu0 %v1362
    %2722 = vmatprep.subr.bf16.mxu0 %v1351
    %2723 = vmatpush2.bf16.msra.mxu0 %v1350
    %2724 = vmatprep.subr.bf16.mxu0 %v1339
    %2725 = vmatpush2.bf16.msra.mxu0 %v1338
    %2726 = vmatprep.subr.bf16.mxu0 %v1327
    %2727 = vmatpush2.bf16.msra.mxu0 %v1326
    %2728 = vmatprep.subr.bf16.mxu0 %v1315
    %2729 = vmatpush2.bf16.msra.mxu0 %v1314
    %2730 = vmatprep.subr.bf16.mxu0 %v1303
    %2731 = vmatpush2.bf16.msra.mxu0 %v1302
    %2732 = vmatprep.subr.bf16.mxu0 %v1291
    %2733 = vmatpush2.bf16.msra.mxu0 %v1290
    %2734 = vmatprep.subr.bf16.mxu0 %v1279
    %2735 = vmatpush2.bf16.msra.mxu0 %v1278
    %2736 = vmatprep.mubr.bf16.mxu0 %v2374
    %2737 = vmatmul.mubr.bf16.gmra.mxu0 %v2373
    %v2738 = vpop.f32.mrf.mxu0
    %v2739 = vadd.f32 0.0, %v2738
    %v2740 = vpop.f32.mrf.mxu0
    %v2741 = vadd.f32 0.0, %v2740
    %v2742 = vpop.f32.mrf.mxu0
    %v2743 = vpop.f32.mrf.mxu0
    %2744 = vdwg.mxu0
    %2745 = vmatprep.subr.bf16.mxu0 %v1459
    %2746 = vmatpush1.bf16.msra.mxu0 %v1458
    %2747 = vmatprep.subr.bf16.mxu0 %v1447
    %2748 = vmatpush1.bf16.msra.mxu0 %v1446
    %2749 = vmatprep.subr.bf16.mxu0 %v1435
    %2750 = vmatpush1.bf16.msra.mxu0 %v1434
    %2751 = vmatprep.subr.bf16.mxu0 %v1423
    %2752 = vmatpush1.bf16.msra.mxu0 %v1422
    %2753 = vmatprep.subr.bf16.mxu0 %v1411
    %2754 = vmatpush1.bf16.msra.mxu0 %v1410
    %2755 = vmatprep.subr.bf16.mxu0 %v1399
    %2756 = vmatpush1.bf16.msra.mxu0 %v1398
    %2757 = vmatprep.subr.bf16.mxu0 %v1387
    %2758 = vmatpush1.bf16.msra.mxu0 %v1386
    %2759 = vmatprep.subr.bf16.mxu0 %v1375
    %2760 = vmatpush1.bf16.msra.mxu0 %v1374
    %2761 = vmatprep.subr.bf16.mxu0 0
    %2762 = vmatpush2.bf16.msra.mxu0 0
    %2763 = vmatprep.subr.bf16.mxu0 0
    %2764 = vmatpush2.bf16.msra.mxu0 0
    %2765 = vmatprep.subr.bf16.mxu0 0
    %2766 = vmatpush2.bf16.msra.mxu0 0
    %2767 = vmatprep.subr.bf16.mxu0 0
    %2768 = vmatpush2.bf16.msra.mxu0 0
    %2769 = vmatprep.subr.bf16.mxu0 0
    %2770 = vmatpush2.bf16.msra.mxu0 0
    %2771 = vmatprep.subr.bf16.mxu0 0
    %2772 = vmatpush2.bf16.msra.mxu0 0
    %2773 = vmatprep.subr.bf16.mxu0 0
    %2774 = vmatpush2.bf16.msra.mxu0 0
    %2775 = vmatprep.subr.bf16.mxu0 0
    %2776 = vmatpush2.bf16.msra.mxu0 0
    %2777 = vmatprep.mubr.bf16.mxu0 0
    %2778 = vmatmul.mubr.bf16.gmra.mxu0 %v2375
    %v2779 = vpop.f32.mrf.mxu0
    %v2780 = vadd.f32 %v2739, %v2779
    %v2781 = vpop.f32.mrf.mxu0
    %v2782 = vadd.f32 %v2741, %v2781
    %v2783 = vpop.f32.mrf.mxu0
    %v2784 = vpop.f32.mrf.mxu0
    %2785 = vdwg.mxu0
    %2786 = vmatprep.subr.bf16.mxu0 %v1269
    %2787 = vmatpush1.bf16.msra.mxu0 %v1268
    %2788 = vmatprep.subr.bf16.mxu0 %v1257
    %2789 = vmatpush1.bf16.msra.mxu0 %v1256
    %2790 = vmatprep.subr.bf16.mxu0 %v1245
    %2791 = vmatpush1.bf16.msra.mxu0 %v1244
    %2792 = vmatprep.subr.bf16.mxu0 %v1233
    %2793 = vmatpush1.bf16.msra.mxu0 %v1232
    %2794 = vmatprep.subr.bf16.mxu0 %v1221
    %2795 = vmatpush1.bf16.msra.mxu0 %v1220
    %2796 = vmatprep.subr.bf16.mxu0 %v1209
    %2797 = vmatpush1.bf16.msra.mxu0 %v1208
    %2798 = vmatprep.subr.bf16.mxu0 %v1197
    %2799 = vmatpush1.bf16.msra.mxu0 %v1196
    %2800 = vmatprep.subr.bf16.mxu0 %v1185
    %2801 = vmatpush1.bf16.msra.mxu0 %v1184
    %2802 = vmatprep.subr.bf16.mxu0 %v1365
    %2803 = vmatpush2.bf16.msra.mxu0 %v1364
    %2804 = vmatprep.subr.bf16.mxu0 %v1353
    %2805 = vmatpush2.bf16.msra.mxu0 %v1352
    %2806 = vmatprep.subr.bf16.mxu0 %v1341
    %2807 = vmatpush2.bf16.msra.mxu0 %v1340
    %2808 = vmatprep.subr.bf16.mxu0 %v1329
    %2809 = vmatpush2.bf16.msra.mxu0 %v1328
    %2810 = vmatprep.subr.bf16.mxu0 %v1317
    %2811 = vmatpush2.bf16.msra.mxu0 %v1316
    %2812 = vmatprep.subr.bf16.mxu0 %v1305
    %2813 = vmatpush2.bf16.msra.mxu0 %v1304
    %2814 = vmatprep.subr.bf16.mxu0 %v1293
    %2815 = vmatpush2.bf16.msra.mxu0 %v1292
    %2816 = vmatprep.subr.bf16.mxu0 %v1281
    %2817 = vmatpush2.bf16.msra.mxu0 %v1280
    %2818 = vmatprep.mubr.bf16.mxu0 %v2374
    %2819 = vmatmul.mubr.bf16.gmra.mxu0 %v2373
    %v2820 = vpop.f32.mrf.mxu0
    %v2821 = vadd.f32 0.0, %v2820
    %v2822 = vpop.f32.mrf.mxu0
    %v2823 = vadd.f32 0.0, %v2822
    %v2824 = vpop.f32.mrf.mxu0
    %v2825 = vpop.f32.mrf.mxu0
    %2826 = vdwg.mxu0
    %2827 = vmatprep.subr.bf16.mxu0 %v1461
    %2828 = vmatpush1.bf16.msra.mxu0 %v1460
    %2829 = vmatprep.subr.bf16.mxu0 %v1449
    %2830 = vmatpush1.bf16.msra.mxu0 %v1448
    %2831 = vmatprep.subr.bf16.mxu0 %v1437
    %2832 = vmatpush1.bf16.msra.mxu0 %v1436
    %2833 = vmatprep.subr.bf16.mxu0 %v1425
    %2834 = vmatpush1.bf16.msra.mxu0 %v1424
    %2835 = vmatprep.subr.bf16.mxu0 %v1413
    %2836 = vmatpush1.bf16.msra.mxu0 %v1412
    %2837 = vmatprep.subr.bf16.mxu0 %v1401
    %2838 = vmatpush1.bf16.msra.mxu0 %v1400
    %2839 = vmatprep.subr.bf16.mxu0 %v1389
    %2840 = vmatpush1.bf16.msra.mxu0 %v1388
    %2841 = vmatprep.subr.bf16.mxu0 %v1377
    %2842 = vmatpush1.bf16.msra.mxu0 %v1376
    %2843 = vmatprep.subr.bf16.mxu0 0
    %2844 = vmatpush2.bf16.msra.mxu0 0
    %2845 = vmatprep.subr.bf16.mxu0 0
    %2846 = vmatpush2.bf16.msra.mxu0 0
    %2847 = vmatprep.subr.bf16.mxu0 0
    %2848 = vmatpush2.bf16.msra.mxu0 0
    %2849 = vmatprep.subr.bf16.mxu0 0
    %2850 = vmatpush2.bf16.msra.mxu0 0
    %2851 = vmatprep.subr.bf16.mxu0 0
    %2852 = vmatpush2.bf16.msra.mxu0 0
    %2853 = vmatprep.subr.bf16.mxu0 0
    %2854 = vmatpush2.bf16.msra.mxu0 0
    %2855 = vmatprep.subr.bf16.mxu0 0
    %2856 = vmatpush2.bf16.msra.mxu0 0
    %2857 = vmatprep.subr.bf16.mxu0 0
    %2858 = vmatpush2.bf16.msra.mxu0 0
    %2859 = vmatprep.mubr.bf16.mxu0 0
    %2860 = vmatmul.mubr.bf16.gmra.mxu0 %v2375
    %v2861 = vpop.f32.mrf.mxu0
    %v2862 = vadd.f32 %v2821, %v2861
    %v2863 = vpop.f32.mrf.mxu0
    %v2864 = vadd.f32 %v2823, %v2863
    %v2865 = vpop.f32.mrf.mxu0
    %v2866 = vpop.f32.mrf.mxu0
    %2867 = vdwg.mxu0
    %v2880 = vcombine.low %v2452, %v2454
    %v2881 = vcombine.low %v2534, %v2536
    %v2883 = vunpack.c.l.s4 1983009808
    %v2884 = vunpack.c.0.s8 %v2883
    %v2885 = vlaneseq
    %v2886 = vshrl.u32 %v2885, 7
    %v2887 = vsub.s32 %v2884, %v2886
    %v2888 = vrot.slane %v2880, %v2887
    %v2890 = vunpack.c.l.s4 1983009808
    %v2891 = vunpack.c.0.s8 %v2890
    %v2892 = vlaneseq
    %v2893 = vshrl.u32 %v2892, 7
    %v2894 = vsub.s32 %v2891, %v2893
    %v2895 = vrot.slane %v2881, %v2894
    %v2896 = vcombine.low %v2888, %v2895
    %v2897 = vcombine.low %v2616, %v2618
    %v2898 = vcombine.low %v2698, %v2700
    %v2900 = vunpack.c.l.s4 1983009808
    %v2901 = vunpack.c.0.s8 %v2900
    %v2902 = vlaneseq
    %v2903 = vshrl.u32 %v2902, 7
    %v2904 = vsub.s32 %v2901, %v2903
    %v2905 = vrot.slane %v2897, %v2904
    %v2907 = vunpack.c.l.s4 1983009808
    %v2908 = vunpack.c.0.s8 %v2907
    %v2909 = vlaneseq
    %v2910 = vshrl.u32 %v2909, 7
    %v2911 = vsub.s32 %v2908, %v2910
    %v2912 = vrot.slane %v2898, %v2911
    %v2913 = vcombine.low %v2905, %v2912
    %v2914 = vcombine.low %v2780, %v2782
    %v2915 = vcombine.low %v2862, %v2864
    %v2917 = vunpack.c.l.s4 1983009808
    %v2918 = vunpack.c.0.s8 %v2917
    %v2919 = vlaneseq
    %v2920 = vshrl.u32 %v2919, 7
    %v2921 = vsub.s32 %v2918, %v2920
    %v2922 = vrot.slane %v2914, %v2921
    %v2924 = vunpack.c.l.s4 1983009808
    %v2925 = vunpack.c.0.s8 %v2924
    %v2926 = vlaneseq
    %v2927 = vshrl.u32 %v2926, 7
    %v2928 = vsub.s32 %v2925, %v2927
    %v2929 = vrot.slane %v2915, %v2928
    %v2930 = vcombine.low %v2922, %v2929
    %v2934 = vadd.f32 %v2350, %v2896
    %v2935 = vadd.f32 %v2351, %v2913
    %v2936 = vadd.f32 %v2352, %v2930
    %v2937 = vxor.u32 %v2934, 2147483648
    %v2938 = vmul.f32 %v2937, 1.442695
    %v2939 = vpow.pop %v2938
    %v2940 = vadd.f32 %v2939, 1.0
    %v2941 = vrcp.pop %v2940
    %v2942 = vmul.f32 1.0, %v2941
    %v2945 = vrot.slane %v2934, 6
    %v2946 = vrot.slane %v2935, 6
    %v2947 = vsel %vm2321, %v2945, %v2946
    %v2949 = vxor.u32 %v2947, 2147483648
    %v2950 = vmul.f32 %v2949, 1.442695
    %v2951 = vpow.pop %v2950
    %v2952 = vadd.f32 %v2951, 1.0
    %v2953 = vrcp.pop %v2952
    %v2954 = vmul.f32 1.0, %v2953
    %v2956 = vrot.slane %v2935, 4
    %v2957 = vrot.slane %v2936, 4
    %v2958 = vsel %vm2333, %v2956, %v2957
    %v2960 = vtanh.pop %v2958
    %v2961 = vrot.slane %v2936, 2
    %v2963 = vxor.u32 %v2961, 2147483648
    %v2964 = vmul.f32 %v2963, 1.442695
    %v2965 = vpow.pop %v2964
    %v2966 = vadd.f32 %v2965, 1.0
    %v2967 = vrcp.pop %v2966
    %v2968 = vmul.f32 1.0, %v2967
    %v2969 = vmul.f32 %v2954, %v2347
    %v2970 = vmul.f32 %v2942, %v2960
    %v2971 = vadd.f32 %v2969, %v2970
    %v2972 = vtanh.pop %v2971
    %v2973 = vmul.f32 %v2968, %v2972
    %v2974 = vld [vmem:[%s0 + $0x30] sm:$0xff]
    %v2975 = vld [vmem:[%s0 + $0x38] sm:$0xff]
    %v2976 = vld [vmem:[%s0 + $0x40] sm:$0xff]
    %v2978 = vcombine.high %v2973, %v2973
    %v2980 = vunpack.c.l.s4 1983009808
    %v2981 = vunpack.c.0.s8 %v2980
    %v2982 = vlaneseq
    %v2983 = vshrl.u32 %v2982, 7
    %v2984 = vsub.s32 %v2981, %v2983
    %v2985 = vrot.slane %v2973, %v2984
    %v2987 = vunpack.c.l.s4 1983009808
    %v2988 = vunpack.c.0.s8 %v2987
    %v2989 = vlaneseq
    %v2990 = vshrl.u32 %v2989, 7
    %v2991 = vsub.s32 %v2988, %v2990
    %v2992 = vrot.slane %v2978, %v2991
    %v2993 = vcombine.high %v2985, %v2985
    %v2997 = vpack.c.bf16 %v2985, %v2985
    %v2998 = vpack.c.bf16 %v2993, %v2993
    %v2999 = vpack.c.bf16 %v2992, %v2992
    %3000 = vmatprep.subr.bf16.mxu0 %v1259
    %3001 = vmatpush1.bf16.msra.mxu0 %v1258
    %3002 = vmatprep.subr.bf16.mxu0 %v1247
    %3003 = vmatpush1.bf16.msra.mxu0 %v1246
    %3004 = vmatprep.subr.bf16.mxu0 %v1235
    %3005 = vmatpush1.bf16.msra.mxu0 %v1234
    %3006 = vmatprep.subr.bf16.mxu0 %v1223
    %3007 = vmatpush1.bf16.msra.mxu0 %v1222
    %3008 = vmatprep.subr.bf16.mxu0 %v1211
    %3009 = vmatpush1.bf16.msra.mxu0 %v1210
    %3010 = vmatprep.subr.bf16.mxu0 %v1199
    %3011 = vmatpush1.bf16.msra.mxu0 %v1198
    %3012 = vmatprep.subr.bf16.mxu0 %v1187
    %3013 = vmatpush1.bf16.msra.mxu0 %v1186
    %3014 = vmatprep.subr.bf16.mxu0 %v1175
    %3015 = vmatpush1.bf16.msra.mxu0 %v1174
    %3016 = vmatprep.subr.bf16.mxu0 %v1355
    %3017 = vmatpush2.bf16.msra.mxu0 %v1354
    %3018 = vmatprep.subr.bf16.mxu0 %v1343
    %3019 = vmatpush2.bf16.msra.mxu0 %v1342
    %3020 = vmatprep.subr.bf16.mxu0 %v1331
    %3021 = vmatpush2.bf16.msra.mxu0 %v1330
    %3022 = vmatprep.subr.bf16.mxu0 %v1319
    %3023 = vmatpush2.bf16.msra.mxu0 %v1318
    %3024 = vmatprep.subr.bf16.mxu0 %v1307
    %3025 = vmatpush2.bf16.msra.mxu0 %v1306
    %3026 = vmatprep.subr.bf16.mxu0 %v1295
    %3027 = vmatpush2.bf16.msra.mxu0 %v1294
    %3028 = vmatprep.subr.bf16.mxu0 %v1283
    %3029 = vmatpush2.bf16.msra.mxu0 %v1282
    %3030 = vmatprep.subr.bf16.mxu0 %v1271
    %3031 = vmatpush2.bf16.msra.mxu0 %v1270
    %3032 = vmatprep.mubr.bf16.mxu0 %v2998
    %3033 = vmatmul.mubr.bf16.gmra.mxu0 %v2997
    %v3034 = vpop.f32.mrf.mxu0
    %v3035 = vadd.f32 0.0, %v3034
    %v3036 = vpop.f32.mrf.mxu0
    %v3037 = vadd.f32 0.0, %v3036
    %v3038 = vpop.f32.mrf.mxu0
    %v3039 = vpop.f32.mrf.mxu0
    %3040 = vdwg.mxu0
    %3041 = vmatprep.subr.bf16.mxu0 %v1451
    %3042 = vmatpush1.bf16.msra.mxu0 %v1450
    %3043 = vmatprep.subr.bf16.mxu0 %v1439
    %3044 = vmatpush1.bf16.msra.mxu0 %v1438
    %3045 = vmatprep.subr.bf16.mxu0 %v1427
    %3046 = vmatpush1.bf16.msra.mxu0 %v1426
    %3047 = vmatprep.subr.bf16.mxu0 %v1415
    %3048 = vmatpush1.bf16.msra.mxu0 %v1414
    %3049 = vmatprep.subr.bf16.mxu0 %v1403
    %3050 = vmatpush1.bf16.msra.mxu0 %v1402
    %3051 = vmatprep.subr.bf16.mxu0 %v1391
    %3052 = vmatpush1.bf16.msra.mxu0 %v1390
    %3053 = vmatprep.subr.bf16.mxu0 %v1379
    %3054 = vmatpush1.bf16.msra.mxu0 %v1378
    %3055 = vmatprep.subr.bf16.mxu0 %v1367
    %3056 = vmatpush1.bf16.msra.mxu0 %v1366
    %3057 = vmatprep.subr.bf16.mxu0 0
    %3058 = vmatpush2.bf16.msra.mxu0 0
    %3059 = vmatprep.subr.bf16.mxu0 0
    %3060 = vmatpush2.bf16.msra.mxu0 0
    %3061 = vmatprep.subr.bf16.mxu0 0
    %3062 = vmatpush2.bf16.msra.mxu0 0
    %3063 = vmatprep.subr.bf16.mxu0 0
    %3064 = vmatpush2.bf16.msra.mxu0 0
    %3065 = vmatprep.subr.bf16.mxu0 0
    %3066 = vmatpush2.bf16.msra.mxu0 0
    %3067 = vmatprep.subr.bf16.mxu0 0
    %3068 = vmatpush2.bf16.msra.mxu0 0
    %3069 = vmatprep.subr.bf16.mxu0 0
    %3070 = vmatpush2.bf16.msra.mxu0 0
    %3071 = vmatprep.subr.bf16.mxu0 0
    %3072 = vmatpush2.bf16.msra.mxu0 0
    %3073 = vmatprep.mubr.bf16.mxu0 0
    %3074 = vmatmul.mubr.bf16.gmra.mxu0 %v2999
    %v3075 = vpop.f32.mrf.mxu0
    %v3076 = vadd.f32 %v3035, %v3075
    %v3077 = vpop.f32.mrf.mxu0
    %v3078 = vadd.f32 %v3037, %v3077
    %v3079 = vpop.f32.mrf.mxu0
    %v3080 = vpop.f32.mrf.mxu0
    %3081 = vdwg.mxu0
    %3082 = vmatprep.subr.bf16.mxu0 %v1261
    %3083 = vmatpush1.bf16.msra.mxu0 %v1260
    %3084 = vmatprep.subr.bf16.mxu0 %v1249
    %3085 = vmatpush1.bf16.msra.mxu0 %v1248
    %3086 = vmatprep.subr.bf16.mxu0 %v1237
    %3087 = vmatpush1.bf16.msra.mxu0 %v1236
    %3088 = vmatprep.subr.bf16.mxu0 %v1225
    %3089 = vmatpush1.bf16.msra.mxu0 %v1224
    %3090 = vmatprep.subr.bf16.mxu0 %v1213
    %3091 = vmatpush1.bf16.msra.mxu0 %v1212
    %3092 = vmatprep.subr.bf16.mxu0 %v1201
    %3093 = vmatpush1.bf16.msra.mxu0 %v1200
    %3094 = vmatprep.subr.bf16.mxu0 %v1189
    %3095 = vmatpush1.bf16.msra.mxu0 %v1188
    %3096 = vmatprep.subr.bf16.mxu0 %v1177
    %3097 = vmatpush1.bf16.msra.mxu0 %v1176
    %3098 = vmatprep.subr.bf16.mxu0 %v1357
    %3099 = vmatpush2.bf16.msra.mxu0 %v1356
    %3100 = vmatprep.subr.bf16.mxu0 %v1345
    %3101 = vmatpush2.bf16.msra.mxu0 %v1344
    %3102 = vmatprep.subr.bf16.mxu0 %v1333
    %3103 = vmatpush2.bf16.msra.mxu0 %v1332
    %3104 = vmatprep.subr.bf16.mxu0 %v1321
    %3105 = vmatpush2.bf16.msra.mxu0 %v1320
    %3106 = vmatprep.subr.bf16.mxu0 %v1309
    %3107 = vmatpush2.bf16.msra.mxu0 %v1308
    %3108 = vmatprep.subr.bf16.mxu0 %v1297
    %3109 = vmatpush2.bf16.msra.mxu0 %v1296
    %3110 = vmatprep.subr.bf16.mxu0 %v1285
    %3111 = vmatpush2.bf16.msra.mxu0 %v1284
    %3112 = vmatprep.subr.bf16.mxu0 %v1273
    %3113 = vmatpush2.bf16.msra.mxu0 %v1272
    %3114 = vmatprep.mubr.bf16.mxu0 %v2998
    %3115 = vmatmul.mubr.bf16.gmra.mxu0 %v2997
    %v3116 = vpop.f32.mrf.mxu0
    %v3117 = vadd.f32 0.0, %v3116
    %v3118 = vpop.f32.mrf.mxu0
    %v3119 = vadd.f32 0.0, %v3118
    %v3120 = vpop.f32.mrf.mxu0
    %v3121 = vpop.f32.mrf.mxu0
    %3122 = vdwg.mxu0
    %3123 = vmatprep.subr.bf16.mxu0 %v1453
    %3124 = vmatpush1.bf16.msra.mxu0 %v1452
    %3125 = vmatprep.subr.bf16.mxu0 %v1441
    %3126 = vmatpush1.bf16.msra.mxu0 %v1440
    %3127 = vmatprep.subr.bf16.mxu0 %v1429
    %3128 = vmatpush1.bf16.msra.mxu0 %v1428
    %3129 = vmatprep.subr.bf16.mxu0 %v1417
    %3130 = vmatpush1.bf16.msra.mxu0 %v1416
    %3131 = vmatprep.subr.bf16.mxu0 %v1405
    %3132 = vmatpush1.bf16.msra.mxu0 %v1404
    %3133 = vmatprep.subr.bf16.mxu0 %v1393
    %3134 = vmatpush1.bf16.msra.mxu0 %v1392
    %3135 = vmatprep.subr.bf16.mxu0 %v1381
    %3136 = vmatpush1.bf16.msra.mxu0 %v1380
    %3137 = vmatprep.subr.bf16.mxu0 %v1369
    %3138 = vmatpush1.bf16.msra.mxu0 %v1368
    %3139 = vmatprep.subr.bf16.mxu0 0
    %3140 = vmatpush2.bf16.msra.mxu0 0
    %3141 = vmatprep.subr.bf16.mxu0 0
    %3142 = vmatpush2.bf16.msra.mxu0 0
    %3143 = vmatprep.subr.bf16.mxu0 0
    %3144 = vmatpush2.bf16.msra.mxu0 0
    %3145 = vmatprep.subr.bf16.mxu0 0
    %3146 = vmatpush2.bf16.msra.mxu0 0
    %3147 = vmatprep.subr.bf16.mxu0 0
    %3148 = vmatpush2.bf16.msra.mxu0 0
    %3149 = vmatprep.subr.bf16.mxu0 0
    %3150 = vmatpush2.bf16.msra.mxu0 0
    %3151 = vmatprep.subr.bf16.mxu0 0
    %3152 = vmatpush2.bf16.msra.mxu0 0
    %3153 = vmatprep.subr.bf16.mxu0 0
    %3154 = vmatpush2.bf16.msra.mxu0 0
    %3155 = vmatprep.mubr.bf16.mxu0 0
    %3156 = vmatmul.mubr.bf16.gmra.mxu0 %v2999
    %v3157 = vpop.f32.mrf.mxu0
    %v3158 = vadd.f32 %v3117, %v3157
    %v3159 = vpop.f32.mrf.mxu0
    %v3160 = vadd.f32 %v3119, %v3159
    %v3161 = vpop.f32.mrf.mxu0
    %v3162 = vpop.f32.mrf.mxu0
    %3163 = vdwg.mxu0
    %3164 = vmatprep.subr.bf16.mxu0 %v1263
    %3165 = vmatpush1.bf16.msra.mxu0 %v1262
    %3166 = vmatprep.subr.bf16.mxu0 %v1251
    %3167 = vmatpush1.bf16.msra.mxu0 %v1250
    %3168 = vmatprep.subr.bf16.mxu0 %v1239
    %3169 = vmatpush1.bf16.msra.mxu0 %v1238
    %3170 = vmatprep.subr.bf16.mxu0 %v1227
    %3171 = vmatpush1.bf16.msra.mxu0 %v1226
    %3172 = vmatprep.subr.bf16.mxu0 %v1215
    %3173 = vmatpush1.bf16.msra.mxu0 %v1214
    %3174 = vmatprep.subr.bf16.mxu0 %v1203
    %3175 = vmatpush1.bf16.msra.mxu0 %v1202
    %3176 = vmatprep.subr.bf16.mxu0 %v1191
    %3177 = vmatpush1.bf16.msra.mxu0 %v1190
    %3178 = vmatprep.subr.bf16.mxu0 %v1179
    %3179 = vmatpush1.bf16.msra.mxu0 %v1178
    %3180 = vmatprep.subr.bf16.mxu0 %v1359
    %3181 = vmatpush2.bf16.msra.mxu0 %v1358
    %3182 = vmatprep.subr.bf16.mxu0 %v1347
    %3183 = vmatpush2.bf16.msra.mxu0 %v1346
    %3184 = vmatprep.subr.bf16.mxu0 %v1335
    %3185 = vmatpush2.bf16.msra.mxu0 %v1334
    %3186 = vmatprep.subr.bf16.mxu0 %v1323
    %3187 = vmatpush2.bf16.msra.mxu0 %v1322
    %3188 = vmatprep.subr.bf16.mxu0 %v1311
    %3189 = vmatpush2.bf16.msra.mxu0 %v1310
    %3190 = vmatprep.subr.bf16.mxu0 %v1299
    %3191 = vmatpush2.bf16.msra.mxu0 %v1298
    %3192 = vmatprep.subr.bf16.mxu0 %v1287
    %3193 = vmatpush2.bf16.msra.mxu0 %v1286
    %3194 = vmatprep.subr.bf16.mxu0 %v1275
    %3195 = vmatpush2.bf16.msra.mxu0 %v1274
    %3196 = vmatprep.mubr.bf16.mxu0 %v2998
    %3197 = vmatmul.mubr.bf16.gmra.mxu0 %v2997
    %v3198 = vpop.f32.mrf.mxu0
    %v3199 = vadd.f32 0.0, %v3198
    %v3200 = vpop.f32.mrf.mxu0
    %v3201 = vadd.f32 0.0, %v3200
    %v3202 = vpop.f32.mrf.mxu0
    %v3203 = vpop.f32.mrf.mxu0
    %3204 = vdwg.mxu0
    %3205 = vmatprep.subr.bf16.mxu0 %v1455
    %3206 = vmatpush1.bf16.msra.mxu0 %v1454
    %3207 = vmatprep.subr.bf16.mxu0 %v1443
    %3208 = vmatpush1.bf16.msra.mxu0 %v1442
    %3209 = vmatprep.subr.bf16.mxu0 %v1431
    %3210 = vmatpush1.bf16.msra.mxu0 %v1430
    %3211 = vmatprep.subr.bf16.mxu0 %v1419
    %3212 = vmatpush1.bf16.msra.mxu0 %v1418
    %3213 = vmatprep.subr.bf16.mxu0 %v1407
    %3214 = vmatpush1.bf16.msra.mxu0 %v1406
    %3215 = vmatprep.subr.bf16.mxu0 %v1395
    %3216 = vmatpush1.bf16.msra.mxu0 %v1394
    %3217 = vmatprep.subr.bf16.mxu0 %v1383
    %3218 = vmatpush1.bf16.msra.mxu0 %v1382
    %3219 = vmatprep.subr.bf16.mxu0 %v1371
    %3220 = vmatpush1.bf16.msra.mxu0 %v1370
    %3221 = vmatprep.subr.bf16.mxu0 0
    %3222 = vmatpush2.bf16.msra.mxu0 0
    %3223 = vmatprep.subr.bf16.mxu0 0
    %3224 = vmatpush2.bf16.msra.mxu0 0
    %3225 = vmatprep.subr.bf16.mxu0 0
    %3226 = vmatpush2.bf16.msra.mxu0 0
    %3227 = vmatprep.subr.bf16.mxu0 0
    %3228 = vmatpush2.bf16.msra.mxu0 0
    %3229 = vmatprep.subr.bf16.mxu0 0
    %3230 = vmatpush2.bf16.msra.mxu0 0
    %3231 = vmatprep.subr.bf16.mxu0 0
    %3232 = vmatpush2.bf16.msra.mxu0 0
    %3233 = vmatprep.subr.bf16.mxu0 0
    %3234 = vmatpush2.bf16.msra.mxu0 0
    %3235 = vmatprep.subr.bf16.mxu0 0
    %3236 = vmatpush2.bf16.msra.mxu0 0
    %3237 = vmatprep.mubr.bf16.mxu0 0
    %3238 = vmatmul.mubr.bf16.gmra.mxu0 %v2999
    %v3239 = vpop.f32.mrf.mxu0
    %v3240 = vadd.f32 %v3199, %v3239
    %v3241 = vpop.f32.mrf.mxu0
    %v3242 = vadd.f32 %v3201, %v3241
    %v3243 = vpop.f32.mrf.mxu0
    %v3244 = vpop.f32.mrf.mxu0
    %3245 = vdwg.mxu0
    %3246 = vmatprep.subr.bf16.mxu0 %v1265
    %3247 = vmatpush1.bf16.msra.mxu0 %v1264
    %3248 = vmatprep.subr.bf16.mxu0 %v1253
    %3249 = vmatpush1.bf16.msra.mxu0 %v1252
    %3250 = vmatprep.subr.bf16.mxu0 %v1241
    %3251 = vmatpush1.bf16.msra.mxu0 %v1240
    %3252 = vmatprep.subr.bf16.mxu0 %v1229
    %3253 = vmatpush1.bf16.msra.mxu0 %v1228
    %3254 = vmatprep.subr.bf16.mxu0 %v1217
    %3255 = vmatpush1.bf16.msra.mxu0 %v1216
    %3256 = vmatprep.subr.bf16.mxu0 %v1205
    %3257 = vmatpush1.bf16.msra.mxu0 %v1204
    %3258 = vmatprep.subr.bf16.mxu0 %v1193
    %3259 = vmatpush1.bf16.msra.mxu0 %v1192
    %3260 = vmatprep.subr.bf16.mxu0 %v1181
    %3261 = vmatpush1.bf16.msra.mxu0 %v1180
    %3262 = vmatprep.subr.bf16.mxu0 %v1361
    %3263 = vmatpush2.bf16.msra.mxu0 %v1360
    %3264 = vmatprep.subr.bf16.mxu0 %v1349
    %3265 = vmatpush2.bf16.msra.mxu0 %v1348
    %3266 = vmatprep.subr.bf16.mxu0 %v1337
    %3267 = vmatpush2.bf16.msra.mxu0 %v1336
    %3268 = vmatprep.subr.bf16.mxu0 %v1325
    %3269 = vmatpush2.bf16.msra.mxu0 %v1324
    %3270 = vmatprep.subr.bf16.mxu0 %v1313
    %3271 = vmatpush2.bf16.msra.mxu0 %v1312
    %3272 = vmatprep.subr.bf16.mxu0 %v1301
    %3273 = vmatpush2.bf16.msra.mxu0 %v1300
    %3274 = vmatprep.subr.bf16.mxu0 %v1289
    %3275 = vmatpush2.bf16.msra.mxu0 %v1288
    %3276 = vmatprep.subr.bf16.mxu0 %v1277
    %3277 = vmatpush2.bf16.msra.mxu0 %v1276
    %3278 = vmatprep.mubr.bf16.mxu0 %v2998
    %3279 = vmatmul.mubr.bf16.gmra.mxu0 %v2997
    %v3280 = vpop.f32.mrf.mxu0
    %v3281 = vadd.f32 0.0, %v3280
    %v3282 = vpop.f32.mrf.mxu0
    %v3283 = vadd.f32 0.0, %v3282
    %v3284 = vpop.f32.mrf.mxu0
    %v3285 = vpop.f32.mrf.mxu0
    %3286 = vdwg.mxu0
    %3287 = vmatprep.subr.bf16.mxu0 %v1457
    %3288 = vmatpush1.bf16.msra.mxu0 %v1456
    %3289 = vmatprep.subr.bf16.mxu0 %v1445
    %3290 = vmatpush1.bf16.msra.mxu0 %v1444
    %3291 = vmatprep.subr.bf16.mxu0 %v1433
    %3292 = vmatpush1.bf16.msra.mxu0 %v1432
    %3293 = vmatprep.subr.bf16.mxu0 %v1421
    %3294 = vmatpush1.bf16.msra.mxu0 %v1420
    %3295 = vmatprep.subr.bf16.mxu0 %v1409
    %3296 = vmatpush1.bf16.msra.mxu0 %v1408
    %3297 = vmatprep.subr.bf16.mxu0 %v1397
    %3298 = vmatpush1.bf16.msra.mxu0 %v1396
    %3299 = vmatprep.subr.bf16.mxu0 %v1385
    %3300 = vmatpush1.bf16.msra.mxu0 %v1384
    %3301 = vmatprep.subr.bf16.mxu0 %v1373
    %3302 = vmatpush1.bf16.msra.mxu0 %v1372
    %3303 = vmatprep.subr.bf16.mxu0 0
    %3304 = vmatpush2.bf16.msra.mxu0 0
    %3305 = vmatprep.subr.bf16.mxu0 0
    %3306 = vmatpush2.bf16.msra.mxu0 0
    %3307 = vmatprep.subr.bf16.mxu0 0
    %3308 = vmatpush2.bf16.msra.mxu0 0
    %3309 = vmatprep.subr.bf16.mxu0 0
    %3310 = vmatpush2.bf16.msra.mxu0 0
    %3311 = vmatprep.subr.bf16.mxu0 0
    %3312 = vmatpush2.bf16.msra.mxu0 0
    %3313 = vmatprep.subr.bf16.mxu0 0
    %3314 = vmatpush2.bf16.msra.mxu0 0
    %3315 = vmatprep.subr.bf16.mxu0 0
    %3316 = vmatpush2.bf16.msra.mxu0 0
    %3317 = vmatprep.subr.bf16.mxu0 0
    %3318 = vmatpush2.bf16.msra.mxu0 0
    %3319 = vmatprep.mubr.bf16.mxu0 0
    %3320 = vmatmul.mubr.bf16.gmra.mxu0 %v2999
    %v3321 = vpop.f32.mrf.mxu0
    %v3322 = vadd.f32 %v3281, %v3321
    %v3323 = vpop.f32.mrf.mxu0
    %v3324 = vadd.f32 %v3283, %v3323
    %v3325 = vpop.f32.mrf.mxu0
    %v3326 = vpop.f32.mrf.mxu0
    %3327 = vdwg.mxu0
    %3328 = vmatprep.subr.bf16.mxu0 %v1267
    %3329 = vmatpush1.bf16.msra.mxu0 %v1266
    %3330 = vmatprep.subr.bf16.mxu0 %v1255
    %3331 = vmatpush1.bf16.msra.mxu0 %v1254
    %3332 = vmatprep.subr.bf16.mxu0 %v1243
    %3333 = vmatpush1.bf16.msra.mxu0 %v1242
    %3334 = vmatprep.subr.bf16.mxu0 %v1231
    %3335 = vmatpush1.bf16.msra.mxu0 %v1230
    %3336 = vmatprep.subr.bf16.mxu0 %v1219
    %3337 = vmatpush1.bf16.msra.mxu0 %v1218
    %3338 = vmatprep.subr.bf16.mxu0 %v1207
    %3339 = vmatpush1.bf16.msra.mxu0 %v1206
    %3340 = vmatprep.subr.bf16.mxu0 %v1195
    %3341 = vmatpush1.bf16.msra.mxu0 %v1194
    %3342 = vmatprep.subr.bf16.mxu0 %v1183
    %3343 = vmatpush1.bf16.msra.mxu0 %v1182
    %3344 = vmatprep.subr.bf16.mxu0 %v1363
    %3345 = vmatpush2.bf16.msra.mxu0 %v1362
    %3346 = vmatprep.subr.bf16.mxu0 %v1351
    %3347 = vmatpush2.bf16.msra.mxu0 %v1350
    %3348 = vmatprep.subr.bf16.mxu0 %v1339
    %3349 = vmatpush2.bf16.msra.mxu0 %v1338
    %3350 = vmatprep.subr.bf16.mxu0 %v1327
    %3351 = vmatpush2.bf16.msra.mxu0 %v1326
    %3352 = vmatprep.subr.bf16.mxu0 %v1315
    %3353 = vmatpush2.bf16.msra.mxu0 %v1314
    %3354 = vmatprep.subr.bf16.mxu0 %v1303
    %3355 = vmatpush2.bf16.msra.mxu0 %v1302
    %3356 = vmatprep.subr.bf16.mxu0 %v1291
    %3357 = vmatpush2.bf16.msra.mxu0 %v1290
    %3358 = vmatprep.subr.bf16.mxu0 %v1279
    %3359 = vmatpush2.bf16.msra.mxu0 %v1278
    %3360 = vmatprep.mubr.bf16.mxu0 %v2998
    %3361 = vmatmul.mubr.bf16.gmra.mxu0 %v2997
    %v3362 = vpop.f32.mrf.mxu0
    %v3363 = vadd.f32 0.0, %v3362
    %v3364 = vpop.f32.mrf.mxu0
    %v3365 = vadd.f32 0.0, %v3364
    %v3366 = vpop.f32.mrf.mxu0
    %v3367 = vpop.f32.mrf.mxu0
    %3368 = vdwg.mxu0
    %3369 = vmatprep.subr.bf16.mxu0 %v1459
    %3370 = vmatpush1.bf16.msra.mxu0 %v1458
    %3371 = vmatprep.subr.bf16.mxu0 %v1447
    %3372 = vmatpush1.bf16.msra.mxu0 %v1446
    %3373 = vmatprep.subr.bf16.mxu0 %v1435
    %3374 = vmatpush1.bf16.msra.mxu0 %v1434
    %3375 = vmatprep.subr.bf16.mxu0 %v1423
    %3376 = vmatpush1.bf16.msra.mxu0 %v1422
    %3377 = vmatprep.subr.bf16.mxu0 %v1411
    %3378 = vmatpush1.bf16.msra.mxu0 %v1410
    %3379 = vmatprep.subr.bf16.mxu0 %v1399
    %3380 = vmatpush1.bf16.msra.mxu0 %v1398
    %3381 = vmatprep.subr.bf16.mxu0 %v1387
    %3382 = vmatpush1.bf16.msra.mxu0 %v1386
    %3383 = vmatprep.subr.bf16.mxu0 %v1375
    %3384 = vmatpush1.bf16.msra.mxu0 %v1374
    %3385 = vmatprep.subr.bf16.mxu0 0
    %3386 = vmatpush2.bf16.msra.mxu0 0
    %3387 = vmatprep.subr.bf16.mxu0 0
    %3388 = vmatpush2.bf16.msra.mxu0 0
    %3389 = vmatprep.subr.bf16.mxu0 0
    %3390 = vmatpush2.bf16.msra.mxu0 0
    %3391 = vmatprep.subr.bf16.mxu0 0
    %3392 = vmatpush2.bf16.msra.mxu0 0
    %3393 = vmatprep.subr.bf16.mxu0 0
    %3394 = vmatpush2.bf16.msra.mxu0 0
    %3395 = vmatprep.subr.bf16.mxu0 0
    %3396 = vmatpush2.bf16.msra.mxu0 0
    %3397 = vmatprep.subr.bf16.mxu0 0
    %3398 = vmatpush2.bf16.msra.mxu0 0
    %3399 = vmatprep.subr.bf16.mxu0 0
    %3400 = vmatpush2.bf16.msra.mxu0 0
    %3401 = vmatprep.mubr.bf16.mxu0 0
    %3402 = vmatmul.mubr.bf16.gmra.mxu0 %v2999
    %v3403 = vpop.f32.mrf.mxu0
    %v3404 = vadd.f32 %v3363, %v3403
    %v3405 = vpop.f32.mrf.mxu0
    %v3406 = vadd.f32 %v3365, %v3405
    %v3407 = vpop.f32.mrf.mxu0
    %v3408 = vpop.f32.mrf.mxu0
    %3409 = vdwg.mxu0
    %3410 = vmatprep.subr.bf16.mxu0 %v1269
    %3411 = vmatpush1.bf16.msra.mxu0 %v1268
    %3412 = vmatprep.subr.bf16.mxu0 %v1257
    %3413 = vmatpush1.bf16.msra.mxu0 %v1256
    %3414 = vmatprep.subr.bf16.mxu0 %v1245
    %3415 = vmatpush1.bf16.msra.mxu0 %v1244
    %3416 = vmatprep.subr.bf16.mxu0 %v1233
    %3417 = vmatpush1.bf16.msra.mxu0 %v1232
    %3418 = vmatprep.subr.bf16.mxu0 %v1221
    %3419 = vmatpush1.bf16.msra.mxu0 %v1220
    %3420 = vmatprep.subr.bf16.mxu0 %v1209
    %3421 = vmatpush1.bf16.msra.mxu0 %v1208
    %3422 = vmatprep.subr.bf16.mxu0 %v1197
    %3423 = vmatpush1.bf16.msra.mxu0 %v1196
    %3424 = vmatprep.subr.bf16.mxu0 %v1185
    %3425 = vmatpush1.bf16.msra.mxu0 %v1184
    %3426 = vmatprep.subr.bf16.mxu0 %v1365
    %3427 = vmatpush2.bf16.msra.mxu0 %v1364
    %3428 = vmatprep.subr.bf16.mxu0 %v1353
    %3429 = vmatpush2.bf16.msra.mxu0 %v1352
    %3430 = vmatprep.subr.bf16.mxu0 %v1341
    %3431 = vmatpush2.bf16.msra.mxu0 %v1340
    %3432 = vmatprep.subr.bf16.mxu0 %v1329
    %3433 = vmatpush2.bf16.msra.mxu0 %v1328
    %3434 = vmatprep.subr.bf16.mxu0 %v1317
    %3435 = vmatpush2.bf16.msra.mxu0 %v1316
    %3436 = vmatprep.subr.bf16.mxu0 %v1305
    %3437 = vmatpush2.bf16.msra.mxu0 %v1304
    %3438 = vmatprep.subr.bf16.mxu0 %v1293
    %3439 = vmatpush2.bf16.msra.mxu0 %v1292
    %3440 = vmatprep.subr.bf16.mxu0 %v1281
    %3441 = vmatpush2.bf16.msra.mxu0 %v1280
    %3442 = vmatprep.mubr.bf16.mxu0 %v2998
    %3443 = vmatmul.mubr.bf16.gmra.mxu0 %v2997
    %v3444 = vpop.f32.mrf.mxu0
    %v3445 = vadd.f32 0.0, %v3444
    %v3446 = vpop.f32.mrf.mxu0
    %v3447 = vadd.f32 0.0, %v3446
    %v3448 = vpop.f32.mrf.mxu0
    %v3449 = vpop.f32.mrf.mxu0
    %3450 = vdwg.mxu0
    %3451 = vmatprep.subr.bf16.mxu0 %v1461
    %3452 = vmatpush1.bf16.msra.mxu0 %v1460
    %3453 = vmatprep.subr.bf16.mxu0 %v1449
    %3454 = vmatpush1.bf16.msra.mxu0 %v1448
    %3455 = vmatprep.subr.bf16.mxu0 %v1437
    %3456 = vmatpush1.bf16.msra.mxu0 %v1436
    %3457 = vmatprep.subr.bf16.mxu0 %v1425
    %3458 = vmatpush1.bf16.msra.mxu0 %v1424
    %3459 = vmatprep.subr.bf16.mxu0 %v1413
    %3460 = vmatpush1.bf16.msra.mxu0 %v1412
    %3461 = vmatprep.subr.bf16.mxu0 %v1401
    %3462 = vmatpush1.bf16.msra.mxu0 %v1400
    %3463 = vmatprep.subr.bf16.mxu0 %v1389
    %3464 = vmatpush1.bf16.msra.mxu0 %v1388
    %3465 = vmatprep.subr.bf16.mxu0 %v1377
    %3466 = vmatpush1.bf16.msra.mxu0 %v1376
    %3467 = vmatprep.subr.bf16.mxu0 0
    %3468 = vmatpush2.bf16.msra.mxu0 0
    %3469 = vmatprep.subr.bf16.mxu0 0
    %3470 = vmatpush2.bf16.msra.mxu0 0
    %3471 = vmatprep.subr.bf16.mxu0 0
    %3472 = vmatpush2.bf16.msra.mxu0 0
    %3473 = vmatprep.subr.bf16.mxu0 0
    %3474 = vmatpush2.bf16.msra.mxu0 0
    %3475 = vmatprep.subr.bf16.mxu0 0
    %3476 = vmatpush2.bf16.msra.mxu0 0
    %3477 = vmatprep.subr.bf16.mxu0 0
    %3478 = vmatpush2.bf16.msra.mxu0 0
    %3479 = vmatprep.subr.bf16.mxu0 0
    %3480 = vmatpush2.bf16.msra.mxu0 0
    %3481 = vmatprep.subr.bf16.mxu0 0
    %3482 = vmatpush2.bf16.msra.mxu0 0
    %3483 = vmatprep.mubr.bf16.mxu0 0
    %3484 = vmatmul.mubr.bf16.gmra.mxu0 %v2999
    %v3485 = vpop.f32.mrf.mxu0
    %v3486 = vadd.f32 %v3445, %v3485
    %v3487 = vpop.f32.mrf.mxu0
    %v3488 = vadd.f32 %v3447, %v3487
    %v3489 = vpop.f32.mrf.mxu0
    %v3490 = vpop.f32.mrf.mxu0
    %3491 = vdwg.mxu0
    %v3504 = vcombine.low %v3076, %v3078
    %v3505 = vcombine.low %v3158, %v3160
    %v3507 = vunpack.c.l.s4 1983009808
    %v3508 = vunpack.c.0.s8 %v3507
    %v3509 = vlaneseq
    %v3510 = vshrl.u32 %v3509, 7
    %v3511 = vsub.s32 %v3508, %v3510
    %v3512 = vrot.slane %v3504, %v3511
    %v3514 = vunpack.c.l.s4 1983009808
    %v3515 = vunpack.c.0.s8 %v3514
    %v3516 = vlaneseq
    %v3517 = vshrl.u32 %v3516, 7
    %v3518 = vsub.s32 %v3515, %v3517
    %v3519 = vrot.slane %v3505, %v3518
    %v3520 = vcombine.low %v3512, %v3519
    %v3521 = vcombine.low %v3240, %v3242
    %v3522 = vcombine.low %v3322, %v3324
    %v3524 = vunpack.c.l.s4 1983009808
    %v3525 = vunpack.c.0.s8 %v3524
    %v3526 = vlaneseq
    %v3527 = vshrl.u32 %v3526, 7
    %v3528 = vsub.s32 %v3525, %v3527
    %v3529 = vrot.slane %v3521, %v3528
    %v3531 = vunpack.c.l.s4 1983009808
    %v3532 = vunpack.c.0.s8 %v3531
    %v3533 = vlaneseq
    %v3534 = vshrl.u32 %v3533, 7
    %v3535 = vsub.s32 %v3532, %v3534
    %v3536 = vrot.slane %v3522, %v3535
    %v3537 = vcombine.low %v3529, %v3536
    %v3538 = vcombine.low %v3404, %v3406
    %v3539 = vcombine.low %v3486, %v3488
    %v3541 = vunpack.c.l.s4 1983009808
    %v3542 = vunpack.c.0.s8 %v3541
    %v3543 = vlaneseq
    %v3544 = vshrl.u32 %v3543, 7
    %v3545 = vsub.s32 %v3542, %v3544
    %v3546 = vrot.slane %v3538, %v3545
    %v3548 = vunpack.c.l.s4 1983009808
    %v3549 = vunpack.c.0.s8 %v3548
    %v3550 = vlaneseq
    %v3551 = vshrl.u32 %v3550, 7
    %v3552 = vsub.s32 %v3549, %v3551
    %v3553 = vrot.slane %v3539, %v3552
    %v3554 = vcombine.low %v3546, %v3553
    %v3558 = vadd.f32 %v2974, %v3520
    %v3559 = vadd.f32 %v2975, %v3537
    %v3560 = vadd.f32 %v2976, %v3554
    %v3561 = vxor.u32 %v3558, 2147483648
    %v3562 = vmul.f32 %v3561, 1.442695
    %v3563 = vpow.pop %v3562
    %v3564 = vadd.f32 %v3563, 1.0
    %v3565 = vrcp.pop %v3564
    %v3566 = vmul.f32 1.0, %v3565
    %v3569 = vrot.slane %v3558, 6
    %v3570 = vrot.slane %v3559, 6
    %v3571 = vsel %vm2321, %v3569, %v3570
    %v3573 = vxor.u32 %v3571, 2147483648
    %v3574 = vmul.f32 %v3573, 1.442695
    %v3575 = vpow.pop %v3574
    %v3576 = vadd.f32 %v3575, 1.0
    %v3577 = vrcp.pop %v3576
    %v3578 = vmul.f32 1.0, %v3577
    %v3580 = vrot.slane %v3559, 4
    %v3581 = vrot.slane %v3560, 4
    %v3582 = vsel %vm2333, %v3580, %v3581
    %v3584 = vtanh.pop %v3582
    %v3585 = vrot.slane %v3560, 2
    %v3587 = vxor.u32 %v3585, 2147483648
    %v3588 = vmul.f32 %v3587, 1.442695
    %v3589 = vpow.pop %v3588
    %v3590 = vadd.f32 %v3589, 1.0
    %v3591 = vrcp.pop %v3590
    %v3592 = vmul.f32 1.0, %v3591
    %v3593 = vmul.f32 %v3578, %v2971
    %v3594 = vmul.f32 %v3566, %v3584
    %v3595 = vadd.f32 %v3593, %v3594
    %v3596 = vtanh.pop %v3595
    %v3597 = vmul.f32 %v3592, %v3596
    %v3598 = vld [vmem:[%s0 + $0x48] sm:$0xff]
    %v3599 = vld [vmem:[%s0 + $0x50] sm:$0xff]
    %v3600 = vld [vmem:[%s0 + $0x58] sm:$0xff]
    %v3602 = vcombine.high %v3597, %v3597
    %v3604 = vunpack.c.l.s4 1983009808
    %v3605 = vunpack.c.0.s8 %v3604
    %v3606 = vlaneseq
    %v3607 = vshrl.u32 %v3606, 7
    %v3608 = vsub.s32 %v3605, %v3607
    %v3609 = vrot.slane %v3597, %v3608
    %v3611 = vunpack.c.l.s4 1983009808
    %v3612 = vunpack.c.0.s8 %v3611
    %v3613 = vlaneseq
    %v3614 = vshrl.u32 %v3613, 7
    %v3615 = vsub.s32 %v3612, %v3614
    %v3616 = vrot.slane %v3602, %v3615
    %v3617 = vcombine.high %v3609, %v3609
    %v3621 = vpack.c.bf16 %v3609, %v3609
    %v3622 = vpack.c.bf16 %v3617, %v3617
    %v3623 = vpack.c.bf16 %v3616, %v3616
    %3624 = vmatprep.subr.bf16.mxu0 %v1259
    %3625 = vmatpush1.bf16.msra.mxu0 %v1258
    %3626 = vmatprep.subr.bf16.mxu0 %v1247
    %3627 = vmatpush1.bf16.msra.mxu0 %v1246
    %3628 = vmatprep.subr.bf16.mxu0 %v1235
    %3629 = vmatpush1.bf16.msra.mxu0 %v1234
    %3630 = vmatprep.subr.bf16.mxu0 %v1223
    %3631 = vmatpush1.bf16.msra.mxu0 %v1222
    %3632 = vmatprep.subr.bf16.mxu0 %v1211
    %3633 = vmatpush1.bf16.msra.mxu0 %v1210
    %3634 = vmatprep.subr.bf16.mxu0 %v1199
    %3635 = vmatpush1.bf16.msra.mxu0 %v1198
    %3636 = vmatprep.subr.bf16.mxu0 %v1187
    %3637 = vmatpush1.bf16.msra.mxu0 %v1186
    %3638 = vmatprep.subr.bf16.mxu0 %v1175
    %3639 = vmatpush1.bf16.msra.mxu0 %v1174
    %3640 = vmatprep.subr.bf16.mxu0 %v1355
    %3641 = vmatpush2.bf16.msra.mxu0 %v1354
    %3642 = vmatprep.subr.bf16.mxu0 %v1343
    %3643 = vmatpush2.bf16.msra.mxu0 %v1342
    %3644 = vmatprep.subr.bf16.mxu0 %v1331
    %3645 = vmatpush2.bf16.msra.mxu0 %v1330
    %3646 = vmatprep.subr.bf16.mxu0 %v1319
    %3647 = vmatpush2.bf16.msra.mxu0 %v1318
    %3648 = vmatprep.subr.bf16.mxu0 %v1307
    %3649 = vmatpush2.bf16.msra.mxu0 %v1306
    %3650 = vmatprep.subr.bf16.mxu0 %v1295
    %3651 = vmatpush2.bf16.msra.mxu0 %v1294
    %3652 = vmatprep.subr.bf16.mxu0 %v1283
    %3653 = vmatpush2.bf16.msra.mxu0 %v1282
    %3654 = vmatprep.subr.bf16.mxu0 %v1271
    %3655 = vmatpush2.bf16.msra.mxu0 %v1270
    %3656 = vmatprep.mubr.bf16.mxu0 %v3622
    %3657 = vmatmul.mubr.bf16.gmra.mxu0 %v3621
    %v3658 = vpop.f32.mrf.mxu0
    %v3659 = vadd.f32 0.0, %v3658
    %v3660 = vpop.f32.mrf.mxu0
    %v3661 = vadd.f32 0.0, %v3660
    %v3662 = vpop.f32.mrf.mxu0
    %v3663 = vpop.f32.mrf.mxu0
    %3664 = vdwg.mxu0
    %3665 = vmatprep.subr.bf16.mxu0 %v1451
    %3666 = vmatpush1.bf16.msra.mxu0 %v1450
    %3667 = vmatprep.subr.bf16.mxu0 %v1439
    %3668 = vmatpush1.bf16.msra.mxu0 %v1438
    %3669 = vmatprep.subr.bf16.mxu0 %v1427
    %3670 = vmatpush1.bf16.msra.mxu0 %v1426
    %3671 = vmatprep.subr.bf16.mxu0 %v1415
    %3672 = vmatpush1.bf16.msra.mxu0 %v1414
    %3673 = vmatprep.subr.bf16.mxu0 %v1403
    %3674 = vmatpush1.bf16.msra.mxu0 %v1402
    %3675 = vmatprep.subr.bf16.mxu0 %v1391
    %3676 = vmatpush1.bf16.msra.mxu0 %v1390
    %3677 = vmatprep.subr.bf16.mxu0 %v1379
    %3678 = vmatpush1.bf16.msra.mxu0 %v1378
    %3679 = vmatprep.subr.bf16.mxu0 %v1367
    %3680 = vmatpush1.bf16.msra.mxu0 %v1366
    %3681 = vmatprep.subr.bf16.mxu0 0
    %3682 = vmatpush2.bf16.msra.mxu0 0
    %3683 = vmatprep.subr.bf16.mxu0 0
    %3684 = vmatpush2.bf16.msra.mxu0 0
    %3685 = vmatprep.subr.bf16.mxu0 0
    %3686 = vmatpush2.bf16.msra.mxu0 0
    %3687 = vmatprep.subr.bf16.mxu0 0
    %3688 = vmatpush2.bf16.msra.mxu0 0
    %3689 = vmatprep.subr.bf16.mxu0 0
    %3690 = vmatpush2.bf16.msra.mxu0 0
    %3691 = vmatprep.subr.bf16.mxu0 0
    %3692 = vmatpush2.bf16.msra.mxu0 0
    %3693 = vmatprep.subr.bf16.mxu0 0
    %3694 = vmatpush2.bf16.msra.mxu0 0
    %3695 = vmatprep.subr.bf16.mxu0 0
    %3696 = vmatpush2.bf16.msra.mxu0 0
    %3697 = vmatprep.mubr.bf16.mxu0 0
    %3698 = vmatmul.mubr.bf16.gmra.mxu0 %v3623
    %v3699 = vpop.f32.mrf.mxu0
    %v3700 = vadd.f32 %v3659, %v3699
    %v3701 = vpop.f32.mrf.mxu0
    %v3702 = vadd.f32 %v3661, %v3701
    %v3703 = vpop.f32.mrf.mxu0
    %v3704 = vpop.f32.mrf.mxu0
    %3705 = vdwg.mxu0
    %3706 = vmatprep.subr.bf16.mxu0 %v1261
    %3707 = vmatpush1.bf16.msra.mxu0 %v1260
    %3708 = vmatprep.subr.bf16.mxu0 %v1249
    %3709 = vmatpush1.bf16.msra.mxu0 %v1248
    %3710 = vmatprep.subr.bf16.mxu0 %v1237
    %3711 = vmatpush1.bf16.msra.mxu0 %v1236
    %3712 = vmatprep.subr.bf16.mxu0 %v1225
    %3713 = vmatpush1.bf16.msra.mxu0 %v1224
    %3714 = vmatprep.subr.bf16.mxu0 %v1213
    %3715 = vmatpush1.bf16.msra.mxu0 %v1212
    %3716 = vmatprep.subr.bf16.mxu0 %v1201
    %3717 = vmatpush1.bf16.msra.mxu0 %v1200
    %3718 = vmatprep.subr.bf16.mxu0 %v1189
    %3719 = vmatpush1.bf16.msra.mxu0 %v1188
    %3720 = vmatprep.subr.bf16.mxu0 %v1177
    %3721 = vmatpush1.bf16.msra.mxu0 %v1176
    %3722 = vmatprep.subr.bf16.mxu0 %v1357
    %3723 = vmatpush2.bf16.msra.mxu0 %v1356
    %3724 = vmatprep.subr.bf16.mxu0 %v1345
    %3725 = vmatpush2.bf16.msra.mxu0 %v1344
    %3726 = vmatprep.subr.bf16.mxu0 %v1333
    %3727 = vmatpush2.bf16.msra.mxu0 %v1332
    %3728 = vmatprep.subr.bf16.mxu0 %v1321
    %3729 = vmatpush2.bf16.msra.mxu0 %v1320
    %3730 = vmatprep.subr.bf16.mxu0 %v1309
    %3731 = vmatpush2.bf16.msra.mxu0 %v1308
    %3732 = vmatprep.subr.bf16.mxu0 %v1297
    %3733 = vmatpush2.bf16.msra.mxu0 %v1296
    %3734 = vmatprep.subr.bf16.mxu0 %v1285
    %3735 = vmatpush2.bf16.msra.mxu0 %v1284
    %3736 = vmatprep.subr.bf16.mxu0 %v1273
    %3737 = vmatpush2.bf16.msra.mxu0 %v1272
    %3738 = vmatprep.mubr.bf16.mxu0 %v3622
    %3739 = vmatmul.mubr.bf16.gmra.mxu0 %v3621
    %v3740 = vpop.f32.mrf.mxu0
    %v3741 = vadd.f32 0.0, %v3740
    %v3742 = vpop.f32.mrf.mxu0
    %v3743 = vadd.f32 0.0, %v3742
    %v3744 = vpop.f32.mrf.mxu0
    %v3745 = vpop.f32.mrf.mxu0
    %3746 = vdwg.mxu0
    %3747 = vmatprep.subr.bf16.mxu0 %v1453
    %3748 = vmatpush1.bf16.msra.mxu0 %v1452
    %3749 = vmatprep.subr.bf16.mxu0 %v1441
    %3750 = vmatpush1.bf16.msra.mxu0 %v1440
    %3751 = vmatprep.subr.bf16.mxu0 %v1429
    %3752 = vmatpush1.bf16.msra.mxu0 %v1428
    %3753 = vmatprep.subr.bf16.mxu0 %v1417
    %3754 = vmatpush1.bf16.msra.mxu0 %v1416
    %3755 = vmatprep.subr.bf16.mxu0 %v1405
    %3756 = vmatpush1.bf16.msra.mxu0 %v1404
    %3757 = vmatprep.subr.bf16.mxu0 %v1393
    %3758 = vmatpush1.bf16.msra.mxu0 %v1392
    %3759 = vmatprep.subr.bf16.mxu0 %v1381
    %3760 = vmatpush1.bf16.msra.mxu0 %v1380
    %3761 = vmatprep.subr.bf16.mxu0 %v1369
    %3762 = vmatpush1.bf16.msra.mxu0 %v1368
    %3763 = vmatprep.subr.bf16.mxu0 0
    %3764 = vmatpush2.bf16.msra.mxu0 0
    %3765 = vmatprep.subr.bf16.mxu0 0
    %3766 = vmatpush2.bf16.msra.mxu0 0
    %3767 = vmatprep.subr.bf16.mxu0 0
    %3768 = vmatpush2.bf16.msra.mxu0 0
    %3769 = vmatprep.subr.bf16.mxu0 0
    %3770 = vmatpush2.bf16.msra.mxu0 0
    %3771 = vmatprep.subr.bf16.mxu0 0
    %3772 = vmatpush2.bf16.msra.mxu0 0
    %3773 = vmatprep.subr.bf16.mxu0 0
    %3774 = vmatpush2.bf16.msra.mxu0 0
    %3775 = vmatprep.subr.bf16.mxu0 0
    %3776 = vmatpush2.bf16.msra.mxu0 0
    %3777 = vmatprep.subr.bf16.mxu0 0
    %3778 = vmatpush2.bf16.msra.mxu0 0
    %3779 = vmatprep.mubr.bf16.mxu0 0
    %3780 = vmatmul.mubr.bf16.gmra.mxu0 %v3623
    %v3781 = vpop.f32.mrf.mxu0
    %v3782 = vadd.f32 %v3741, %v3781
    %v3783 = vpop.f32.mrf.mxu0
    %v3784 = vadd.f32 %v3743, %v3783
    %v3785 = vpop.f32.mrf.mxu0
    %v3786 = vpop.f32.mrf.mxu0
    %3787 = vdwg.mxu0
    %3788 = vmatprep.subr.bf16.mxu0 %v1263
    %3789 = vmatpush1.bf16.msra.mxu0 %v1262
    %3790 = vmatprep.subr.bf16.mxu0 %v1251
    %3791 = vmatpush1.bf16.msra.mxu0 %v1250
    %3792 = vmatprep.subr.bf16.mxu0 %v1239
    %3793 = vmatpush1.bf16.msra.mxu0 %v1238
    %3794 = vmatprep.subr.bf16.mxu0 %v1227
    %3795 = vmatpush1.bf16.msra.mxu0 %v1226
    %3796 = vmatprep.subr.bf16.mxu0 %v1215
    %3797 = vmatpush1.bf16.msra.mxu0 %v1214
    %3798 = vmatprep.subr.bf16.mxu0 %v1203
    %3799 = vmatpush1.bf16.msra.mxu0 %v1202
    %3800 = vmatprep.subr.bf16.mxu0 %v1191
    %3801 = vmatpush1.bf16.msra.mxu0 %v1190
    %3802 = vmatprep.subr.bf16.mxu0 %v1179
    %3803 = vmatpush1.bf16.msra.mxu0 %v1178
    %3804 = vmatprep.subr.bf16.mxu0 %v1359
    %3805 = vmatpush2.bf16.msra.mxu0 %v1358
    %3806 = vmatprep.subr.bf16.mxu0 %v1347
    %3807 = vmatpush2.bf16.msra.mxu0 %v1346
    %3808 = vmatprep.subr.bf16.mxu0 %v1335
    %3809 = vmatpush2.bf16.msra.mxu0 %v1334
    %3810 = vmatprep.subr.bf16.mxu0 %v1323
    %3811 = vmatpush2.bf16.msra.mxu0 %v1322
    %3812 = vmatprep.subr.bf16.mxu0 %v1311
    %3813 = vmatpush2.bf16.msra.mxu0 %v1310
    %3814 = vmatprep.subr.bf16.mxu0 %v1299
    %3815 = vmatpush2.bf16.msra.mxu0 %v1298
    %3816 = vmatprep.subr.bf16.mxu0 %v1287
    %3817 = vmatpush2.bf16.msra.mxu0 %v1286
    %3818 = vmatprep.subr.bf16.mxu0 %v1275
    %3819 = vmatpush2.bf16.msra.mxu0 %v1274
    %3820 = vmatprep.mubr.bf16.mxu0 %v3622
    %3821 = vmatmul.mubr.bf16.gmra.mxu0 %v3621
    %v3822 = vpop.f32.mrf.mxu0
    %v3823 = vadd.f32 0.0, %v3822
    %v3824 = vpop.f32.mrf.mxu0
    %v3825 = vadd.f32 0.0, %v3824
    %v3826 = vpop.f32.mrf.mxu0
    %v3827 = vpop.f32.mrf.mxu0
    %3828 = vdwg.mxu0
    %3829 = vmatprep.subr.bf16.mxu0 %v1455
    %3830 = vmatpush1.bf16.msra.mxu0 %v1454
    %3831 = vmatprep.subr.bf16.mxu0 %v1443
    %3832 = vmatpush1.bf16.msra.mxu0 %v1442
    %3833 = vmatprep.subr.bf16.mxu0 %v1431
    %3834 = vmatpush1.bf16.msra.mxu0 %v1430
    %3835 = vmatprep.subr.bf16.mxu0 %v1419
    %3836 = vmatpush1.bf16.msra.mxu0 %v1418
    %3837 = vmatprep.subr.bf16.mxu0 %v1407
    %3838 = vmatpush1.bf16.msra.mxu0 %v1406
    %3839 = vmatprep.subr.bf16.mxu0 %v1395
    %3840 = vmatpush1.bf16.msra.mxu0 %v1394
    %3841 = vmatprep.subr.bf16.mxu0 %v1383
    %3842 = vmatpush1.bf16.msra.mxu0 %v1382
    %3843 = vmatprep.subr.bf16.mxu0 %v1371
    %3844 = vmatpush1.bf16.msra.mxu0 %v1370
    %3845 = vmatprep.subr.bf16.mxu0 0
    %3846 = vmatpush2.bf16.msra.mxu0 0
    %3847 = vmatprep.subr.bf16.mxu0 0
    %3848 = vmatpush2.bf16.msra.mxu0 0
    %3849 = vmatprep.subr.bf16.mxu0 0
    %3850 = vmatpush2.bf16.msra.mxu0 0
    %3851 = vmatprep.subr.bf16.mxu0 0
    %3852 = vmatpush2.bf16.msra.mxu0 0
    %3853 = vmatprep.subr.bf16.mxu0 0
    %3854 = vmatpush2.bf16.msra.mxu0 0
    %3855 = vmatprep.subr.bf16.mxu0 0
    %3856 = vmatpush2.bf16.msra.mxu0 0
    %3857 = vmatprep.subr.bf16.mxu0 0
    %3858 = vmatpush2.bf16.msra.mxu0 0
    %3859 = vmatprep.subr.bf16.mxu0 0
    %3860 = vmatpush2.bf16.msra.mxu0 0
    %3861 = vmatprep.mubr.bf16.mxu0 0
    %3862 = vmatmul.mubr.bf16.gmra.mxu0 %v3623
    %v3863 = vpop.f32.mrf.mxu0
    %v3864 = vadd.f32 %v3823, %v3863
    %v3865 = vpop.f32.mrf.mxu0
    %v3866 = vadd.f32 %v3825, %v3865
    %v3867 = vpop.f32.mrf.mxu0
    %v3868 = vpop.f32.mrf.mxu0
    %3869 = vdwg.mxu0
    %3870 = vmatprep.subr.bf16.mxu0 %v1265
    %3871 = vmatpush1.bf16.msra.mxu0 %v1264
    %3872 = vmatprep.subr.bf16.mxu0 %v1253
    %3873 = vmatpush1.bf16.msra.mxu0 %v1252
    %3874 = vmatprep.subr.bf16.mxu0 %v1241
    %3875 = vmatpush1.bf16.msra.mxu0 %v1240
    %3876 = vmatprep.subr.bf16.mxu0 %v1229
    %3877 = vmatpush1.bf16.msra.mxu0 %v1228
    %3878 = vmatprep.subr.bf16.mxu0 %v1217
    %3879 = vmatpush1.bf16.msra.mxu0 %v1216
    %3880 = vmatprep.subr.bf16.mxu0 %v1205
    %3881 = vmatpush1.bf16.msra.mxu0 %v1204
    %3882 = vmatprep.subr.bf16.mxu0 %v1193
    %3883 = vmatpush1.bf16.msra.mxu0 %v1192
    %3884 = vmatprep.subr.bf16.mxu0 %v1181
    %3885 = vmatpush1.bf16.msra.mxu0 %v1180
    %3886 = vmatprep.subr.bf16.mxu0 %v1361
    %3887 = vmatpush2.bf16.msra.mxu0 %v1360
    %3888 = vmatprep.subr.bf16.mxu0 %v1349
    %3889 = vmatpush2.bf16.msra.mxu0 %v1348
    %3890 = vmatprep.subr.bf16.mxu0 %v1337
    %3891 = vmatpush2.bf16.msra.mxu0 %v1336
    %3892 = vmatprep.subr.bf16.mxu0 %v1325
    %3893 = vmatpush2.bf16.msra.mxu0 %v1324
    %3894 = vmatprep.subr.bf16.mxu0 %v1313
    %3895 = vmatpush2.bf16.msra.mxu0 %v1312
    %3896 = vmatprep.subr.bf16.mxu0 %v1301
    %3897 = vmatpush2.bf16.msra.mxu0 %v1300
    %3898 = vmatprep.subr.bf16.mxu0 %v1289
    %3899 = vmatpush2.bf16.msra.mxu0 %v1288
    %3900 = vmatprep.subr.bf16.mxu0 %v1277
    %3901 = vmatpush2.bf16.msra.mxu0 %v1276
    %3902 = vmatprep.mubr.bf16.mxu0 %v3622
    %3903 = vmatmul.mubr.bf16.gmra.mxu0 %v3621
    %v3904 = vpop.f32.mrf.mxu0
    %v3905 = vadd.f32 0.0, %v3904
    %v3906 = vpop.f32.mrf.mxu0
    %v3907 = vadd.f32 0.0, %v3906
    %v3908 = vpop.f32.mrf.mxu0
    %v3909 = vpop.f32.mrf.mxu0
    %3910 = vdwg.mxu0
    %3911 = vmatprep.subr.bf16.mxu0 %v1457
    %3912 = vmatpush1.bf16.msra.mxu0 %v1456
    %3913 = vmatprep.subr.bf16.mxu0 %v1445
    %3914 = vmatpush1.bf16.msra.mxu0 %v1444
    %3915 = vmatprep.subr.bf16.mxu0 %v1433
    %3916 = vmatpush1.bf16.msra.mxu0 %v1432
    %3917 = vmatprep.subr.bf16.mxu0 %v1421
    %3918 = vmatpush1.bf16.msra.mxu0 %v1420
    %3919 = vmatprep.subr.bf16.mxu0 %v1409
    %3920 = vmatpush1.bf16.msra.mxu0 %v1408
    %3921 = vmatprep.subr.bf16.mxu0 %v1397
    %3922 = vmatpush1.bf16.msra.mxu0 %v1396
    %3923 = vmatprep.subr.bf16.mxu0 %v1385
    %3924 = vmatpush1.bf16.msra.mxu0 %v1384
    %3925 = vmatprep.subr.bf16.mxu0 %v1373
    %3926 = vmatpush1.bf16.msra.mxu0 %v1372
    %3927 = vmatprep.subr.bf16.mxu0 0
    %3928 = vmatpush2.bf16.msra.mxu0 0
    %3929 = vmatprep.subr.bf16.mxu0 0
    %3930 = vmatpush2.bf16.msra.mxu0 0
    %3931 = vmatprep.subr.bf16.mxu0 0
    %3932 = vmatpush2.bf16.msra.mxu0 0
    %3933 = vmatprep.subr.bf16.mxu0 0
    %3934 = vmatpush2.bf16.msra.mxu0 0
    %3935 = vmatprep.subr.bf16.mxu0 0
    %3936 = vmatpush2.bf16.msra.mxu0 0
    %3937 = vmatprep.subr.bf16.mxu0 0
    %3938 = vmatpush2.bf16.msra.mxu0 0
    %3939 = vmatprep.subr.bf16.mxu0 0
    %3940 = vmatpush2.bf16.msra.mxu0 0
    %3941 = vmatprep.subr.bf16.mxu0 0
    %3942 = vmatpush2.bf16.msra.mxu0 0
    %3943 = vmatprep.mubr.bf16.mxu0 0
    %3944 = vmatmul.mubr.bf16.gmra.mxu0 %v3623
    %v3945 = vpop.f32.mrf.mxu0
    %v3946 = vadd.f32 %v3905, %v3945
    %v3947 = vpop.f32.mrf.mxu0
    %v3948 = vadd.f32 %v3907, %v3947
    %v3949 = vpop.f32.mrf.mxu0
    %v3950 = vpop.f32.mrf.mxu0
    %3951 = vdwg.mxu0
    %3952 = vmatprep.subr.bf16.mxu0 %v1267
    %3953 = vmatpush1.bf16.msra.mxu0 %v1266
    %3954 = vmatprep.subr.bf16.mxu0 %v1255
    %3955 = vmatpush1.bf16.msra.mxu0 %v1254
    %3956 = vmatprep.subr.bf16.mxu0 %v1243
    %3957 = vmatpush1.bf16.msra.mxu0 %v1242
    %3958 = vmatprep.subr.bf16.mxu0 %v1231
    %3959 = vmatpush1.bf16.msra.mxu0 %v1230
    %3960 = vmatprep.subr.bf16.mxu0 %v1219
    %3961 = vmatpush1.bf16.msra.mxu0 %v1218
    %3962 = vmatprep.subr.bf16.mxu0 %v1207
    %3963 = vmatpush1.bf16.msra.mxu0 %v1206
    %3964 = vmatprep.subr.bf16.mxu0 %v1195
    %3965 = vmatpush1.bf16.msra.mxu0 %v1194
    %3966 = vmatprep.subr.bf16.mxu0 %v1183
    %3967 = vmatpush1.bf16.msra.mxu0 %v1182
    %3968 = vmatprep.subr.bf16.mxu0 %v1363
    %3969 = vmatpush2.bf16.msra.mxu0 %v1362
    %3970 = vmatprep.subr.bf16.mxu0 %v1351
    %3971 = vmatpush2.bf16.msra.mxu0 %v1350
    %3972 = vmatprep.subr.bf16.mxu0 %v1339
    %3973 = vmatpush2.bf16.msra.mxu0 %v1338
    %3974 = vmatprep.subr.bf16.mxu0 %v1327
    %3975 = vmatpush2.bf16.msra.mxu0 %v1326
    %3976 = vmatprep.subr.bf16.mxu0 %v1315
    %3977 = vmatpush2.bf16.msra.mxu0 %v1314
    %3978 = vmatprep.subr.bf16.mxu0 %v1303
    %3979 = vmatpush2.bf16.msra.mxu0 %v1302
    %3980 = vmatprep.subr.bf16.mxu0 %v1291
    %3981 = vmatpush2.bf16.msra.mxu0 %v1290
    %3982 = vmatprep.subr.bf16.mxu0 %v1279
    %3983 = vmatpush2.bf16.msra.mxu0 %v1278
    %3984 = vmatprep.mubr.bf16.mxu0 %v3622
    %3985 = vmatmul.mubr.bf16.gmra.mxu0 %v3621
    %v3986 = vpop.f32.mrf.mxu0
    %v3987 = vadd.f32 0.0, %v3986
    %v3988 = vpop.f32.mrf.mxu0
    %v3989 = vadd.f32 0.0, %v3988
    %v3990 = vpop.f32.mrf.mxu0
    %v3991 = vpop.f32.mrf.mxu0
    %3992 = vdwg.mxu0
    %3993 = vmatprep.subr.bf16.mxu0 %v1459
    %3994 = vmatpush1.bf16.msra.mxu0 %v1458
    %3995 = vmatprep.subr.bf16.mxu0 %v1447
    %3996 = vmatpush1.bf16.msra.mxu0 %v1446
    %3997 = vmatprep.subr.bf16.mxu0 %v1435
    %3998 = vmatpush1.bf16.msra.mxu0 %v1434
    %3999 = vmatprep.subr.bf16.mxu0 %v1423
    %4000 = vmatpush1.bf16.msra.mxu0 %v1422
    %4001 = vmatprep.subr.bf16.mxu0 %v1411
    %4002 = vmatpush1.bf16.msra.mxu0 %v1410
    %4003 = vmatprep.subr.bf16.mxu0 %v1399
    %4004 = vmatpush1.bf16.msra.mxu0 %v1398
    %4005 = vmatprep.subr.bf16.mxu0 %v1387
    %4006 = vmatpush1.bf16.msra.mxu0 %v1386
    %4007 = vmatprep.subr.bf16.mxu0 %v1375
    %4008 = vmatpush1.bf16.msra.mxu0 %v1374
    %4009 = vmatprep.subr.bf16.mxu0 0
    %4010 = vmatpush2.bf16.msra.mxu0 0
    %4011 = vmatprep.subr.bf16.mxu0 0
    %4012 = vmatpush2.bf16.msra.mxu0 0
    %4013 = vmatprep.subr.bf16.mxu0 0
    %4014 = vmatpush2.bf16.msra.mxu0 0
    %4015 = vmatprep.subr.bf16.mxu0 0
    %4016 = vmatpush2.bf16.msra.mxu0 0
    %4017 = vmatprep.subr.bf16.mxu0 0
    %4018 = vmatpush2.bf16.msra.mxu0 0
    %4019 = vmatprep.subr.bf16.mxu0 0
    %4020 = vmatpush2.bf16.msra.mxu0 0
    %4021 = vmatprep.subr.bf16.mxu0 0
    %4022 = vmatpush2.bf16.msra.mxu0 0
    %4023 = vmatprep.subr.bf16.mxu0 0
    %4024 = vmatpush2.bf16.msra.mxu0 0
    %4025 = vmatprep.mubr.bf16.mxu0 0
    %4026 = vmatmul.mubr.bf16.gmra.mxu0 %v3623
    %v4027 = vpop.f32.mrf.mxu0
    %v4028 = vadd.f32 %v3987, %v4027
    %v4029 = vpop.f32.mrf.mxu0
    %v4030 = vadd.f32 %v3989, %v4029
    %v4031 = vpop.f32.mrf.mxu0
    %v4032 = vpop.f32.mrf.mxu0
    %4033 = vdwg.mxu0
    %4034 = vmatprep.subr.bf16.mxu0 %v1269
    %4035 = vmatpush1.bf16.msra.mxu0 %v1268
    %4036 = vmatprep.subr.bf16.mxu0 %v1257
    %4037 = vmatpush1.bf16.msra.mxu0 %v1256
    %4038 = vmatprep.subr.bf16.mxu0 %v1245
    %4039 = vmatpush1.bf16.msra.mxu0 %v1244
    %4040 = vmatprep.subr.bf16.mxu0 %v1233
    %4041 = vmatpush1.bf16.msra.mxu0 %v1232
    %4042 = vmatprep.subr.bf16.mxu0 %v1221
    %4043 = vmatpush1.bf16.msra.mxu0 %v1220
    %4044 = vmatprep.subr.bf16.mxu0 %v1209
    %4045 = vmatpush1.bf16.msra.mxu0 %v1208
    %4046 = vmatprep.subr.bf16.mxu0 %v1197
    %4047 = vmatpush1.bf16.msra.mxu0 %v1196
    %4048 = vmatprep.subr.bf16.mxu0 %v1185
    %4049 = vmatpush1.bf16.msra.mxu0 %v1184
    %4050 = vmatprep.subr.bf16.mxu0 %v1365
    %4051 = vmatpush2.bf16.msra.mxu0 %v1364
    %4052 = vmatprep.subr.bf16.mxu0 %v1353
    %4053 = vmatpush2.bf16.msra.mxu0 %v1352
    %4054 = vmatprep.subr.bf16.mxu0 %v1341
    %4055 = vmatpush2.bf16.msra.mxu0 %v1340
    %4056 = vmatprep.subr.bf16.mxu0 %v1329
    %4057 = vmatpush2.bf16.msra.mxu0 %v1328
    %4058 = vmatprep.subr.bf16.mxu0 %v1317
    %4059 = vmatpush2.bf16.msra.mxu0 %v1316
    %4060 = vmatprep.subr.bf16.mxu0 %v1305
    %4061 = vmatpush2.bf16.msra.mxu0 %v1304
    %4062 = vmatprep.subr.bf16.mxu0 %v1293
    %4063 = vmatpush2.bf16.msra.mxu0 %v1292
    %4064 = vmatprep.subr.bf16.mxu0 %v1281
    %4065 = vmatpush2.bf16.msra.mxu0 %v1280
    %4066 = vmatprep.mubr.bf16.mxu0 %v3622
    %4067 = vmatmul.mubr.bf16.gmra.mxu0 %v3621
    %v4068 = vpop.f32.mrf.mxu0
    %v4069 = vadd.f32 0.0, %v4068
    %v4070 = vpop.f32.mrf.mxu0
    %v4071 = vadd.f32 0.0, %v4070
    %v4072 = vpop.f32.mrf.mxu0
    %v4073 = vpop.f32.mrf.mxu0
    %4074 = vdwg.mxu0
    %4075 = vmatprep.subr.bf16.mxu0 %v1461
    %4076 = vmatpush1.bf16.msra.mxu0 %v1460
    %4077 = vmatprep.subr.bf16.mxu0 %v1449
    %4078 = vmatpush1.bf16.msra.mxu0 %v1448
    %4079 = vmatprep.subr.bf16.mxu0 %v1437
    %4080 = vmatpush1.bf16.msra.mxu0 %v1436
    %4081 = vmatprep.subr.bf16.mxu0 %v1425
    %4082 = vmatpush1.bf16.msra.mxu0 %v1424
    %4083 = vmatprep.subr.bf16.mxu0 %v1413
    %4084 = vmatpush1.bf16.msra.mxu0 %v1412
    %4085 = vmatprep.subr.bf16.mxu0 %v1401
    %4086 = vmatpush1.bf16.msra.mxu0 %v1400
    %4087 = vmatprep.subr.bf16.mxu0 %v1389
    %4088 = vmatpush1.bf16.msra.mxu0 %v1388
    %4089 = vmatprep.subr.bf16.mxu0 %v1377
    %4090 = vmatpush1.bf16.msra.mxu0 %v1376
    %4091 = vmatprep.subr.bf16.mxu0 0
    %4092 = vmatpush2.bf16.msra.mxu0 0
    %4093 = vmatprep.subr.bf16.mxu0 0
    %4094 = vmatpush2.bf16.msra.mxu0 0
    %4095 = vmatprep.subr.bf16.mxu0 0
    %4096 = vmatpush2.bf16.msra.mxu0 0
    %4097 = vmatprep.subr.bf16.mxu0 0
    %4098 = vmatpush2.bf16.msra.mxu0 0
    %4099 = vmatprep.subr.bf16.mxu0 0
    %4100 = vmatpush2.bf16.msra.mxu0 0
    %4101 = vmatprep.subr.bf16.mxu0 0
    %4102 = vmatpush2.bf16.msra.mxu0 0
    %4103 = vmatprep.subr.bf16.mxu0 0
    %4104 = vmatpush2.bf16.msra.mxu0 0
    %4105 = vmatprep.subr.bf16.mxu0 0
    %4106 = vmatpush2.bf16.msra.mxu0 0
    %4107 = vmatprep.mubr.bf16.mxu0 0
    %4108 = vmatmul.mubr.bf16.gmra.mxu0 %v3623
    %v4109 = vpop.f32.mrf.mxu0
    %v4110 = vadd.f32 %v4069, %v4109
    %v4111 = vpop.f32.mrf.mxu0
    %v4112 = vadd.f32 %v4071, %v4111
    %v4113 = vpop.f32.mrf.mxu0
    %v4114 = vpop.f32.mrf.mxu0
    %4115 = vdwg.mxu0
    %v4128 = vcombine.low %v3700, %v3702
    %v4129 = vcombine.low %v3782, %v3784
    %v4131 = vunpack.c.l.s4 1983009808
    %v4132 = vunpack.c.0.s8 %v4131
    %v4133 = vlaneseq
    %v4134 = vshrl.u32 %v4133, 7
    %v4135 = vsub.s32 %v4132, %v4134
    %v4136 = vrot.slane %v4128, %v4135
    %v4138 = vunpack.c.l.s4 1983009808
    %v4139 = vunpack.c.0.s8 %v4138
    %v4140 = vlaneseq
    %v4141 = vshrl.u32 %v4140, 7
    %v4142 = vsub.s32 %v4139, %v4141
    %v4143 = vrot.slane %v4129, %v4142
    %v4144 = vcombine.low %v4136, %v4143
    %v4145 = vcombine.low %v3864, %v3866
    %v4146 = vcombine.low %v3946, %v3948
    %v4148 = vunpack.c.l.s4 1983009808
    %v4149 = vunpack.c.0.s8 %v4148
    %v4150 = vlaneseq
    %v4151 = vshrl.u32 %v4150, 7
    %v4152 = vsub.s32 %v4149, %v4151
    %v4153 = vrot.slane %v4145, %v4152
    %v4155 = vunpack.c.l.s4 1983009808
    %v4156 = vunpack.c.0.s8 %v4155
    %v4157 = vlaneseq
    %v4158 = vshrl.u32 %v4157, 7
    %v4159 = vsub.s32 %v4156, %v4158
    %v4160 = vrot.slane %v4146, %v4159
    %v4161 = vcombine.low %v4153, %v4160
    %v4162 = vcombine.low %v4028, %v4030
    %v4163 = vcombine.low %v4110, %v4112
    %v4165 = vunpack.c.l.s4 1983009808
    %v4166 = vunpack.c.0.s8 %v4165
    %v4167 = vlaneseq
    %v4168 = vshrl.u32 %v4167, 7
    %v4169 = vsub.s32 %v4166, %v4168
    %v4170 = vrot.slane %v4162, %v4169
    %v4172 = vunpack.c.l.s4 1983009808
    %v4173 = vunpack.c.0.s8 %v4172
    %v4174 = vlaneseq
    %v4175 = vshrl.u32 %v4174, 7
    %v4176 = vsub.s32 %v4173, %v4175
    %v4177 = vrot.slane %v4163, %v4176
    %v4178 = vcombine.low %v4170, %v4177
    %v4182 = vadd.f32 %v3598, %v4144
    %v4183 = vadd.f32 %v3599, %v4161
    %v4184 = vadd.f32 %v3600, %v4178
    %v4185 = vxor.u32 %v4182, 2147483648
    %v4186 = vmul.f32 %v4185, 1.442695
    %v4187 = vpow.pop %v4186
    %v4188 = vadd.f32 %v4187, 1.0
    %v4189 = vrcp.pop %v4188
    %v4190 = vmul.f32 1.0, %v4189
    %v4193 = vrot.slane %v4182, 6
    %v4194 = vrot.slane %v4183, 6
    %v4195 = vsel %vm2321, %v4193, %v4194
    %v4197 = vxor.u32 %v4195, 2147483648
    %v4198 = vmul.f32 %v4197, 1.442695
    %v4199 = vpow.pop %v4198
    %v4200 = vadd.f32 %v4199, 1.0
    %v4201 = vrcp.pop %v4200
    %v4202 = vmul.f32 1.0, %v4201
    %v4204 = vrot.slane %v4183, 4
    %v4205 = vrot.slane %v4184, 4
    %v4206 = vsel %vm2333, %v4204, %v4205
    %v4208 = vtanh.pop %v4206
    %v4209 = vrot.slane %v4184, 2
    %v4211 = vxor.u32 %v4209, 2147483648
    %v4212 = vmul.f32 %v4211, 1.442695
    %v4213 = vpow.pop %v4212
    %v4214 = vadd.f32 %v4213, 1.0
    %v4215 = vrcp.pop %v4214
    %v4216 = vmul.f32 1.0, %v4215
    %v4217 = vmul.f32 %v4202, %v3595
    %v4218 = vmul.f32 %v4190, %v4208
    %v4219 = vadd.f32 %v4217, %v4218
    %v4220 = vtanh.pop %v4219
    %v4221 = vmul.f32 %v4216, %v4220
    %v4223 = vcombine.high %v4221, %v4221
    %v4225 = vunpack.c.l.s4 1983009808
    %v4226 = vunpack.c.0.s8 %v4225
    %v4227 = vlaneseq
    %v4228 = vshrl.u32 %v4227, 7
    %v4229 = vsub.s32 %v4226, %v4228
    %v4230 = vrot.slane %v4221, %v4229
    %v4232 = vunpack.c.l.s4 1983009808
    %v4233 = vunpack.c.0.s8 %v4232
    %v4234 = vlaneseq
    %v4235 = vshrl.u32 %v4234, 7
    %v4236 = vsub.s32 %v4233, %v4235
    %v4237 = vrot.slane %v4223, %v4236
    %v4238 = vcombine.high %v4230, %v4230
    %v4242 = vpack.c.bf16 %v4230, %v4230
    %v4243 = vpack.c.bf16 %v4238, %v4238
    %v4244 = vpack.c.bf16 %v4237, %v4237
    %v4245 = vld [vmem:[%s2] sm:$0xf]
    %v4246 = vld [vmem:[%s2 + $0x4] sm:$0xf]
    %v4247 = vld [vmem:[%s2 + $0x8] sm:$0xf]
    %v4248 = vld [vmem:[%s2 + $0xc] sm:$0xf]
    %v4249 = vld [vmem:[%s2 + $0x10] sm:$0xf]
    %v4250 = vld [vmem:[%s2 + $0x14] sm:$0xf]
    %v4251 = vld [vmem:[%s2 + $0x18] sm:$0xf]
    %v4252 = vld [vmem:[%s2 + $0x1c] sm:$0xf]
    %v4253 = vld [vmem:[%s2 + $0x20] sm:$0xf]
    %v4254 = vld [vmem:[%s2 + $0x24] sm:$0xf]
    %v4255 = vld [vmem:[%s2 + $0x28] sm:$0xf]
    %v4256 = vld [vmem:[%s2 + $0x2c] sm:$0xf]
    %v4257 = vld [vmem:[%s2 + $0x30] sm:$0xf]
    %v4258 = vld [vmem:[%s2 + $0x34] sm:$0xf]
    %v4259 = vld [vmem:[%s2 + $0x38] sm:$0xf]
    %v4260 = vld [vmem:[%s2 + $0x3c] sm:$0xf]
    %v4261 = vld [vmem:[%s2 + $0x40] sm:$0xf]
    %v4262 = vld [vmem:[%s2 + $0x44] sm:$0xf]
    %v4263 = vld [vmem:[%s2 + $0x48] sm:$0xf]
    %v4264 = vld [vmem:[%s2 + $0x4c] sm:$0xf]
    %v4265 = vld [vmem:[%s2 + $0x50] sm:$0xf]
    %v4266 = vld [vmem:[%s2 + $0x54] sm:$0xf]
    %v4267 = vld [vmem:[%s2 + $0x58] sm:$0xf]
    %v4268 = vld [vmem:[%s2 + $0x5c] sm:$0xf]
    %v4269 = vld [vmem:[%s2 + $0x60] sm:$0xf]
    %v4270 = vld [vmem:[%s2 + $0x64] sm:$0xf]
    %v4271 = vld [vmem:[%s2 + $0x68] sm:$0xf]
    %v4272 = vld [vmem:[%s2 + $0x6c] sm:$0xf]
    %v4273 = vld [vmem:[%s2 + $0x70] sm:$0xf]
    %v4274 = vld [vmem:[%s2 + $0x74] sm:$0xf]
    %v4275 = vld [vmem:[%s2 + $0x78] sm:$0xf]
    %v4276 = vld [vmem:[%s2 + $0x7c] sm:$0xf]
    %v4277 = vld [vmem:[%s2 + $0x80] sm:$0xf]
    %v4278 = vld [vmem:[%s2 + $0x84] sm:$0xf]
    %v4279 = vld [vmem:[%s2 + $0x88] sm:$0xf]
    %v4280 = vld [vmem:[%s2 + $0x8c] sm:$0xf]
    %v4281 = vld [vmem:[%s2 + $0x90] sm:$0xf]
    %v4282 = vld [vmem:[%s2 + $0x94] sm:$0xf]
    %v4283 = vld [vmem:[%s2 + $0x98] sm:$0xf]
    %v4284 = vld [vmem:[%s2 + $0x9c] sm:$0xf]
    %v4285 = vld [vmem:[%s2 + $0xa0] sm:$0xf]
    %v4286 = vld [vmem:[%s2 + $0xa4] sm:$0xf]
    %v4287 = vld [vmem:[%s2 + $0xa8] sm:$0xf]
    %v4288 = vld [vmem:[%s2 + $0xac] sm:$0xf]
    %v4289 = vld [vmem:[%s2 + $0xb0] sm:$0xf]
    %v4290 = vld [vmem:[%s2 + $0xb4] sm:$0xf]
    %v4291 = vld [vmem:[%s2 + $0xb8] sm:$0xf]
    %v4292 = vld [vmem:[%s2 + $0xbc] sm:$0xf]
    %v4293 = vld [vmem:[%s3] sm:$0x1]
    %v4295 = vlaneseq
    %v4296 = vshrl.u32 %v4295, 7
    %v4297 = vsub.s32 0, %v4296
    %v4298 = vrot.slane %v4293, %v4297
    %v4348 = vunpack.c.l.b16 %v4245
    %v4349 = vunpack.c.l.b16 %v4246
    %v4350 = vunpack.c.l.b16 %v4247
    %v4351 = vunpack.c.l.b16 %v4248
    %v4352 = vunpack.c.l.b16 %v4249
    %v4353 = vunpack.c.l.b16 %v4250
    %v4354 = vunpack.c.l.b16 %v4251
    %v4355 = vunpack.c.l.b16 %v4252
    %v4356 = vunpack.c.l.b16 %v4253
    %v4357 = vunpack.c.l.b16 %v4254
    %v4358 = vunpack.c.l.b16 %v4255
    %v4359 = vunpack.c.l.b16 %v4256
    %v4360 = vunpack.c.l.b16 %v4257
    %v4361 = vunpack.c.l.b16 %v4258
    %v4362 = vunpack.c.l.b16 %v4259
    %v4363 = vunpack.c.l.b16 %v4260
    %v4364 = vunpack.c.l.b16 %v4261
    %v4365 = vunpack.c.l.b16 %v4262
    %v4366 = vunpack.c.l.b16 %v4263
    %v4367 = vunpack.c.l.b16 %v4264
    %v4368 = vunpack.c.l.b16 %v4265
    %v4369 = vunpack.c.l.b16 %v4266
    %v4370 = vunpack.c.l.b16 %v4267
    %v4371 = vunpack.c.l.b16 %v4268
    %v4372 = vunpack.c.l.b16 %v4269
    %v4373 = vunpack.c.l.b16 %v4270
    %v4374 = vunpack.c.l.b16 %v4271
    %v4375 = vunpack.c.l.b16 %v4272
    %v4376 = vunpack.c.l.b16 %v4273
    %v4377 = vunpack.c.l.b16 %v4274
    %v4378 = vunpack.c.l.b16 %v4275
    %v4379 = vunpack.c.l.b16 %v4276
    %v4380 = vunpack.c.l.b16 %v4277
    %v4381 = vunpack.c.l.b16 %v4278
    %v4382 = vunpack.c.l.b16 %v4279
    %v4383 = vunpack.c.l.b16 %v4280
    %v4384 = vunpack.c.l.b16 %v4281
    %v4385 = vunpack.c.l.b16 %v4282
    %v4386 = vunpack.c.l.b16 %v4283
    %v4387 = vunpack.c.l.b16 %v4284
    %v4388 = vunpack.c.l.b16 %v4285
    %v4389 = vunpack.c.l.b16 %v4286
    %v4390 = vunpack.c.l.b16 %v4287
    %v4391 = vunpack.c.l.b16 %v4288
    %v4392 = vunpack.c.l.b16 %v4289
    %v4393 = vunpack.c.l.b16 %v4290
    %v4394 = vunpack.c.l.b16 %v4291
    %v4395 = vunpack.c.l.b16 %v4292
    %v4396 = vpack.c.b16 %v4349, %v4348
    %v4397 = vpack.c.b16 %v4351, %v4350
    %v4398 = vpack.c.b16 %v4353, %v4352
    %v4399 = vpack.c.b16 %v4355, %v4354
    %v4400 = vpack.c.b16 %v4357, %v4356
    %v4401 = vpack.c.b16 %v4359, %v4358
    %v4402 = vpack.c.b16 %v4361, %v4360
    %v4403 = vpack.c.b16 %v4363, %v4362
    %v4404 = vpack.c.b16 %v4365, %v4364
    %v4405 = vpack.c.b16 %v4367, %v4366
    %v4406 = vpack.c.b16 %v4369, %v4368
    %v4407 = vpack.c.b16 %v4371, %v4370
    %v4408 = vpack.c.b16 %v4373, %v4372
    %v4409 = vpack.c.b16 %v4375, %v4374
    %v4410 = vpack.c.b16 %v4377, %v4376
    %v4411 = vpack.c.b16 %v4379, %v4378
    %v4412 = vpack.c.b16 %v4381, %v4380
    %v4413 = vpack.c.b16 %v4383, %v4382
    %v4414 = vpack.c.b16 %v4385, %v4384
    %v4415 = vpack.c.b16 %v4387, %v4386
    %v4416 = vpack.c.b16 %v4389, %v4388
    %v4417 = vpack.c.b16 %v4391, %v4390
    %v4418 = vpack.c.b16 %v4393, %v4392
    %v4419 = vpack.c.b16 %v4395, %v4394
    %4444 = vmatprep.subr.bf16.mxu0 0
    %4445 = vmatpush1.bf16.msra.mxu0 %v4403
    %4446 = vmatprep.subr.bf16.mxu0 0
    %4447 = vmatpush1.bf16.msra.mxu0 %v4402
    %4448 = vmatprep.subr.bf16.mxu0 0
    %4449 = vmatpush1.bf16.msra.mxu0 %v4401
    %4450 = vmatprep.subr.bf16.mxu0 0
    %4451 = vmatpush1.bf16.msra.mxu0 %v4400
    %4452 = vmatprep.subr.bf16.mxu0 0
    %4453 = vmatpush1.bf16.msra.mxu0 %v4399
    %4454 = vmatprep.subr.bf16.mxu0 0
    %4455 = vmatpush1.bf16.msra.mxu0 %v4398
    %4456 = vmatprep.subr.bf16.mxu0 0
    %4457 = vmatpush1.bf16.msra.mxu0 %v4397
    %4458 = vmatprep.subr.bf16.mxu0 0
    %4459 = vmatpush1.bf16.msra.mxu0 %v4396
    %4460 = vmatprep.subr.bf16.mxu0 0
    %4461 = vmatpush2.bf16.msra.mxu0 %v4411
    %4462 = vmatprep.subr.bf16.mxu0 0
    %4463 = vmatpush2.bf16.msra.mxu0 %v4410
    %4464 = vmatprep.subr.bf16.mxu0 0
    %4465 = vmatpush2.bf16.msra.mxu0 %v4409
    %4466 = vmatprep.subr.bf16.mxu0 0
    %4467 = vmatpush2.bf16.msra.mxu0 %v4408
    %4468 = vmatprep.subr.bf16.mxu0 0
    %4469 = vmatpush2.bf16.msra.mxu0 %v4407
    %4470 = vmatprep.subr.bf16.mxu0 0
    %4471 = vmatpush2.bf16.msra.mxu0 %v4406
    %4472 = vmatprep.subr.bf16.mxu0 0
    %4473 = vmatpush2.bf16.msra.mxu0 %v4405
    %4474 = vmatprep.subr.bf16.mxu0 0
    %4475 = vmatpush2.bf16.msra.mxu0 %v4404
    %4476 = vmatprep.mubr.bf16.mxu0 %v4243
    %4477 = vmatmul.mubr.bf16.gmra.mxu0 %v4242
    %v4478 = vpop.f32.mrf.mxu0
    %v4479 = vadd.f32 %v4298, %v4478
    %v4480 = vpop.f32.mrf.mxu0
    %v4481 = vpop.f32.mrf.mxu0
    %v4482 = vpop.f32.mrf.mxu0
    %4483 = vdwg.mxu0
    %4484 = vmatprep.subr.bf16.mxu0 0
    %4485 = vmatpush1.bf16.msra.mxu0 %v4419
    %4486 = vmatprep.subr.bf16.mxu0 0
    %4487 = vmatpush1.bf16.msra.mxu0 %v4418
    %4488 = vmatprep.subr.bf16.mxu0 0
    %4489 = vmatpush1.bf16.msra.mxu0 %v4417
    %4490 = vmatprep.subr.bf16.mxu0 0
    %4491 = vmatpush1.bf16.msra.mxu0 %v4416
    %4492 = vmatprep.subr.bf16.mxu0 0
    %4493 = vmatpush1.bf16.msra.mxu0 %v4415
    %4494 = vmatprep.subr.bf16.mxu0 0
    %4495 = vmatpush1.bf16.msra.mxu0 %v4414
    %4496 = vmatprep.subr.bf16.mxu0 0
    %4497 = vmatpush1.bf16.msra.mxu0 %v4413
    %4498 = vmatprep.subr.bf16.mxu0 0
    %4499 = vmatpush1.bf16.msra.mxu0 %v4412
    %4500 = vmatprep.subr.bf16.mxu0 0
    %4501 = vmatpush2.bf16.msra.mxu0 0
    %4502 = vmatprep.subr.bf16.mxu0 0
    %4503 = vmatpush2.bf16.msra.mxu0 0
    %4504 = vmatprep.subr.bf16.mxu0 0
    %4505 = vmatpush2.bf16.msra.mxu0 0
    %4506 = vmatprep.subr.bf16.mxu0 0
    %4507 = vmatpush2.bf16.msra.mxu0 0
    %4508 = vmatprep.subr.bf16.mxu0 0
    %4509 = vmatpush2.bf16.msra.mxu0 0
    %4510 = vmatprep.subr.bf16.mxu0 0
    %4511 = vmatpush2.bf16.msra.mxu0 0
    %4512 = vmatprep.subr.bf16.mxu0 0
    %4513 = vmatpush2.bf16.msra.mxu0 0
    %4514 = vmatprep.subr.bf16.mxu0 0
    %4515 = vmatpush2.bf16.msra.mxu0 0
    %4516 = vmatprep.mubr.bf16.mxu0 0
    %4517 = vmatmul.mubr.bf16.gmra.mxu0 %v4244
    %v4518 = vpop.f32.mrf.mxu0
    %v4519 = vadd.f32 %v4479, %v4518
    %v4520 = vpop.f32.mrf.mxu0
    %v4521 = vpop.f32.mrf.mxu0
    %v4522 = vpop.f32.mrf.mxu0
    %4523 = vdwg.mxu0
    %4524 = vst [vmem:[#allocation2] sm:$0x3] %v4519
    // Predicated region
    $region18: #{model_forward.3} parent=1 // pred_check
      _
    $region19: #{model_forward.3} parent=1 // pred_check_branch
      %4526 = sbr.rel (0) target = $region21
    $region20: #{model_forward.3} parent=1 // pred_region
      %s4528 = ssub.s32 32, 32
      %4529 = vsyncadd [#allocation3], %s4528
      %s4531 = sshll.u32 [#allocation2], 4
      %s4532 = int_to_ptr.vmem [resolvable:$true] %s4531
      %4534 = dma.vmem_to_hbm [thread:$0]  %s4532, 32, %s4, [#allocation3]
    $region21: #{model_forward.3} parent=1 // pred_fallthru
      _
    // Predicated region
    $region22: #{model_forward.3} parent=1 // pred_check
      _
    $region23: #{model_forward.3} parent=1 // pred_check_branch
      %4536 = sbr.rel (0) target = $region25
    $region24: #{model_forward.3} parent=1 // pred_region
      %4537 = dma.done [#allocation3], 32
    $region25: #{model_forward.3} parent=1 // pred_fallthru
      _
    %4538 = vsyncpa [#allocation3], 1

</llo_original>
